<compile_context>
chip_gen: v6e
topology: v6e:2x2x1
jax: 0.10.0
libtpu: 0.0.40
codegen_flags: <defaults>
</compile_context>

<pallas_src>
import functools

import jax
import jax.numpy as jnp
from jax import lax
from jax.experimental import pallas as pl
from jax.experimental.pallas import tpu as pltpu

HIDDEN = 128
INPUT = 64
NUM_CLASSES = 2
NUM_LAYERS = 2  # kernel hard-codes exactly two stacked LSTM layers


def _gates_to_hc(gates, c_prev):
    """gates: (B, 4H) f32, PyTorch gate order (i, f, g, o).

    The i/f/o pre-activations were pre-scaled by 0.5 (folded into the weights),
    so sigmoid(z) == 0.5*tanh(z/2) + 0.5 == 0.5*t + 0.5 with a single fused tanh
    over the whole (B, 4H) gate block.
    """
    t = jnp.tanh(gates)
    i = 0.5 * t[:, 0 * HIDDEN:1 * HIDDEN] + 0.5
    f = 0.5 * t[:, 1 * HIDDEN:2 * HIDDEN] + 0.5
    g = t[:, 2 * HIDDEN:3 * HIDDEN]
    o = 0.5 * t[:, 3 * HIDDEN:4 * HIDDEN] + 0.5
    c_new = f * c_prev + i * g
    h_new = o * jnp.tanh(c_new)
    return h_new, c_new


def lstm_kernel(x_ref, wih0_ref, whh0_ref, b0_ref, wih1_ref, whh1_ref, b1_ref,
                out_ref,
                h0_sc, c0_sc, h1_sc, c1_sc, h0seq_sc, proj_sc,
                *, seq_len, chunk, b_pad):
    """One grid step processes `chunk` timesteps for the whole (padded) batch.

    x_ref    : (chunk*B_pad, INPUT) bf16, rows ordered (t_local, batch)
    wih*_ref : (in_dim, 4H) bf16   transposed, gate-prescaled input weights
    whh*_ref : (H, 4H)      bf16   transposed, gate-prescaled recurrent weights
    b*_ref   : (1, 4H)      f32    gate-prescaled (b_ih + b_hh)
    out_ref  : (B_pad, H)   f32    top-layer hidden state, written on last chunk
    h0seq_sc : (chunk*B_pad, H)    f32   per-step layer-0 hidden states
    proj_sc  : (chunk*B_pad, 4H)   f32   shared input-projection buffer (both layers)
    """
    c_idx = pl.program_id(0)

    @pl.when(c_idx == 0)
    def _():
        h0_sc[...] = jnp.zeros_like(h0_sc)
        c0_sc[...] = jnp.zeros_like(c0_sc)
        h1_sc[...] = jnp.zeros_like(h1_sc)
        c1_sc[...] = jnp.zeros_like(c1_sc)

    needs_mask = (seq_len % chunk) != 0          # static Python bool
    unroll = min(chunk, 8)                       # partial unroll for larger chunks

    # ---- Layer 0: batched input projection for the whole chunk (big-M GEMM),
    #      bias folded into the epilogue (one broadcast per chunk, not per step).
    proj_sc[...] = (
        jnp.dot(x_ref[...], wih0_ref[...], preferred_element_type=jnp.float32)
        + b0_ref[...])

    def l0_step(i, carry):
        h0, c0 = carry
        row = pl.multiple_of(i * b_pad, b_pad)
        gates = proj_sc[pl.ds(row, b_pad), :] + jnp.dot(
            h0.astype(jnp.bfloat16), whh0_ref[...],
            preferred_element_type=jnp.float32)
        h0n, c0n = _gates_to_hc(gates, c0)
        if needs_mask:  # only traced when T is not a multiple of chunk
            valid = (c_idx * chunk + i) < seq_len
            h0n = jnp.where(valid, h0n, h0)
            c0n = jnp.where(valid, c0n, c0)
        h0seq_sc[pl.ds(row, b_pad), :] = h0n
        return h0n, c0n

    h0, c0 = lax.fori_loop(0, chunk, l0_step, (h0_sc[...], c0_sc[...]),
                           unroll=unroll)
    h0_sc[...] = h0
    c0_sc[...] = c0

    # ---- Layer 1: batched input projection of the chunk's h0 sequence
    #      (reuses proj_sc — layer 0 has fully consumed it by now).
    proj_sc[...] = (
        jnp.dot(h0seq_sc[...].astype(jnp.bfloat16), wih1_ref[...],
                preferred_element_type=jnp.float32)
        + b1_ref[...])

    def l1_step(i, carry):
        h1, c1 = carry
        row = pl.multiple_of(i * b_pad, b_pad)
        gates = proj_sc[pl.ds(row, b_pad), :] + jnp.dot(
            h1.astype(jnp.bfloat16), whh1_ref[...],
            preferred_element_type=jnp.float32)
        h1n, c1n = _gates_to_hc(gates, c1)
        if needs_mask:
            valid = (c_idx * chunk + i) < seq_len
            h1n = jnp.where(valid, h1n, h1)
            c1n = jnp.where(valid, c1n, c1)
        return h1n, c1n

    h1, c1 = lax.fori_loop(0, chunk, l1_step, (h1_sc[...], c1_sc[...]),
                           unroll=unroll)
    h1_sc[...] = h1
    c1_sc[...] = c1

    # Only the final chunk's top-layer hidden state is user-visible.
    @pl.when(c_idx == pl.num_programs(0) - 1)
    def _():
        out_ref[...] = h1                        # lane-dense (B_pad, 128) f32


def lstm_classifier_forward(x, params, *, chunk=32):
    """x: (B, T, INPUT) float32 -> (B, NUM_CLASSES) float32."""
    wih0, whh0, b0, wih1, whh1, b1, w_fc, b_fc = params
    B, T, D = x.shape
    assert D == INPUT

    # Chunk: multiple of 8, never (much) larger than the padded sequence.
    chunk = max(8, min((chunk // 8) * 8, ((T + 7) // 8) * 8))
    B_pad = ((B + 7) // 8) * 8                   # fill f32 sublanes
    num_chunks = pl.cdiv(T, chunk)
    T_pad = num_chunks * chunk

    # Dense per-chunk slab: rows ordered (chunk_idx, t_local, batch). Padding rows
    # / timesteps carry garbage state that is masked (time) or discarded (batch).
    x_tm = jnp.transpose(x, (1, 0, 2))                               # (T, B, D)
    x_tm = jnp.pad(x_tm, ((0, T_pad - T), (0, B_pad - B), (0, 0)))
    x_2d = x_tm.reshape(T_pad * B_pad, D).astype(jnp.bfloat16)

    kernel = functools.partial(lstm_kernel, seq_len=T, chunk=chunk, b_pad=B_pad)
    full2 = lambda c: (0, 0)
    # NOTE: weight/bias BlockSpecs have constant index maps -> fetched once; the
    # default double-buffer wastes ~0.5 MB of VMEM, acceptable at these sizes.

    h_last = pl.pallas_call(
        kernel,
        out_shape=jax.ShapeDtypeStruct((B_pad, HIDDEN), jnp.float32),
        grid_spec=pltpu.PrefetchScalarGridSpec(
            num_scalar_prefetch=0,
            grid=(num_chunks,),
            in_specs=[
                pl.BlockSpec((chunk * B_pad, D), lambda c: (c, 0)),     # x chunk slab
                pl.BlockSpec((INPUT, 4 * HIDDEN), full2),               # W_ih0^T (scaled)
                pl.BlockSpec((HIDDEN, 4 * HIDDEN), full2),              # W_hh0^T (scaled)
                pl.BlockSpec((1, 4 * HIDDEN), full2),                   # bias layer 0
                pl.BlockSpec((HIDDEN, 4 * HIDDEN), full2),              # W_ih1^T (scaled)
                pl.BlockSpec((HIDDEN, 4 * HIDDEN), full2),              # W_hh1^T (scaled)
                pl.BlockSpec((1, 4 * HIDDEN), full2),                   # bias layer 1
            ],
            out_specs=pl.BlockSpec((B_pad, HIDDEN), full2),
            scratch_shapes=[
                pltpu.VMEM((B_pad, HIDDEN), jnp.float32),               # h layer 0
                pltpu.VMEM((B_pad, HIDDEN), jnp.float32),               # c layer 0
                pltpu.VMEM((B_pad, HIDDEN), jnp.float32),               # h layer 1
                pltpu.VMEM((B_pad, HIDDEN), jnp.float32),               # c layer 1
                pltpu.VMEM((chunk * B_pad, HIDDEN), jnp.float32),       # h0 sequence
                pltpu.VMEM((chunk * B_pad, 4 * HIDDEN), jnp.float32),   # shared proj buf
            ],
        ),
        compiler_params=pltpu.CompilerParams(dimension_semantics=("arbitrary",)),
    )(x_2d, wih0, whh0, b0, wih1, whh1, b1)

    # Tiny FC (128 -> 2) stays outside the kernel (lane-dense kernel output).
    logits = h_last[:B] @ w_fc.T + b_fc
    return logits


def _prep_layer(w_ih, w_hh, b_ih, b_hh):
    """Transpose to (in, 4H), fold the sigmoid-as-tanh 0.5 pre-scale into the
    i/f/o gate columns (exact fp scaling), pre-sum biases, cast weights to bf16."""
    scale = jnp.concatenate([
        jnp.full((2 * HIDDEN,), 0.5, jnp.float32),   # i, f gates
        jnp.ones((HIDDEN,), jnp.float32),            # g gate (plain tanh)
        jnp.full((HIDDEN,), 0.5, jnp.float32),       # o gate
    ])
    wih_t = (w_ih.T * scale[None, :]).astype(jnp.bfloat16)     # (in, 4H)
    whh_t = (w_hh.T * scale[None, :]).astype(jnp.bfloat16)     # (H, 4H)
    b = ((b_ih + b_hh) * scale)[None, :].astype(jnp.float32)   # (1, 4H)
    return wih_t, whh_t, b


def init_params(key):
    """Deterministic parameter init mirroring nn.LSTM/nn.Linear shapes."""
    k = 1.0 / jnp.sqrt(jnp.float32(HIDDEN))
    keys = jax.random.split(key, 10)
    u = lambda kk, shp: jax.random.uniform(kk, shp, jnp.float32, -k, k)

    # Layer 0
    w_ih0 = u(keys[0], (4 * HIDDEN, INPUT))
    w_hh0 = u(keys[1], (4 * HIDDEN, HIDDEN))
    b_ih0 = u(keys[2], (4 * HIDDEN,))
    b_hh0 = u(keys[3], (4 * HIDDEN,))
    # Layer 1
    w_ih1 = u(keys[4], (4 * HIDDEN, HIDDEN))
    w_hh1 = u(keys[5], (4 * HIDDEN, HIDDEN))
    b_ih1 = u(keys[6], (4 * HIDDEN,))
    b_hh1 = u(keys[7], (4 * HIDDEN,))
    # FC
    w_fc = u(keys[8], (NUM_CLASSES, HIDDEN))
    b_fc = u(keys[9], (NUM_CLASSES,))

    wih0, whh0, b0 = _prep_layer(w_ih0, w_hh0, b_ih0, b_hh0)
    wih1, whh1, b1 = _prep_layer(w_ih1, w_hh1, b_ih1, b_hh1)

    params = (wih0, whh0, b0, wih1, whh1, b1, w_fc, b_fc)
    raw = (w_ih0, w_hh0, b_ih0, b_hh0, w_ih1, w_hh1, b_ih1, b_hh1, w_fc, b_fc)
    return params, raw


def reference_forward(x, raw):
    """Pure-JAX f32 reference matching torch.nn.LSTM semantics (gate order i,f,g,o)."""
    w_ih0, w_hh0, b_ih0, b_hh0, w_ih1, w_hh1, b_ih1, b_hh1, w_fc, b_fc = raw
    B, T, _ = x.shape

    def cell(x_t, h, c, w_ih, w_hh, b_ih, b_hh):
        g = x_t @ w_ih.T + h @ w_hh.T + b_ih + b_hh
        i = jax.nn.sigmoid(g[:, 0 * HIDDEN:1 * HIDDEN])
        f = jax.nn.sigmoid(g[:, 1 * HIDDEN:2 * HIDDEN])
        gg = jnp.tanh(g[:, 2 * HIDDEN:3 * HIDDEN])
        o = jax.nn.sigmoid(g[:, 3 * HIDDEN:4 * HIDDEN])
        c_new = f * c + i * gg
        h_new = o * jnp.tanh(c_new)
        return h_new, c_new

    h0 = c0 = h1 = c1 = jnp.zeros((B, HIDDEN), jnp.float32)
    for t in range(T):
        h0, c0 = cell(x[:, t, :], h0, c0, w_ih0, w_hh0, b_ih0, b_hh0)
        h1, c1 = cell(h0, h1, c1, w_ih1, w_hh1, b_ih1, b_hh1)
    return h1 @ w_fc.T + b_fc


if __name__ == "__main__":
    key = jax.random.PRNGKey(0)
    k_x, k_p = jax.random.split(key)

    B, T = 2, 8
    x = jax.random.normal(k_x, (B, T, INPUT), jnp.float32)

    params, raw = init_params(k_p)

    out = lstm_classifier_forward(x, params)
    out = jax.block_until_ready(out)

    ref = reference_forward(x, raw)
    assert out.shape == (B, NUM_CLASSES)
    # bf16 matmul operands (f32 accumulation) -> relaxed tolerance vs f32 reference.
    # TODO(synk): validate h->bf16 recurrence drift for long sequences (T in the hundreds).
    assert jnp.allclose(out, ref, atol=5e-2, rtol=5e-2), (out, ref)

    print("KERNEL_OK")
</pallas_src>

<mosaic_0001>
module attributes {stable_mosaic.version = 11 : i64} {
  func.func @lstm_kernel(%arg0: i32, %arg1: memref<64x64xbf16, #tpu.memory_space<vmem>>, %arg2: memref<64x512xbf16, #tpu.memory_space<vmem>>, %arg3: memref<128x512xbf16, #tpu.memory_space<vmem>>, %arg4: memref<1x512xf32, #tpu.memory_space<vmem>>, %arg5: memref<128x512xbf16, #tpu.memory_space<vmem>>, %arg6: memref<128x512xbf16, #tpu.memory_space<vmem>>, %arg7: memref<1x512xf32, #tpu.memory_space<vmem>>, %arg8: memref<8x128xf32, #tpu.memory_space<vmem>>, %arg9: memref<8x128xf32, #tpu.memory_space<vmem>>, %arg10: memref<8x128xf32, #tpu.memory_space<vmem>>, %arg11: memref<8x128xf32, #tpu.memory_space<vmem>>, %arg12: memref<8x128xf32, #tpu.memory_space<vmem>>, %arg13: memref<64x128xf32, #tpu.memory_space<vmem>>, %arg14: memref<64x512xf32, #tpu.memory_space<vmem>>) attributes {dimension_semantics = [#tpu.dimension_semantics<arbitrary>], iteration_bounds = array<i64: 1>, scalar_prefetch = 0 : i64, scratch_operands = 6 : i64, tpu.core_type = #tpu.core_type<tc>, window_params = [{transform_indices = @transform_0, window_bounds = array<i64: 64, 64>}, {pipeline_mode = #tpu.pipeline_mode<synchronous>, transform_indices = @transform_1, window_bounds = array<i64: 64, 512>}, {pipeline_mode = #tpu.pipeline_mode<synchronous>, transform_indices = @transform_2, window_bounds = array<i64: 128, 512>}, {pipeline_mode = #tpu.pipeline_mode<synchronous>, transform_indices = @transform_3, window_bounds = array<i64: 1, 512>}, {pipeline_mode = #tpu.pipeline_mode<synchronous>, transform_indices = @transform_4, window_bounds = array<i64: 128, 512>}, {pipeline_mode = #tpu.pipeline_mode<synchronous>, transform_indices = @transform_5, window_bounds = array<i64: 128, 512>}, {pipeline_mode = #tpu.pipeline_mode<synchronous>, transform_indices = @transform_6, window_bounds = array<i64: 1, 512>}, {pipeline_mode = #tpu.pipeline_mode<synchronous>, transform_indices = @transform_7, window_bounds = array<i64: 8, 128>}]} {
    %c0_i32 = arith.constant 0 : i32
    %0 = arith.cmpi eq, %arg0, %c0_i32 : i32
    %1 = arith.extui %0 : i1 to i32
    %c0_i32_0 = arith.constant 0 : i32
    %2 = arith.cmpi ne, %1, %c0_i32_0 : i32
    scf.if %2 {
      %cst_229 = arith.constant 0.000000e+00 : f32
      %525 = vector.broadcast %cst_229 : f32 to vector<8x128xf32>
      %c0_230 = arith.constant 0 : index
      %c0_231 = arith.constant 0 : index
      %526 = vector.load %arg9[%c0_230, %c0_231] : memref<8x128xf32, #tpu.memory_space<vmem>>, vector<8x128xf32>
      tpu.vector_store %arg9[%c0_230, %c0_231], %525 {strides = array<i32>} : memref<8x128xf32, #tpu.memory_space<vmem>>, vector<8x128xf32>,
      %cst_232 = arith.constant 0.000000e+00 : f32
      %527 = vector.broadcast %cst_232 : f32 to vector<8x128xf32>
      %c0_233 = arith.constant 0 : index
      %c0_234 = arith.constant 0 : index
      %528 = vector.load %arg10[%c0_233, %c0_234] : memref<8x128xf32, #tpu.memory_space<vmem>>, vector<8x128xf32>
      tpu.vector_store %arg10[%c0_233, %c0_234], %527 {strides = array<i32>} : memref<8x128xf32, #tpu.memory_space<vmem>>, vector<8x128xf32>,
      %cst_235 = arith.constant 0.000000e+00 : f32
      %529 = vector.broadcast %cst_235 : f32 to vector<8x128xf32>
      %c0_236 = arith.constant 0 : index
      %c0_237 = arith.constant 0 : index
      %530 = vector.load %arg11[%c0_236, %c0_237] : memref<8x128xf32, #tpu.memory_space<vmem>>, vector<8x128xf32>
      tpu.vector_store %arg11[%c0_236, %c0_237], %529 {strides = array<i32>} : memref<8x128xf32, #tpu.memory_space<vmem>>, vector<8x128xf32>,
      %cst_238 = arith.constant 0.000000e+00 : f32
      %531 = vector.broadcast %cst_238 : f32 to vector<8x128xf32>
      %c0_239 = arith.constant 0 : index
      %c0_240 = arith.constant 0 : index
      %532 = vector.load %arg12[%c0_239, %c0_240] : memref<8x128xf32, #tpu.memory_space<vmem>>, vector<8x128xf32>
      tpu.vector_store %arg12[%c0_239, %c0_240], %531 {strides = array<i32>} : memref<8x128xf32, #tpu.memory_space<vmem>>, vector<8x128xf32>,
    } else {
    }
    %c0 = arith.constant 0 : index
    %c0_1 = arith.constant 0 : index
    %3 = vector.load %arg1[%c0, %c0_1] : memref<64x64xbf16, #tpu.memory_space<vmem>>, vector<64x64xbf16>
    %c0_2 = arith.constant 0 : index
    %c0_3 = arith.constant 0 : index
    %4 = vector.load %arg2[%c0_2, %c0_3] : memref<64x512xbf16, #tpu.memory_space<vmem>>, vector<64x512xbf16>
    %cst = arith.constant dense<0.000000e+00> : vector<64x512xf32>
    %5 = tpu.matmul %3, %4, %cst {dimension_numbers = #tpu.dot_dimension_numbers<[1], [0], [0], [1], [0, 0, 1, 1], [], []>} : vector<64x64xbf16>, vector<64x512xbf16>, vector<64x512xf32> -> vector<64x512xf32>
    %c0_4 = arith.constant 0 : index
    %c0_5 = arith.constant 0 : index
    %6 = vector.load %arg4[%c0_4, %c0_5] : memref<1x512xf32, #tpu.memory_space<vmem>>, vector<1x512xf32>
    %7 = vector.broadcast %6 : vector<1x512xf32> to vector<64x512xf32>
    %8 = arith.addf %5, %7 : vector<64x512xf32>
    %c0_6 = arith.constant 0 : index
    %c0_7 = arith.constant 0 : index
    %9 = vector.load %arg14[%c0_6, %c0_7] : memref<64x512xf32, #tpu.memory_space<vmem>>, vector<64x512xf32>
    tpu.vector_store %arg14[%c0_6, %c0_7], %8 {strides = array<i32>} : memref<64x512xf32, #tpu.memory_space<vmem>>, vector<64x512xf32>,
    %c0_8 = arith.constant 0 : index
    %c0_9 = arith.constant 0 : index
    %10 = vector.load %arg9[%c0_8, %c0_9] : memref<8x128xf32, #tpu.memory_space<vmem>>, vector<8x128xf32>
    %c0_10 = arith.constant 0 : index
    %c0_11 = arith.constant 0 : index
    %11 = vector.load %arg10[%c0_10, %c0_11] : memref<8x128xf32, #tpu.memory_space<vmem>>, vector<8x128xf32>
    %c0_i32_12 = arith.constant 0 : i32
    %c8_i32 = arith.constant 8 : i32
    %12 = arith.muli %c0_i32_12, %c8_i32 : i32
    %13 = tpu.assume_multiple %12, 8 : i32
    %14 = arith.index_cast %13 : i32 to index
    %c0_13 = arith.constant 0 : index
    %15 = vector.load %arg14[%14, %c0_13] : memref<64x512xf32, #tpu.memory_space<vmem>>, vector<8x512xf32>
    %16 = arith.truncf %10 : vector<8x128xf32> to vector<8x128xbf16>
    %c0_14 = arith.constant 0 : index
    %c0_15 = arith.constant 0 : index
    %17 = vector.load %arg3[%c0_14, %c0_15] : memref<128x512xbf16, #tpu.memory_space<vmem>>, vector<128x512xbf16>
    %cst_16 = arith.constant dense<0.000000e+00> : vector<8x512xf32>
    %18 = tpu.matmul %16, %17, %cst_16 {dimension_numbers = #tpu.dot_dimension_numbers<[1], [0], [0], [1], [0, 0, 1, 1], [], []>} : vector<8x128xbf16>, vector<128x512xbf16>, vector<8x512xf32> -> vector<8x512xf32>
    %19 = arith.addf %15, %18 : vector<8x512xf32>
    %20 = math.tanh %19 : vector<8x512xf32>
    %21 = vector.extract_strided_slice %20 {offsets = [0, 0], sizes = [8, 128], strides = [1, 1]} : vector<8x512xf32> to vector<8x128xf32>
    %cst_17 = arith.constant 5.000000e-01 : f32
    %22 = vector.broadcast %cst_17 : f32 to vector<8x128xf32>
    %23 = arith.mulf %22, %21 : vector<8x128xf32>
    %cst_18 = arith.constant 5.000000e-01 : f32
    %24 = vector.broadcast %cst_18 : f32 to vector<8x128xf32>
    %25 = arith.addf %23, %24 : vector<8x128xf32>
    %26 = vector.extract_strided_slice %20 {offsets = [0, 128], sizes = [8, 128], strides = [1, 1]} : vector<8x512xf32> to vector<8x128xf32>
    %cst_19 = arith.constant 5.000000e-01 : f32
    %27 = vector.broadcast %cst_19 : f32 to vector<8x128xf32>
    %28 = arith.mulf %27, %26 : vector<8x128xf32>
    %cst_20 = arith.constant 5.000000e-01 : f32
    %29 = vector.broadcast %cst_20 : f32 to vector<8x128xf32>
    %30 = arith.addf %28, %29 : vector<8x128xf32>
    %31 = vector.extract_strided_slice %20 {offsets = [0, 256], sizes = [8, 128], strides = [1, 1]} : vector<8x512xf32> to vector<8x128xf32>
    %32 = vector.extract_strided_slice %20 {offsets = [0, 384], sizes = [8, 128], strides = [1, 1]} : vector<8x512xf32> to vector<8x128xf32>
    %cst_21 = arith.constant 5.000000e-01 : f32
    %33 = vector.broadcast %cst_21 : f32 to vector<8x128xf32>
    %34 = arith.mulf %33, %32 : vector<8x128xf32>
    %cst_22 = arith.constant 5.000000e-01 : f32
    %35 = vector.broadcast %cst_22 : f32 to vector<8x128xf32>
    %36 = arith.addf %34, %35 : vector<8x128xf32>
    %37 = arith.mulf %30, %11 : vector<8x128xf32>
    %38 = arith.mulf %25, %31 : vector<8x128xf32>
    %39 = arith.addf %37, %38 : vector<8x128xf32>
    %40 = math.tanh %39 : vector<8x128xf32>
    %41 = arith.mulf %36, %40 : vector<8x128xf32>
    %42 = arith.index_cast %13 : i32 to index
    %c0_23 = arith.constant 0 : index
    %43 = vector.load %arg13[%42, %c0_23] : memref<64x128xf32, #tpu.memory_space<vmem>>, vector<8x128xf32>
    tpu.vector_store %arg13[%42, %c0_23], %41 {strides = array<i32>} : memref<64x128xf32, #tpu.memory_space<vmem>>, vector<8x128xf32>,
    %c1_i32 = arith.constant 1 : i32
    %c8_i32_24 = arith.constant 8 : i32
    %44 = arith.muli %c1_i32, %c8_i32_24 : i32
    %45 = tpu.assume_multiple %44, 8 : i32
    %46 = arith.index_cast %45 : i32 to index
    %c0_25 = arith.constant 0 : index
    %47 = vector.load %arg14[%46, %c0_25] : memref<64x512xf32, #tpu.memory_space<vmem>>, vector<8x512xf32>
    %48 = arith.truncf %41 : vector<8x128xf32> to vector<8x128xbf16>
    %c0_26 = arith.constant 0 : index
    %c0_27 = arith.constant 0 : index
    %49 = vector.load %arg3[%c0_26, %c0_27] : memref<128x512xbf16, #tpu.memory_space<vmem>>, vector<128x512xbf16>
    %cst_28 = arith.constant dense<0.000000e+00> : vector<8x512xf32>
    %50 = tpu.matmul %48, %49, %cst_28 {dimension_numbers = #tpu.dot_dimension_numbers<[1], [0], [0], [1], [0, 0, 1, 1], [], []>} : vector<8x128xbf16>, vector<128x512xbf16>, vector<8x512xf32> -> vector<8x512xf32>
    %51 = arith.addf %47, %50 : vector<8x512xf32>
    %52 = math.tanh %51 : vector<8x512xf32>
    %53 = vector.extract_strided_slice %52 {offsets = [0, 0], sizes = [8, 128], strides = [1, 1]} : vector<8x512xf32> to vector<8x128xf32>
    %cst_29 = arith.constant 5.000000e-01 : f32
    %54 = vector.broadcast %cst_29 : f32 to vector<8x128xf32>
    %55 = arith.mulf %54, %53 : vector<8x128xf32>
    %cst_30 = arith.constant 5.000000e-01 : f32
    %56 = vector.broadcast %cst_30 : f32 to vector<8x128xf32>
    %57 = arith.addf %55, %56 : vector<8x128xf32>
    %58 = vector.extract_strided_slice %52 {offsets = [0, 128], sizes = [8, 128], strides = [1, 1]} : vector<8x512xf32> to vector<8x128xf32>
    %cst_31 = arith.constant 5.000000e-01 : f32
    %59 = vector.broadcast %cst_31 : f32 to vector<8x128xf32>
    %60 = arith.mulf %59, %58 : vector<8x128xf32>
    %cst_32 = arith.constant 5.000000e-01 : f32
    %61 = vector.broadcast %cst_32 : f32 to vector<8x128xf32>
    %62 = arith.addf %60, %61 : vector<8x128xf32>
    %63 = vector.extract_strided_slice %52 {offsets = [0, 256], sizes = [8, 128], strides = [1, 1]} : vector<8x512xf32> to vector<8x128xf32>
    %64 = vector.extract_strided_slice %52 {offsets = [0, 384], sizes = [8, 128], strides = [1, 1]} : vector<8x512xf32> to vector<8x128xf32>
    %cst_33 = arith.constant 5.000000e-01 : f32
    %65 = vector.broadcast %cst_33 : f32 to vector<8x128xf32>
    %66 = arith.mulf %65, %64 : vector<8x128xf32>
    %cst_34 = arith.constant 5.000000e-01 : f32
    %67 = vector.broadcast %cst_34 : f32 to vector<8x128xf32>
    %68 = arith.addf %66, %67 : vector<8x128xf32>
    %69 = arith.mulf %62, %39 : vector<8x128xf32>
    %70 = arith.mulf %57, %63 : vector<8x128xf32>
    %71 = arith.addf %69, %70 : vector<8x128xf32>
    %72 = math.tanh %71 : vector<8x128xf32>
    %73 = arith.mulf %68, %72 : vector<8x128xf32>
    %74 = arith.index_cast %45 : i32 to index
    %c0_35 = arith.constant 0 : index
    %75 = vector.load %arg13[%74, %c0_35] : memref<64x128xf32, #tpu.memory_space<vmem>>, vector<8x128xf32>
    tpu.vector_store %arg13[%74, %c0_35], %73 {strides = array<i32>} : memref<64x128xf32, #tpu.memory_space<vmem>>, vector<8x128xf32>,
    %c2_i32 = arith.constant 2 : i32
    %c8_i32_36 = arith.constant 8 : i32
    %76 = arith.muli %c2_i32, %c8_i32_36 : i32
    %77 = tpu.assume_multiple %76, 8 : i32
    %78 = arith.index_cast %77 : i32 to index
    %c0_37 = arith.constant 0 : index
    %79 = vector.load %arg14[%78, %c0_37] : memref<64x512xf32, #tpu.memory_space<vmem>>, vector<8x512xf32>
    %80 = arith.truncf %73 : vector<8x128xf32> to vector<8x128xbf16>
    %c0_38 = arith.constant 0 : index
    %c0_39 = arith.constant 0 : index
    %81 = vector.load %arg3[%c0_38, %c0_39] : memref<128x512xbf16, #tpu.memory_space<vmem>>, vector<128x512xbf16>
    %cst_40 = arith.constant dense<0.000000e+00> : vector<8x512xf32>
    %82 = tpu.matmul %80, %81, %cst_40 {dimension_numbers = #tpu.dot_dimension_numbers<[1], [0], [0], [1], [0, 0, 1, 1], [], []>} : vector<8x128xbf16>, vector<128x512xbf16>, vector<8x512xf32> -> vector<8x512xf32>
    %83 = arith.addf %79, %82 : vector<8x512xf32>
    %84 = math.tanh %83 : vector<8x512xf32>
    %85 = vector.extract_strided_slice %84 {offsets = [0, 0], sizes = [8, 128], strides = [1, 1]} : vector<8x512xf32> to vector<8x128xf32>
    %cst_41 = arith.constant 5.000000e-01 : f32
    %86 = vector.broadcast %cst_41 : f32 to vector<8x128xf32>
    %87 = arith.mulf %86, %85 : vector<8x128xf32>
    %cst_42 = arith.constant 5.000000e-01 : f32
    %88 = vector.broadcast %cst_42 : f32 to vector<8x128xf32>
    %89 = arith.addf %87, %88 : vector<8x128xf32>
    %90 = vector.extract_strided_slice %84 {offsets = [0, 128], sizes = [8, 128], strides = [1, 1]} : vector<8x512xf32> to vector<8x128xf32>
    %cst_43 = arith.constant 5.000000e-01 : f32
    %91 = vector.broadcast %cst_43 : f32 to vector<8x128xf32>
    %92 = arith.mulf %91, %90 : vector<8x128xf32>
    %cst_44 = arith.constant 5.000000e-01 : f32
    %93 = vector.broadcast %cst_44 : f32 to vector<8x128xf32>
    %94 = arith.addf %92, %93 : vector<8x128xf32>
    %95 = vector.extract_strided_slice %84 {offsets = [0, 256], sizes = [8, 128], strides = [1, 1]} : vector<8x512xf32> to vector<8x128xf32>
    %96 = vector.extract_strided_slice %84 {offsets = [0, 384], sizes = [8, 128], strides = [1, 1]} : vector<8x512xf32> to vector<8x128xf32>
    %cst_45 = arith.constant 5.000000e-01 : f32
    %97 = vector.broadcast %cst_45 : f32 to vector<8x128xf32>
    %98 = arith.mulf %97, %96 : vector<8x128xf32>
    %cst_46 = arith.constant 5.000000e-01 : f32
    %99 = vector.broadcast %cst_46 : f32 to vector<8x128xf32>
    %100 = arith.addf %98, %99 : vector<8x128xf32>
    %101 = arith.mulf %94, %71 : vector<8x128xf32>
    %102 = arith.mulf %89, %95 : vector<8x128xf32>
    %103 = arith.addf %101, %102 : vector<8x128xf32>
    %104 = math.tanh %103 : vector<8x128xf32>
    %105 = arith.mulf %100, %104 : vector<8x128xf32>
    %106 = arith.index_cast %77 : i32 to index
    %c0_47 = arith.constant 0 : index
    %107 = vector.load %arg13[%106, %c0_47] : memref<64x128xf32, #tpu.memory_space<vmem>>, vector<8x128xf32>
    tpu.vector_store %arg13[%106, %c0_47], %105 {strides = array<i32>} : memref<64x128xf32, #tpu.memory_space<vmem>>, vector<8x128xf32>,
    %c3_i32 = arith.constant 3 : i32
    %c8_i32_48 = arith.constant 8 : i32
    %108 = arith.muli %c3_i32, %c8_i32_48 : i32
    %109 = tpu.assume_multiple %108, 8 : i32
    %110 = arith.index_cast %109 : i32 to index
    %c0_49 = arith.constant 0 : index
    %111 = vector.load %arg14[%110, %c0_49] : memref<64x512xf32, #tpu.memory_space<vmem>>, vector<8x512xf32>
    %112 = arith.truncf %105 : vector<8x128xf32> to vector<8x128xbf16>
    %c0_50 = arith.constant 0 : index
    %c0_51 = arith.constant 0 : index
    %113 = vector.load %arg3[%c0_50, %c0_51] : memref<128x512xbf16, #tpu.memory_space<vmem>>, vector<128x512xbf16>
    %cst_52 = arith.constant dense<0.000000e+00> : vector<8x512xf32>
    %114 = tpu.matmul %112, %113, %cst_52 {dimension_numbers = #tpu.dot_dimension_numbers<[1], [0], [0], [1], [0, 0, 1, 1], [], []>} : vector<8x128xbf16>, vector<128x512xbf16>, vector<8x512xf32> -> vector<8x512xf32>
    %115 = arith.addf %111, %114 : vector<8x512xf32>
    %116 = math.tanh %115 : vector<8x512xf32>
    %117 = vector.extract_strided_slice %116 {offsets = [0, 0], sizes = [8, 128], strides = [1, 1]} : vector<8x512xf32> to vector<8x128xf32>
    %cst_53 = arith.constant 5.000000e-01 : f32
    %118 = vector.broadcast %cst_53 : f32 to vector<8x128xf32>
    %119 = arith.mulf %118, %117 : vector<8x128xf32>
    %cst_54 = arith.constant 5.000000e-01 : f32
    %120 = vector.broadcast %cst_54 : f32 to vector<8x128xf32>
    %121 = arith.addf %119, %120 : vector<8x128xf32>
    %122 = vector.extract_strided_slice %116 {offsets = [0, 128], sizes = [8, 128], strides = [1, 1]} : vector<8x512xf32> to vector<8x128xf32>
    %cst_55 = arith.constant 5.000000e-01 : f32
    %123 = vector.broadcast %cst_55 : f32 to vector<8x128xf32>
    %124 = arith.mulf %123, %122 : vector<8x128xf32>
    %cst_56 = arith.constant 5.000000e-01 : f32
    %125 = vector.broadcast %cst_56 : f32 to vector<8x128xf32>
    %126 = arith.addf %124, %125 : vector<8x128xf32>
    %127 = vector.extract_strided_slice %116 {offsets = [0, 256], sizes = [8, 128], strides = [1, 1]} : vector<8x512xf32> to vector<8x128xf32>
    %128 = vector.extract_strided_slice %116 {offsets = [0, 384], sizes = [8, 128], strides = [1, 1]} : vector<8x512xf32> to vector<8x128xf32>
    %cst_57 = arith.constant 5.000000e-01 : f32
    %129 = vector.broadcast %cst_57 : f32 to vector<8x128xf32>
    %130 = arith.mulf %129, %128 : vector<8x128xf32>
    %cst_58 = arith.constant 5.000000e-01 : f32
    %131 = vector.broadcast %cst_58 : f32 to vector<8x128xf32>
    %132 = arith.addf %130, %131 : vector<8x128xf32>
    %133 = arith.mulf %126, %103 : vector<8x128xf32>
    %134 = arith.mulf %121, %127 : vector<8x128xf32>
    %135 = arith.addf %133, %134 : vector<8x128xf32>
    %136 = math.tanh %135 : vector<8x128xf32>
    %137 = arith.mulf %132, %136 : vector<8x128xf32>
    %138 = arith.index_cast %109 : i32 to index
    %c0_59 = arith.constant 0 : index
    %139 = vector.load %arg13[%138, %c0_59] : memref<64x128xf32, #tpu.memory_space<vmem>>, vector<8x128xf32>
    tpu.vector_store %arg13[%138, %c0_59], %137 {strides = array<i32>} : memref<64x128xf32, #tpu.memory_space<vmem>>, vector<8x128xf32>,
    %c4_i32 = arith.constant 4 : i32
    %c8_i32_60 = arith.constant 8 : i32
    %140 = arith.muli %c4_i32, %c8_i32_60 : i32
    %141 = tpu.assume_multiple %140, 8 : i32
    %142 = arith.index_cast %141 : i32 to index
    %c0_61 = arith.constant 0 : index
    %143 = vector.load %arg14[%142, %c0_61] : memref<64x512xf32, #tpu.memory_space<vmem>>, vector<8x512xf32>
    %144 = arith.truncf %137 : vector<8x128xf32> to vector<8x128xbf16>
    %c0_62 = arith.constant 0 : index
    %c0_63 = arith.constant 0 : index
    %145 = vector.load %arg3[%c0_62, %c0_63] : memref<128x512xbf16, #tpu.memory_space<vmem>>, vector<128x512xbf16>
    %cst_64 = arith.constant dense<0.000000e+00> : vector<8x512xf32>
    %146 = tpu.matmul %144, %145, %cst_64 {dimension_numbers = #tpu.dot_dimension_numbers<[1], [0], [0], [1], [0, 0, 1, 1], [], []>} : vector<8x128xbf16>, vector<128x512xbf16>, vector<8x512xf32> -> vector<8x512xf32>
    %147 = arith.addf %143, %146 : vector<8x512xf32>
    %148 = math.tanh %147 : vector<8x512xf32>
    %149 = vector.extract_strided_slice %148 {offsets = [0, 0], sizes = [8, 128], strides = [1, 1]} : vector<8x512xf32> to vector<8x128xf32>
    %cst_65 = arith.constant 5.000000e-01 : f32
    %150 = vector.broadcast %cst_65 : f32 to vector<8x128xf32>
    %151 = arith.mulf %150, %149 : vector<8x128xf32>
    %cst_66 = arith.constant 5.000000e-01 : f32
    %152 = vector.broadcast %cst_66 : f32 to vector<8x128xf32>
    %153 = arith.addf %151, %152 : vector<8x128xf32>
    %154 = vector.extract_strided_slice %148 {offsets = [0, 128], sizes = [8, 128], strides = [1, 1]} : vector<8x512xf32> to vector<8x128xf32>
    %cst_67 = arith.constant 5.000000e-01 : f32
    %155 = vector.broadcast %cst_67 : f32 to vector<8x128xf32>
    %156 = arith.mulf %155, %154 : vector<8x128xf32>
    %cst_68 = arith.constant 5.000000e-01 : f32
    %157 = vector.broadcast %cst_68 : f32 to vector<8x128xf32>
    %158 = arith.addf %156, %157 : vector<8x128xf32>
    %159 = vector.extract_strided_slice %148 {offsets = [0, 256], sizes = [8, 128], strides = [1, 1]} : vector<8x512xf32> to vector<8x128xf32>
    %160 = vector.extract_strided_slice %148 {offsets = [0, 384], sizes = [8, 128], strides = [1, 1]} : vector<8x512xf32> to vector<8x128xf32>
    %cst_69 = arith.constant 5.000000e-01 : f32
    %161 = vector.broadcast %cst_69 : f32 to vector<8x128xf32>
    %162 = arith.mulf %161, %160 : vector<8x128xf32>
    %cst_70 = arith.constant 5.000000e-01 : f32
    %163 = vector.broadcast %cst_70 : f32 to vector<8x128xf32>
    %164 = arith.addf %162, %163 : vector<8x128xf32>
    %165 = arith.mulf %158, %135 : vector<8x128xf32>
    %166 = arith.mulf %153, %159 : vector<8x128xf32>
    %167 = arith.addf %165, %166 : vector<8x128xf32>
    %168 = math.tanh %167 : vector<8x128xf32>
    %169 = arith.mulf %164, %168 : vector<8x128xf32>
    %170 = arith.index_cast %141 : i32 to index
    %c0_71 = arith.constant 0 : index
    %171 = vector.load %arg13[%170, %c0_71] : memref<64x128xf32, #tpu.memory_space<vmem>>, vector<8x128xf32>
    tpu.vector_store %arg13[%170, %c0_71], %169 {strides = array<i32>} : memref<64x128xf32, #tpu.memory_space<vmem>>, vector<8x128xf32>,
    %c5_i32 = arith.constant 5 : i32
    %c8_i32_72 = arith.constant 8 : i32
    %172 = arith.muli %c5_i32, %c8_i32_72 : i32
    %173 = tpu.assume_multiple %172, 8 : i32
    %174 = arith.index_cast %173 : i32 to index
    %c0_73 = arith.constant 0 : index
    %175 = vector.load %arg14[%174, %c0_73] : memref<64x512xf32, #tpu.memory_space<vmem>>, vector<8x512xf32>
    %176 = arith.truncf %169 : vector<8x128xf32> to vector<8x128xbf16>
    %c0_74 = arith.constant 0 : index
    %c0_75 = arith.constant 0 : index
    %177 = vector.load %arg3[%c0_74, %c0_75] : memref<128x512xbf16, #tpu.memory_space<vmem>>, vector<128x512xbf16>
    %cst_76 = arith.constant dense<0.000000e+00> : vector<8x512xf32>
    %178 = tpu.matmul %176, %177, %cst_76 {dimension_numbers = #tpu.dot_dimension_numbers<[1], [0], [0], [1], [0, 0, 1, 1], [], []>} : vector<8x128xbf16>, vector<128x512xbf16>, vector<8x512xf32> -> vector<8x512xf32>
    %179 = arith.addf %175, %178 : vector<8x512xf32>
    %180 = math.tanh %179 : vector<8x512xf32>
    %181 = vector.extract_strided_slice %180 {offsets = [0, 0], sizes = [8, 128], strides = [1, 1]} : vector<8x512xf32> to vector<8x128xf32>
    %cst_77 = arith.constant 5.000000e-01 : f32
    %182 = vector.broadcast %cst_77 : f32 to vector<8x128xf32>
    %183 = arith.mulf %182, %181 : vector<8x128xf32>
    %cst_78 = arith.constant 5.000000e-01 : f32
    %184 = vector.broadcast %cst_78 : f32 to vector<8x128xf32>
    %185 = arith.addf %183, %184 : vector<8x128xf32>
    %186 = vector.extract_strided_slice %180 {offsets = [0, 128], sizes = [8, 128], strides = [1, 1]} : vector<8x512xf32> to vector<8x128xf32>
    %cst_79 = arith.constant 5.000000e-01 : f32
    %187 = vector.broadcast %cst_79 : f32 to vector<8x128xf32>
    %188 = arith.mulf %187, %186 : vector<8x128xf32>
    %cst_80 = arith.constant 5.000000e-01 : f32
    %189 = vector.broadcast %cst_80 : f32 to vector<8x128xf32>
    %190 = arith.addf %188, %189 : vector<8x128xf32>
    %191 = vector.extract_strided_slice %180 {offsets = [0, 256], sizes = [8, 128], strides = [1, 1]} : vector<8x512xf32> to vector<8x128xf32>
    %192 = vector.extract_strided_slice %180 {offsets = [0, 384], sizes = [8, 128], strides = [1, 1]} : vector<8x512xf32> to vector<8x128xf32>
    %cst_81 = arith.constant 5.000000e-01 : f32
    %193 = vector.broadcast %cst_81 : f32 to vector<8x128xf32>
    %194 = arith.mulf %193, %192 : vector<8x128xf32>
    %cst_82 = arith.constant 5.000000e-01 : f32
    %195 = vector.broadcast %cst_82 : f32 to vector<8x128xf32>
    %196 = arith.addf %194, %195 : vector<8x128xf32>
    %197 = arith.mulf %190, %167 : vector<8x128xf32>
    %198 = arith.mulf %185, %191 : vector<8x128xf32>
    %199 = arith.addf %197, %198 : vector<8x128xf32>
    %200 = math.tanh %199 : vector<8x128xf32>
    %201 = arith.mulf %196, %200 : vector<8x128xf32>
    %202 = arith.index_cast %173 : i32 to index
    %c0_83 = arith.constant 0 : index
    %203 = vector.load %arg13[%202, %c0_83] : memref<64x128xf32, #tpu.memory_space<vmem>>, vector<8x128xf32>
    tpu.vector_store %arg13[%202, %c0_83], %201 {strides = array<i32>} : memref<64x128xf32, #tpu.memory_space<vmem>>, vector<8x128xf32>,
    %c6_i32 = arith.constant 6 : i32
    %c8_i32_84 = arith.constant 8 : i32
    %204 = arith.muli %c6_i32, %c8_i32_84 : i32
    %205 = tpu.assume_multiple %204, 8 : i32
    %206 = arith.index_cast %205 : i32 to index
    %c0_85 = arith.constant 0 : index
    %207 = vector.load %arg14[%206, %c0_85] : memref<64x512xf32, #tpu.memory_space<vmem>>, vector<8x512xf32>
    %208 = arith.truncf %201 : vector<8x128xf32> to vector<8x128xbf16>
    %c0_86 = arith.constant 0 : index
    %c0_87 = arith.constant 0 : index
    %209 = vector.load %arg3[%c0_86, %c0_87] : memref<128x512xbf16, #tpu.memory_space<vmem>>, vector<128x512xbf16>
    %cst_88 = arith.constant dense<0.000000e+00> : vector<8x512xf32>
    %210 = tpu.matmul %208, %209, %cst_88 {dimension_numbers = #tpu.dot_dimension_numbers<[1], [0], [0], [1], [0, 0, 1, 1], [], []>} : vector<8x128xbf16>, vector<128x512xbf16>, vector<8x512xf32> -> vector<8x512xf32>
    %211 = arith.addf %207, %210 : vector<8x512xf32>
    %212 = math.tanh %211 : vector<8x512xf32>
    %213 = vector.extract_strided_slice %212 {offsets = [0, 0], sizes = [8, 128], strides = [1, 1]} : vector<8x512xf32> to vector<8x128xf32>
    %cst_89 = arith.constant 5.000000e-01 : f32
    %214 = vector.broadcast %cst_89 : f32 to vector<8x128xf32>
    %215 = arith.mulf %214, %213 : vector<8x128xf32>
    %cst_90 = arith.constant 5.000000e-01 : f32
    %216 = vector.broadcast %cst_90 : f32 to vector<8x128xf32>
    %217 = arith.addf %215, %216 : vector<8x128xf32>
    %218 = vector.extract_strided_slice %212 {offsets = [0, 128], sizes = [8, 128], strides = [1, 1]} : vector<8x512xf32> to vector<8x128xf32>
    %cst_91 = arith.constant 5.000000e-01 : f32
    %219 = vector.broadcast %cst_91 : f32 to vector<8x128xf32>
    %220 = arith.mulf %219, %218 : vector<8x128xf32>
    %cst_92 = arith.constant 5.000000e-01 : f32
    %221 = vector.broadcast %cst_92 : f32 to vector<8x128xf32>
    %222 = arith.addf %220, %221 : vector<8x128xf32>
    %223 = vector.extract_strided_slice %212 {offsets = [0, 256], sizes = [8, 128], strides = [1, 1]} : vector<8x512xf32> to vector<8x128xf32>
    %224 = vector.extract_strided_slice %212 {offsets = [0, 384], sizes = [8, 128], strides = [1, 1]} : vector<8x512xf32> to vector<8x128xf32>
    %cst_93 = arith.constant 5.000000e-01 : f32
    %225 = vector.broadcast %cst_93 : f32 to vector<8x128xf32>
    %226 = arith.mulf %225, %224 : vector<8x128xf32>
    %cst_94 = arith.constant 5.000000e-01 : f32
    %227 = vector.broadcast %cst_94 : f32 to vector<8x128xf32>
    %228 = arith.addf %226, %227 : vector<8x128xf32>
    %229 = arith.mulf %222, %199 : vector<8x128xf32>
    %230 = arith.mulf %217, %223 : vector<8x128xf32>
    %231 = arith.addf %229, %230 : vector<8x128xf32>
    %232 = math.tanh %231 : vector<8x128xf32>
    %233 = arith.mulf %228, %232 : vector<8x128xf32>
    %234 = arith.index_cast %205 : i32 to index
    %c0_95 = arith.constant 0 : index
    %235 = vector.load %arg13[%234, %c0_95] : memref<64x128xf32, #tpu.memory_space<vmem>>, vector<8x128xf32>
    tpu.vector_store %arg13[%234, %c0_95], %233 {strides = array<i32>} : memref<64x128xf32, #tpu.memory_space<vmem>>, vector<8x128xf32>,
    %c7_i32 = arith.constant 7 : i32
    %c8_i32_96 = arith.constant 8 : i32
    %236 = arith.muli %c7_i32, %c8_i32_96 : i32
    %237 = tpu.assume_multiple %236, 8 : i32
    %238 = arith.index_cast %237 : i32 to index
    %c0_97 = arith.constant 0 : index
    %239 = vector.load %arg14[%238, %c0_97] : memref<64x512xf32, #tpu.memory_space<vmem>>, vector<8x512xf32>
    %240 = arith.truncf %233 : vector<8x128xf32> to vector<8x128xbf16>
    %c0_98 = arith.constant 0 : index
    %c0_99 = arith.constant 0 : index
    %241 = vector.load %arg3[%c0_98, %c0_99] : memref<128x512xbf16, #tpu.memory_space<vmem>>, vector<128x512xbf16>
    %cst_100 = arith.constant dense<0.000000e+00> : vector<8x512xf32>
    %242 = tpu.matmul %240, %241, %cst_100 {dimension_numbers = #tpu.dot_dimension_numbers<[1], [0], [0], [1], [0, 0, 1, 1], [], []>} : vector<8x128xbf16>, vector<128x512xbf16>, vector<8x512xf32> -> vector<8x512xf32>
    %243 = arith.addf %239, %242 : vector<8x512xf32>
    %244 = math.tanh %243 : vector<8x512xf32>
    %245 = vector.extract_strided_slice %244 {offsets = [0, 0], sizes = [8, 128], strides = [1, 1]} : vector<8x512xf32> to vector<8x128xf32>
    %cst_101 = arith.constant 5.000000e-01 : f32
    %246 = vector.broadcast %cst_101 : f32 to vector<8x128xf32>
    %247 = arith.mulf %246, %245 : vector<8x128xf32>
    %cst_102 = arith.constant 5.000000e-01 : f32
    %248 = vector.broadcast %cst_102 : f32 to vector<8x128xf32>
    %249 = arith.addf %247, %248 : vector<8x128xf32>
    %250 = vector.extract_strided_slice %244 {offsets = [0, 128], sizes = [8, 128], strides = [1, 1]} : vector<8x512xf32> to vector<8x128xf32>
    %cst_103 = arith.constant 5.000000e-01 : f32
    %251 = vector.broadcast %cst_103 : f32 to vector<8x128xf32>
    %252 = arith.mulf %251, %250 : vector<8x128xf32>
    %cst_104 = arith.constant 5.000000e-01 : f32
    %253 = vector.broadcast %cst_104 : f32 to vector<8x128xf32>
    %254 = arith.addf %252, %253 : vector<8x128xf32>
    %255 = vector.extract_strided_slice %244 {offsets = [0, 256], sizes = [8, 128], strides = [1, 1]} : vector<8x512xf32> to vector<8x128xf32>
    %256 = vector.extract_strided_slice %244 {offsets = [0, 384], sizes = [8, 128], strides = [1, 1]} : vector<8x512xf32> to vector<8x128xf32>
    %cst_105 = arith.constant 5.000000e-01 : f32
    %257 = vector.broadcast %cst_105 : f32 to vector<8x128xf32>
    %258 = arith.mulf %257, %256 : vector<8x128xf32>
    %cst_106 = arith.constant 5.000000e-01 : f32
    %259 = vector.broadcast %cst_106 : f32 to vector<8x128xf32>
    %260 = arith.addf %258, %259 : vector<8x128xf32>
    %261 = arith.mulf %254, %231 : vector<8x128xf32>
    %262 = arith.mulf %249, %255 : vector<8x128xf32>
    %263 = arith.addf %261, %262 : vector<8x128xf32>
    %264 = math.tanh %263 : vector<8x128xf32>
    %265 = arith.mulf %260, %264 : vector<8x128xf32>
    %266 = arith.index_cast %237 : i32 to index
    %c0_107 = arith.constant 0 : index
    %267 = vector.load %arg13[%266, %c0_107] : memref<64x128xf32, #tpu.memory_space<vmem>>, vector<8x128xf32>
    tpu.vector_store %arg13[%266, %c0_107], %265 {strides = array<i32>} : memref<64x128xf32, #tpu.memory_space<vmem>>, vector<8x128xf32>,
    %c8_i32_108 = arith.constant 8 : i32
    %c0_109 = arith.constant 0 : index
    %c0_110 = arith.constant 0 : index
    %268 = vector.load %arg9[%c0_109, %c0_110] : memref<8x128xf32, #tpu.memory_space<vmem>>, vector<8x128xf32>
    tpu.vector_store %arg9[%c0_109, %c0_110], %265 {strides = array<i32>} : memref<8x128xf32, #tpu.memory_space<vmem>>, vector<8x128xf32>,
    %c0_111 = arith.constant 0 : index
    %c0_112 = arith.constant 0 : index
    %269 = vector.load %arg10[%c0_111, %c0_112] : memref<8x128xf32, #tpu.memory_space<vmem>>, vector<8x128xf32>
    tpu.vector_store %arg10[%c0_111, %c0_112], %263 {strides = array<i32>} : memref<8x128xf32, #tpu.memory_space<vmem>>, vector<8x128xf32>,
    %c0_113 = arith.constant 0 : index
    %c0_114 = arith.constant 0 : index
    %270 = vector.load %arg13[%c0_113, %c0_114] : memref<64x128xf32, #tpu.memory_space<vmem>>, vector<64x128xf32>
    %271 = arith.truncf %270 : vector<64x128xf32> to vector<64x128xbf16>
    %c0_115 = arith.constant 0 : index
    %c0_116 = arith.constant 0 : index
    %272 = vector.load %arg5[%c0_115, %c0_116] : memref<128x512xbf16, #tpu.memory_space<vmem>>, vector<128x512xbf16>
    %cst_117 = arith.constant dense<0.000000e+00> : vector<64x512xf32>
    %273 = tpu.matmul %271, %272, %cst_117 {dimension_numbers = #tpu.dot_dimension_numbers<[1], [0], [0], [1], [0, 0, 1, 1], [], []>} : vector<64x128xbf16>, vector<128x512xbf16>, vector<64x512xf32> -> vector<64x512xf32>
    %c0_118 = arith.constant 0 : index
    %c0_119 = arith.constant 0 : index
    %274 = vector.load %arg7[%c0_118, %c0_119] : memref<1x512xf32, #tpu.memory_space<vmem>>, vector<1x512xf32>
    %275 = vector.broadcast %274 : vector<1x512xf32> to vector<64x512xf32>
    %276 = arith.addf %273, %275 : vector<64x512xf32>
    %c0_120 = arith.constant 0 : index
    %c0_121 = arith.constant 0 : index
    %277 = vector.load %arg14[%c0_120, %c0_121] : memref<64x512xf32, #tpu.memory_space<vmem>>, vector<64x512xf32>
    tpu.vector_store %arg14[%c0_120, %c0_121], %276 {strides = array<i32>} : memref<64x512xf32, #tpu.memory_space<vmem>>, vector<64x512xf32>,
    %c0_122 = arith.constant 0 : index
    %c0_123 = arith.constant 0 : index
    %278 = vector.load %arg11[%c0_122, %c0_123] : memref<8x128xf32, #tpu.memory_space<vmem>>, vector<8x128xf32>
    %c0_124 = arith.constant 0 : index
    %c0_125 = arith.constant 0 : index
    %279 = vector.load %arg12[%c0_124, %c0_125] : memref<8x128xf32, #tpu.memory_space<vmem>>, vector<8x128xf32>
    %c0_i32_126 = arith.constant 0 : i32
    %c8_i32_127 = arith.constant 8 : i32
    %280 = arith.muli %c0_i32_126, %c8_i32_127 : i32
    %281 = tpu.assume_multiple %280, 8 : i32
    %282 = arith.index_cast %281 : i32 to index
    %c0_128 = arith.constant 0 : index
    %283 = vector.load %arg14[%282, %c0_128] : memref<64x512xf32, #tpu.memory_space<vmem>>, vector<8x512xf32>
    %284 = arith.truncf %278 : vector<8x128xf32> to vector<8x128xbf16>
    %c0_129 = arith.constant 0 : index
    %c0_130 = arith.constant 0 : index
    %285 = vector.load %arg6[%c0_129, %c0_130] : memref<128x512xbf16, #tpu.memory_space<vmem>>, vector<128x512xbf16>
    %cst_131 = arith.constant dense<0.000000e+00> : vector<8x512xf32>
    %286 = tpu.matmul %284, %285, %cst_131 {dimension_numbers = #tpu.dot_dimension_numbers<[1], [0], [0], [1], [0, 0, 1, 1], [], []>} : vector<8x128xbf16>, vector<128x512xbf16>, vector<8x512xf32> -> vector<8x512xf32>
    %287 = arith.addf %283, %286 : vector<8x512xf32>
    %288 = math.tanh %287 : vector<8x512xf32>
    %289 = vector.extract_strided_slice %288 {offsets = [0, 0], sizes = [8, 128], strides = [1, 1]} : vector<8x512xf32> to vector<8x128xf32>
    %cst_132 = arith.constant 5.000000e-01 : f32
    %290 = vector.broadcast %cst_132 : f32 to vector<8x128xf32>
    %291 = arith.mulf %290, %289 : vector<8x128xf32>
    %cst_133 = arith.constant 5.000000e-01 : f32
    %292 = vector.broadcast %cst_133 : f32 to vector<8x128xf32>
    %293 = arith.addf %291, %292 : vector<8x128xf32>
    %294 = vector.extract_strided_slice %288 {offsets = [0, 128], sizes = [8, 128], strides = [1, 1]} : vector<8x512xf32> to vector<8x128xf32>
    %cst_134 = arith.constant 5.000000e-01 : f32
    %295 = vector.broadcast %cst_134 : f32 to vector<8x128xf32>
    %296 = arith.mulf %295, %294 : vector<8x128xf32>
    %cst_135 = arith.constant 5.000000e-01 : f32
    %297 = vector.broadcast %cst_135 : f32 to vector<8x128xf32>
    %298 = arith.addf %296, %297 : vector<8x128xf32>
    %299 = vector.extract_strided_slice %288 {offsets = [0, 256], sizes = [8, 128], strides = [1, 1]} : vector<8x512xf32> to vector<8x128xf32>
    %300 = vector.extract_strided_slice %288 {offsets = [0, 384], sizes = [8, 128], strides = [1, 1]} : vector<8x512xf32> to vector<8x128xf32>
    %cst_136 = arith.constant 5.000000e-01 : f32
    %301 = vector.broadcast %cst_136 : f32 to vector<8x128xf32>
    %302 = arith.mulf %301, %300 : vector<8x128xf32>
    %cst_137 = arith.constant 5.000000e-01 : f32
    %303 = vector.broadcast %cst_137 : f32 to vector<8x128xf32>
    %304 = arith.addf %302, %303 : vector<8x128xf32>
    %305 = arith.mulf %298, %279 : vector<8x128xf32>
    %306 = arith.mulf %293, %299 : vector<8x128xf32>
    %307 = arith.addf %305, %306 : vector<8x128xf32>
    %308 = math.tanh %307 : vector<8x128xf32>
    %309 = arith.mulf %304, %308 : vector<8x128xf32>
    %c1_i32_138 = arith.constant 1 : i32
    %c8_i32_139 = arith.constant 8 : i32
    %310 = arith.muli %c1_i32_138, %c8_i32_139 : i32
    %311 = tpu.assume_multiple %310, 8 : i32
    %312 = arith.index_cast %311 : i32 to index
    %c0_140 = arith.constant 0 : index
    %313 = vector.load %arg14[%312, %c0_140] : memref<64x512xf32, #tpu.memory_space<vmem>>, vector<8x512xf32>
    %314 = arith.truncf %309 : vector<8x128xf32> to vector<8x128xbf16>
    %c0_141 = arith.constant 0 : index
    %c0_142 = arith.constant 0 : index
    %315 = vector.load %arg6[%c0_141, %c0_142] : memref<128x512xbf16, #tpu.memory_space<vmem>>, vector<128x512xbf16>
    %cst_143 = arith.constant dense<0.000000e+00> : vector<8x512xf32>
    %316 = tpu.matmul %314, %315, %cst_143 {dimension_numbers = #tpu.dot_dimension_numbers<[1], [0], [0], [1], [0, 0, 1, 1], [], []>} : vector<8x128xbf16>, vector<128x512xbf16>, vector<8x512xf32> -> vector<8x512xf32>
    %317 = arith.addf %313, %316 : vector<8x512xf32>
    %318 = math.tanh %317 : vector<8x512xf32>
    %319 = vector.extract_strided_slice %318 {offsets = [0, 0], sizes = [8, 128], strides = [1, 1]} : vector<8x512xf32> to vector<8x128xf32>
    %cst_144 = arith.constant 5.000000e-01 : f32
    %320 = vector.broadcast %cst_144 : f32 to vector<8x128xf32>
    %321 = arith.mulf %320, %319 : vector<8x128xf32>
    %cst_145 = arith.constant 5.000000e-01 : f32
    %322 = vector.broadcast %cst_145 : f32 to vector<8x128xf32>
    %323 = arith.addf %321, %322 : vector<8x128xf32>
    %324 = vector.extract_strided_slice %318 {offsets = [0, 128], sizes = [8, 128], strides = [1, 1]} : vector<8x512xf32> to vector<8x128xf32>
    %cst_146 = arith.constant 5.000000e-01 : f32
    %325 = vector.broadcast %cst_146 : f32 to vector<8x128xf32>
    %326 = arith.mulf %325, %324 : vector<8x128xf32>
    %cst_147 = arith.constant 5.000000e-01 : f32
    %327 = vector.broadcast %cst_147 : f32 to vector<8x128xf32>
    %328 = arith.addf %326, %327 : vector<8x128xf32>
    %329 = vector.extract_strided_slice %318 {offsets = [0, 256], sizes = [8, 128], strides = [1, 1]} : vector<8x512xf32> to vector<8x128xf32>
    %330 = vector.extract_strided_slice %318 {offsets = [0, 384], sizes = [8, 128], strides = [1, 1]} : vector<8x512xf32> to vector<8x128xf32>
    %cst_148 = arith.constant 5.000000e-01 : f32
    %331 = vector.broadcast %cst_148 : f32 to vector<8x128xf32>
    %332 = arith.mulf %331, %330 : vector<8x128xf32>
    %cst_149 = arith.constant 5.000000e-01 : f32
    %333 = vector.broadcast %cst_149 : f32 to vector<8x128xf32>
    %334 = arith.addf %332, %333 : vector<8x128xf32>
    %335 = arith.mulf %328, %307 : vector<8x128xf32>
    %336 = arith.mulf %323, %329 : vector<8x128xf32>
    %337 = arith.addf %335, %336 : vector<8x128xf32>
    %338 = math.tanh %337 : vector<8x128xf32>
    %339 = arith.mulf %334, %338 : vector<8x128xf32>
    %c2_i32_150 = arith.constant 2 : i32
    %c8_i32_151 = arith.constant 8 : i32
    %340 = arith.muli %c2_i32_150, %c8_i32_151 : i32
    %341 = tpu.assume_multiple %340, 8 : i32
    %342 = arith.index_cast %341 : i32 to index
    %c0_152 = arith.constant 0 : index
    %343 = vector.load %arg14[%342, %c0_152] : memref<64x512xf32, #tpu.memory_space<vmem>>, vector<8x512xf32>
    %344 = arith.truncf %339 : vector<8x128xf32> to vector<8x128xbf16>
    %c0_153 = arith.constant 0 : index
    %c0_154 = arith.constant 0 : index
    %345 = vector.load %arg6[%c0_153, %c0_154] : memref<128x512xbf16, #tpu.memory_space<vmem>>, vector<128x512xbf16>
    %cst_155 = arith.constant dense<0.000000e+00> : vector<8x512xf32>
    %346 = tpu.matmul %344, %345, %cst_155 {dimension_numbers = #tpu.dot_dimension_numbers<[1], [0], [0], [1], [0, 0, 1, 1], [], []>} : vector<8x128xbf16>, vector<128x512xbf16>, vector<8x512xf32> -> vector<8x512xf32>
    %347 = arith.addf %343, %346 : vector<8x512xf32>
    %348 = math.tanh %347 : vector<8x512xf32>
    %349 = vector.extract_strided_slice %348 {offsets = [0, 0], sizes = [8, 128], strides = [1, 1]} : vector<8x512xf32> to vector<8x128xf32>
    %cst_156 = arith.constant 5.000000e-01 : f32
    %350 = vector.broadcast %cst_156 : f32 to vector<8x128xf32>
    %351 = arith.mulf %350, %349 : vector<8x128xf32>
    %cst_157 = arith.constant 5.000000e-01 : f32
    %352 = vector.broadcast %cst_157 : f32 to vector<8x128xf32>
    %353 = arith.addf %351, %352 : vector<8x128xf32>
    %354 = vector.extract_strided_slice %348 {offsets = [0, 128], sizes = [8, 128], strides = [1, 1]} : vector<8x512xf32> to vector<8x128xf32>
    %cst_158 = arith.constant 5.000000e-01 : f32
    %355 = vector.broadcast %cst_158 : f32 to vector<8x128xf32>
    %356 = arith.mulf %355, %354 : vector<8x128xf32>
    %cst_159 = arith.constant 5.000000e-01 : f32
    %357 = vector.broadcast %cst_159 : f32 to vector<8x128xf32>
    %358 = arith.addf %356, %357 : vector<8x128xf32>
    %359 = vector.extract_strided_slice %348 {offsets = [0, 256], sizes = [8, 128], strides = [1, 1]} : vector<8x512xf32> to vector<8x128xf32>
    %360 = vector.extract_strided_slice %348 {offsets = [0, 384], sizes = [8, 128], strides = [1, 1]} : vector<8x512xf32> to vector<8x128xf32>
    %cst_160 = arith.constant 5.000000e-01 : f32
    %361 = vector.broadcast %cst_160 : f32 to vector<8x128xf32>
    %362 = arith.mulf %361, %360 : vector<8x128xf32>
    %cst_161 = arith.constant 5.000000e-01 : f32
    %363 = vector.broadcast %cst_161 : f32 to vector<8x128xf32>
    %364 = arith.addf %362, %363 : vector<8x128xf32>
    %365 = arith.mulf %358, %337 : vector<8x128xf32>
    %366 = arith.mulf %353, %359 : vector<8x128xf32>
    %367 = arith.addf %365, %366 : vector<8x128xf32>
    %368 = math.tanh %367 : vector<8x128xf32>
    %369 = arith.mulf %364, %368 : vector<8x128xf32>
    %c3_i32_162 = arith.constant 3 : i32
    %c8_i32_163 = arith.constant 8 : i32
    %370 = arith.muli %c3_i32_162, %c8_i32_163 : i32
    %371 = tpu.assume_multiple %370, 8 : i32
    %372 = arith.index_cast %371 : i32 to index
    %c0_164 = arith.constant 0 : index
    %373 = vector.load %arg14[%372, %c0_164] : memref<64x512xf32, #tpu.memory_space<vmem>>, vector<8x512xf32>
    %374 = arith.truncf %369 : vector<8x128xf32> to vector<8x128xbf16>
    %c0_165 = arith.constant 0 : index
    %c0_166 = arith.constant 0 : index
    %375 = vector.load %arg6[%c0_165, %c0_166] : memref<128x512xbf16, #tpu.memory_space<vmem>>, vector<128x512xbf16>
    %cst_167 = arith.constant dense<0.000000e+00> : vector<8x512xf32>
    %376 = tpu.matmul %374, %375, %cst_167 {dimension_numbers = #tpu.dot_dimension_numbers<[1], [0], [0], [1], [0, 0, 1, 1], [], []>} : vector<8x128xbf16>, vector<128x512xbf16>, vector<8x512xf32> -> vector<8x512xf32>
    %377 = arith.addf %373, %376 : vector<8x512xf32>
    %378 = math.tanh %377 : vector<8x512xf32>
    %379 = vector.extract_strided_slice %378 {offsets = [0, 0], sizes = [8, 128], strides = [1, 1]} : vector<8x512xf32> to vector<8x128xf32>
    %cst_168 = arith.constant 5.000000e-01 : f32
    %380 = vector.broadcast %cst_168 : f32 to vector<8x128xf32>
    %381 = arith.mulf %380, %379 : vector<8x128xf32>
    %cst_169 = arith.constant 5.000000e-01 : f32
    %382 = vector.broadcast %cst_169 : f32 to vector<8x128xf32>
    %383 = arith.addf %381, %382 : vector<8x128xf32>
    %384 = vector.extract_strided_slice %378 {offsets = [0, 128], sizes = [8, 128], strides = [1, 1]} : vector<8x512xf32> to vector<8x128xf32>
    %cst_170 = arith.constant 5.000000e-01 : f32
    %385 = vector.broadcast %cst_170 : f32 to vector<8x128xf32>
    %386 = arith.mulf %385, %384 : vector<8x128xf32>
    %cst_171 = arith.constant 5.000000e-01 : f32
    %387 = vector.broadcast %cst_171 : f32 to vector<8x128xf32>
    %388 = arith.addf %386, %387 : vector<8x128xf32>
    %389 = vector.extract_strided_slice %378 {offsets = [0, 256], sizes = [8, 128], strides = [1, 1]} : vector<8x512xf32> to vector<8x128xf32>
    %390 = vector.extract_strided_slice %378 {offsets = [0, 384], sizes = [8, 128], strides = [1, 1]} : vector<8x512xf32> to vector<8x128xf32>
    %cst_172 = arith.constant 5.000000e-01 : f32
    %391 = vector.broadcast %cst_172 : f32 to vector<8x128xf32>
    %392 = arith.mulf %391, %390 : vector<8x128xf32>
    %cst_173 = arith.constant 5.000000e-01 : f32
    %393 = vector.broadcast %cst_173 : f32 to vector<8x128xf32>
    %394 = arith.addf %392, %393 : vector<8x128xf32>
    %395 = arith.mulf %388, %367 : vector<8x128xf32>
    %396 = arith.mulf %383, %389 : vector<8x128xf32>
    %397 = arith.addf %395, %396 : vector<8x128xf32>
    %398 = math.tanh %397 : vector<8x128xf32>
    %399 = arith.mulf %394, %398 : vector<8x128xf32>
    %c4_i32_174 = arith.constant 4 : i32
    %c8_i32_175 = arith.constant 8 : i32
    %400 = arith.muli %c4_i32_174, %c8_i32_175 : i32
    %401 = tpu.assume_multiple %400, 8 : i32
    %402 = arith.index_cast %401 : i32 to index
    %c0_176 = arith.constant 0 : index
    %403 = vector.load %arg14[%402, %c0_176] : memref<64x512xf32, #tpu.memory_space<vmem>>, vector<8x512xf32>
    %404 = arith.truncf %399 : vector<8x128xf32> to vector<8x128xbf16>
    %c0_177 = arith.constant 0 : index
    %c0_178 = arith.constant 0 : index
    %405 = vector.load %arg6[%c0_177, %c0_178] : memref<128x512xbf16, #tpu.memory_space<vmem>>, vector<128x512xbf16>
    %cst_179 = arith.constant dense<0.000000e+00> : vector<8x512xf32>
    %406 = tpu.matmul %404, %405, %cst_179 {dimension_numbers = #tpu.dot_dimension_numbers<[1], [0], [0], [1], [0, 0, 1, 1], [], []>} : vector<8x128xbf16>, vector<128x512xbf16>, vector<8x512xf32> -> vector<8x512xf32>
    %407 = arith.addf %403, %406 : vector<8x512xf32>
    %408 = math.tanh %407 : vector<8x512xf32>
    %409 = vector.extract_strided_slice %408 {offsets = [0, 0], sizes = [8, 128], strides = [1, 1]} : vector<8x512xf32> to vector<8x128xf32>
    %cst_180 = arith.constant 5.000000e-01 : f32
    %410 = vector.broadcast %cst_180 : f32 to vector<8x128xf32>
    %411 = arith.mulf %410, %409 : vector<8x128xf32>
    %cst_181 = arith.constant 5.000000e-01 : f32
    %412 = vector.broadcast %cst_181 : f32 to vector<8x128xf32>
    %413 = arith.addf %411, %412 : vector<8x128xf32>
    %414 = vector.extract_strided_slice %408 {offsets = [0, 128], sizes = [8, 128], strides = [1, 1]} : vector<8x512xf32> to vector<8x128xf32>
    %cst_182 = arith.constant 5.000000e-01 : f32
    %415 = vector.broadcast %cst_182 : f32 to vector<8x128xf32>
    %416 = arith.mulf %415, %414 : vector<8x128xf32>
    %cst_183 = arith.constant 5.000000e-01 : f32
    %417 = vector.broadcast %cst_183 : f32 to vector<8x128xf32>
    %418 = arith.addf %416, %417 : vector<8x128xf32>
    %419 = vector.extract_strided_slice %408 {offsets = [0, 256], sizes = [8, 128], strides = [1, 1]} : vector<8x512xf32> to vector<8x128xf32>
    %420 = vector.extract_strided_slice %408 {offsets = [0, 384], sizes = [8, 128], strides = [1, 1]} : vector<8x512xf32> to vector<8x128xf32>
    %cst_184 = arith.constant 5.000000e-01 : f32
    %421 = vector.broadcast %cst_184 : f32 to vector<8x128xf32>
    %422 = arith.mulf %421, %420 : vector<8x128xf32>
    %cst_185 = arith.constant 5.000000e-01 : f32
    %423 = vector.broadcast %cst_185 : f32 to vector<8x128xf32>
    %424 = arith.addf %422, %423 : vector<8x128xf32>
    %425 = arith.mulf %418, %397 : vector<8x128xf32>
    %426 = arith.mulf %413, %419 : vector<8x128xf32>
    %427 = arith.addf %425, %426 : vector<8x128xf32>
    %428 = math.tanh %427 : vector<8x128xf32>
    %429 = arith.mulf %424, %428 : vector<8x128xf32>
    %c5_i32_186 = arith.constant 5 : i32
    %c8_i32_187 = arith.constant 8 : i32
    %430 = arith.muli %c5_i32_186, %c8_i32_187 : i32
    %431 = tpu.assume_multiple %430, 8 : i32
    %432 = arith.index_cast %431 : i32 to index
    %c0_188 = arith.constant 0 : index
    %433 = vector.load %arg14[%432, %c0_188] : memref<64x512xf32, #tpu.memory_space<vmem>>, vector<8x512xf32>
    %434 = arith.truncf %429 : vector<8x128xf32> to vector<8x128xbf16>
    %c0_189 = arith.constant 0 : index
    %c0_190 = arith.constant 0 : index
    %435 = vector.load %arg6[%c0_189, %c0_190] : memref<128x512xbf16, #tpu.memory_space<vmem>>, vector<128x512xbf16>
    %cst_191 = arith.constant dense<0.000000e+00> : vector<8x512xf32>
    %436 = tpu.matmul %434, %435, %cst_191 {dimension_numbers = #tpu.dot_dimension_numbers<[1], [0], [0], [1], [0, 0, 1, 1], [], []>} : vector<8x128xbf16>, vector<128x512xbf16>, vector<8x512xf32> -> vector<8x512xf32>
    %437 = arith.addf %433, %436 : vector<8x512xf32>
    %438 = math.tanh %437 : vector<8x512xf32>
    %439 = vector.extract_strided_slice %438 {offsets = [0, 0], sizes = [8, 128], strides = [1, 1]} : vector<8x512xf32> to vector<8x128xf32>
    %cst_192 = arith.constant 5.000000e-01 : f32
    %440 = vector.broadcast %cst_192 : f32 to vector<8x128xf32>
    %441 = arith.mulf %440, %439 : vector<8x128xf32>
    %cst_193 = arith.constant 5.000000e-01 : f32
    %442 = vector.broadcast %cst_193 : f32 to vector<8x128xf32>
    %443 = arith.addf %441, %442 : vector<8x128xf32>
    %444 = vector.extract_strided_slice %438 {offsets = [0, 128], sizes = [8, 128], strides = [1, 1]} : vector<8x512xf32> to vector<8x128xf32>
    %cst_194 = arith.constant 5.000000e-01 : f32
    %445 = vector.broadcast %cst_194 : f32 to vector<8x128xf32>
    %446 = arith.mulf %445, %444 : vector<8x128xf32>
    %cst_195 = arith.constant 5.000000e-01 : f32
    %447 = vector.broadcast %cst_195 : f32 to vector<8x128xf32>
    %448 = arith.addf %446, %447 : vector<8x128xf32>
    %449 = vector.extract_strided_slice %438 {offsets = [0, 256], sizes = [8, 128], strides = [1, 1]} : vector<8x512xf32> to vector<8x128xf32>
    %450 = vector.extract_strided_slice %438 {offsets = [0, 384], sizes = [8, 128], strides = [1, 1]} : vector<8x512xf32> to vector<8x128xf32>
    %cst_196 = arith.constant 5.000000e-01 : f32
    %451 = vector.broadcast %cst_196 : f32 to vector<8x128xf32>
    %452 = arith.mulf %451, %450 : vector<8x128xf32>
    %cst_197 = arith.constant 5.000000e-01 : f32
    %453 = vector.broadcast %cst_197 : f32 to vector<8x128xf32>
    %454 = arith.addf %452, %453 : vector<8x128xf32>
    %455 = arith.mulf %448, %427 : vector<8x128xf32>
    %456 = arith.mulf %443, %449 : vector<8x128xf32>
    %457 = arith.addf %455, %456 : vector<8x128xf32>
    %458 = math.tanh %457 : vector<8x128xf32>
    %459 = arith.mulf %454, %458 : vector<8x128xf32>
    %c6_i32_198 = arith.constant 6 : i32
    %c8_i32_199 = arith.constant 8 : i32
    %460 = arith.muli %c6_i32_198, %c8_i32_199 : i32
    %461 = tpu.assume_multiple %460, 8 : i32
    %462 = arith.index_cast %461 : i32 to index
    %c0_200 = arith.constant 0 : index
    %463 = vector.load %arg14[%462, %c0_200] : memref<64x512xf32, #tpu.memory_space<vmem>>, vector<8x512xf32>
    %464 = arith.truncf %459 : vector<8x128xf32> to vector<8x128xbf16>
    %c0_201 = arith.constant 0 : index
    %c0_202 = arith.constant 0 : index
    %465 = vector.load %arg6[%c0_201, %c0_202] : memref<128x512xbf16, #tpu.memory_space<vmem>>, vector<128x512xbf16>
    %cst_203 = arith.constant dense<0.000000e+00> : vector<8x512xf32>
    %466 = tpu.matmul %464, %465, %cst_203 {dimension_numbers = #tpu.dot_dimension_numbers<[1], [0], [0], [1], [0, 0, 1, 1], [], []>} : vector<8x128xbf16>, vector<128x512xbf16>, vector<8x512xf32> -> vector<8x512xf32>
    %467 = arith.addf %463, %466 : vector<8x512xf32>
    %468 = math.tanh %467 : vector<8x512xf32>
    %469 = vector.extract_strided_slice %468 {offsets = [0, 0], sizes = [8, 128], strides = [1, 1]} : vector<8x512xf32> to vector<8x128xf32>
    %cst_204 = arith.constant 5.000000e-01 : f32
    %470 = vector.broadcast %cst_204 : f32 to vector<8x128xf32>
    %471 = arith.mulf %470, %469 : vector<8x128xf32>
    %cst_205 = arith.constant 5.000000e-01 : f32
    %472 = vector.broadcast %cst_205 : f32 to vector<8x128xf32>
    %473 = arith.addf %471, %472 : vector<8x128xf32>
    %474 = vector.extract_strided_slice %468 {offsets = [0, 128], sizes = [8, 128], strides = [1, 1]} : vector<8x512xf32> to vector<8x128xf32>
    %cst_206 = arith.constant 5.000000e-01 : f32
    %475 = vector.broadcast %cst_206 : f32 to vector<8x128xf32>
    %476 = arith.mulf %475, %474 : vector<8x128xf32>
    %cst_207 = arith.constant 5.000000e-01 : f32
    %477 = vector.broadcast %cst_207 : f32 to vector<8x128xf32>
    %478 = arith.addf %476, %477 : vector<8x128xf32>
    %479 = vector.extract_strided_slice %468 {offsets = [0, 256], sizes = [8, 128], strides = [1, 1]} : vector<8x512xf32> to vector<8x128xf32>
    %480 = vector.extract_strided_slice %468 {offsets = [0, 384], sizes = [8, 128], strides = [1, 1]} : vector<8x512xf32> to vector<8x128xf32>
    %cst_208 = arith.constant 5.000000e-01 : f32
    %481 = vector.broadcast %cst_208 : f32 to vector<8x128xf32>
    %482 = arith.mulf %481, %480 : vector<8x128xf32>
    %cst_209 = arith.constant 5.000000e-01 : f32
    %483 = vector.broadcast %cst_209 : f32 to vector<8x128xf32>
    %484 = arith.addf %482, %483 : vector<8x128xf32>
    %485 = arith.mulf %478, %457 : vector<8x128xf32>
    %486 = arith.mulf %473, %479 : vector<8x128xf32>
    %487 = arith.addf %485, %486 : vector<8x128xf32>
    %488 = math.tanh %487 : vector<8x128xf32>
    %489 = arith.mulf %484, %488 : vector<8x128xf32>
    %c7_i32_210 = arith.constant 7 : i32
    %c8_i32_211 = arith.constant 8 : i32
    %490 = arith.muli %c7_i32_210, %c8_i32_211 : i32
    %491 = tpu.assume_multiple %490, 8 : i32
    %492 = arith.index_cast %491 : i32 to index
    %c0_212 = arith.constant 0 : index
    %493 = vector.load %arg14[%492, %c0_212] : memref<64x512xf32, #tpu.memory_space<vmem>>, vector<8x512xf32>
    %494 = arith.truncf %489 : vector<8x128xf32> to vector<8x128xbf16>
    %c0_213 = arith.constant 0 : index
    %c0_214 = arith.constant 0 : index
    %495 = vector.load %arg6[%c0_213, %c0_214] : memref<128x512xbf16, #tpu.memory_space<vmem>>, vector<128x512xbf16>
    %cst_215 = arith.constant dense<0.000000e+00> : vector<8x512xf32>
    %496 = tpu.matmul %494, %495, %cst_215 {dimension_numbers = #tpu.dot_dimension_numbers<[1], [0], [0], [1], [0, 0, 1, 1], [], []>} : vector<8x128xbf16>, vector<128x512xbf16>, vector<8x512xf32> -> vector<8x512xf32>
    %497 = arith.addf %493, %496 : vector<8x512xf32>
    %498 = math.tanh %497 : vector<8x512xf32>
    %499 = vector.extract_strided_slice %498 {offsets = [0, 0], sizes = [8, 128], strides = [1, 1]} : vector<8x512xf32> to vector<8x128xf32>
    %cst_216 = arith.constant 5.000000e-01 : f32
    %500 = vector.broadcast %cst_216 : f32 to vector<8x128xf32>
    %501 = arith.mulf %500, %499 : vector<8x128xf32>
    %cst_217 = arith.constant 5.000000e-01 : f32
    %502 = vector.broadcast %cst_217 : f32 to vector<8x128xf32>
    %503 = arith.addf %501, %502 : vector<8x128xf32>
    %504 = vector.extract_strided_slice %498 {offsets = [0, 128], sizes = [8, 128], strides = [1, 1]} : vector<8x512xf32> to vector<8x128xf32>
    %cst_218 = arith.constant 5.000000e-01 : f32
    %505 = vector.broadcast %cst_218 : f32 to vector<8x128xf32>
    %506 = arith.mulf %505, %504 : vector<8x128xf32>
    %cst_219 = arith.constant 5.000000e-01 : f32
    %507 = vector.broadcast %cst_219 : f32 to vector<8x128xf32>
    %508 = arith.addf %506, %507 : vector<8x128xf32>
    %509 = vector.extract_strided_slice %498 {offsets = [0, 256], sizes = [8, 128], strides = [1, 1]} : vector<8x512xf32> to vector<8x128xf32>
    %510 = vector.extract_strided_slice %498 {offsets = [0, 384], sizes = [8, 128], strides = [1, 1]} : vector<8x512xf32> to vector<8x128xf32>
    %cst_220 = arith.constant 5.000000e-01 : f32
    %511 = vector.broadcast %cst_220 : f32 to vector<8x128xf32>
    %512 = arith.mulf %511, %510 : vector<8x128xf32>
    %cst_221 = arith.constant 5.000000e-01 : f32
    %513 = vector.broadcast %cst_221 : f32 to vector<8x128xf32>
    %514 = arith.addf %512, %513 : vector<8x128xf32>
    %515 = arith.mulf %508, %487 : vector<8x128xf32>
    %516 = arith.mulf %503, %509 : vector<8x128xf32>
    %517 = arith.addf %515, %516 : vector<8x128xf32>
    %518 = math.tanh %517 : vector<8x128xf32>
    %519 = arith.mulf %514, %518 : vector<8x128xf32>
    %c8_i32_222 = arith.constant 8 : i32
    %c0_223 = arith.constant 0 : index
    %c0_224 = arith.constant 0 : index
    %520 = vector.load %arg11[%c0_223, %c0_224] : memref<8x128xf32, #tpu.memory_space<vmem>>, vector<8x128xf32>
    tpu.vector_store %arg11[%c0_223, %c0_224], %519 {strides = array<i32>} : memref<8x128xf32, #tpu.memory_space<vmem>>, vector<8x128xf32>,
    %c0_225 = arith.constant 0 : index
    %c0_226 = arith.constant 0 : index
    %521 = vector.load %arg12[%c0_225, %c0_226] : memref<8x128xf32, #tpu.memory_space<vmem>>, vector<8x128xf32>
    tpu.vector_store %arg12[%c0_225, %c0_226], %517 {strides = array<i32>} : memref<8x128xf32, #tpu.memory_space<vmem>>, vector<8x128xf32>,
    %c0_i32_227 = arith.constant 0 : i32
    %522 = arith.cmpi eq, %arg0, %c0_i32_227 : i32
    %523 = arith.extui %522 : i1 to i32
    %c0_i32_228 = arith.constant 0 : i32
    %524 = arith.cmpi ne, %523, %c0_i32_228 : i32
    scf.if %524 {
      %c0_229 = arith.constant 0 : index
      %c0_230 = arith.constant 0 : index
      %525 = vector.load %arg8[%c0_229, %c0_230] : memref<8x128xf32, #tpu.memory_space<vmem>>, vector<8x128xf32>
      tpu.vector_store %arg8[%c0_229, %c0_230], %519 {strides = array<i32>} : memref<8x128xf32, #tpu.memory_space<vmem>>, vector<8x128xf32>,
    } else {
    }
    return
  }
  func.func @transform_0(%arg0: i32) -> (i32, i32) {
    %c0_i32 = arith.constant 0 : i32
    %c0_i32_0 = arith.constant 0 : i32
    return %arg0, %c0_i32 : i32, i32
  }
  func.func @transform_1(%arg0: i32) -> (i32, i32) {
    %c0_i32 = arith.constant 0 : i32
    %c0_i32_0 = arith.constant 0 : i32
    %c0_i32_1 = arith.constant 0 : i32
    return %c0_i32, %c0_i32_0 : i32, i32
  }
  func.func @transform_2(%arg0: i32) -> (i32, i32) {
    %c0_i32 = arith.constant 0 : i32
    %c0_i32_0 = arith.constant 0 : i32
    %c0_i32_1 = arith.constant 0 : i32
    return %c0_i32, %c0_i32_0 : i32, i32
  }
  func.func @transform_3(%arg0: i32) -> (i32, i32) {
    %c0_i32 = arith.constant 0 : i32
    %c0_i32_0 = arith.constant 0 : i32
    %c0_i32_1 = arith.constant 0 : i32
    return %c0_i32, %c0_i32_0 : i32, i32
  }
  func.func @transform_4(%arg0: i32) -> (i32, i32) {
    %c0_i32 = arith.constant 0 : i32
    %c0_i32_0 = arith.constant 0 : i32
    %c0_i32_1 = arith.constant 0 : i32
    return %c0_i32, %c0_i32_0 : i32, i32
  }
  func.func @transform_5(%arg0: i32) -> (i32, i32) {
    %c0_i32 = arith.constant 0 : i32
    %c0_i32_0 = arith.constant 0 : i32
    %c0_i32_1 = arith.constant 0 : i32
    return %c0_i32, %c0_i32_0 : i32, i32
  }
  func.func @transform_6(%arg0: i32) -> (i32, i32) {
    %c0_i32 = arith.constant 0 : i32
    %c0_i32_0 = arith.constant 0 : i32
    %c0_i32_1 = arith.constant 0 : i32
    return %c0_i32, %c0_i32_0 : i32, i32
  }
  func.func @transform_7(%arg0: i32) -> (i32, i32) {
    %c0_i32 = arith.constant 0 : i32
    %c0_i32_0 = arith.constant 0 : i32
    %c0_i32_1 = arith.constant 0 : i32
    return %c0_i32, %c0_i32_0 : i32, i32
  }
}

</mosaic_0001>

<llo_original>
// kernel: tpu_custom_call.1
$region0: #{tpu_custom_call.1}
  #allocation0 [shape = 'u32[]', space=smem, size = 0x4, offset = 0x4, fixed_abs, tag = 'smem constant byte address 0x4 - core index']
  #allocation1 [shape = 'u32[144,128]{1,0:T(1,128)}', space=vmem, size = 0x12000, scoped, tag = 'internal scratch']
  #allocation2 [shape = 'f32[8,128]{1,0:T(8,128)}', space=vmem, size = 0x1000, scoped, tag = 'scratch operand']
  #allocation3 [shape = 'f32[8,128]{1,0:T(8,128)}', space=vmem, size = 0x1000, scoped, tag = 'scratch operand']
  #allocation4 [shape = 'f32[8,128]{1,0:T(8,128)}', space=vmem, size = 0x1000, scoped, tag = 'scratch operand']
  #allocation5 [shape = 'f32[8,128]{1,0:T(8,128)}', space=vmem, size = 0x1000, scoped, tag = 'scratch operand']
  #allocation6 [shape = 'f32[64,128]{1,0:T(8,128)}', space=vmem, size = 0x8000, scoped, tag = 'scratch operand']
  #allocation7 [shape = 'f32[64,512]{1,0:T(8,128)}', space=vmem, size = 0x20000, scoped, tag = 'scratch operand']
  %s0 = inlined_call_operand.hbm [shape: bf16[64,64], index: 0, kind: input, shape index: {}]
  %s1 = inlined_call_operand.hbm [shape: bf16[64,512], index: 1, kind: input, shape index: {}]
  %s2 = inlined_call_operand.hbm [shape: bf16[128,512], index: 2, kind: input, shape index: {}]
  %s3 = inlined_call_operand.vmem [shape: f32[1,512], index: 3, kind: input, shape index: {}]
  %s4 = inlined_call_operand.hbm [shape: bf16[128,512], index: 4, kind: input, shape index: {}]
  %s5 = inlined_call_operand.hbm [shape: bf16[128,512], index: 5, kind: input, shape index: {}]
  %s6 = inlined_call_operand.vmem [shape: f32[1,512], index: 6, kind: input, shape index: {}]
  %s7 = inlined_call_operand.hbm [shape: f32[8,128], index: 7, kind: output, shape index: {}]
  %s8 = sld [smem:[#allocation0]]
  $region66: #{tpu_custom_call.1} parent=0
    _
  %s10 = ssub.s32 1, %s8
  %s11 = scalar_select 0, %s10, %s8
  $region1: #{tpu_custom_call.1} parent=0
    #allocation8 [shape = 'u8[16384]{0}', space=vmem, size = 0x4000, scoped, tag = 'input window, operand 0, single buffered']
    #allocation9 [shape = 's32[1]{0}', space=sflag, size = 0x4, scoped, tag = 'scoped memory for tpu_custom_call.1']
    #allocation10 [shape = 's32[1]{0}', space=sflag, size = 0x4, scoped, tag = 'scoped memory for tpu_custom_call.1']
    #allocation11 [shape = 'u8[65536]{0}', space=vmem, size = 0x10000, scoped, tag = 'input window, operand 1, single buffered']
    #allocation12 [shape = 's32[1]{0}', space=sflag, size = 0x4, scoped, tag = 'scoped memory for tpu_custom_call.1']
    #allocation13 [shape = 'u8[131072]{0}', space=vmem, size = 0x20000, scoped, tag = 'input window, operand 2, single buffered']
    #allocation14 [shape = 'u8[131072]{0}', space=vmem, size = 0x20000, scoped, tag = 'input window, operand 4, single buffered']
    #allocation15 [shape = 's32[1]{0}', space=sflag, size = 0x4, scoped, tag = 'scoped memory for tpu_custom_call.1']
    #allocation16 [shape = 'u8[131072]{0}', space=vmem, size = 0x20000, scoped, tag = 'input window, operand 5, single buffered']
    #allocation17 [shape = 'u8[4096]{0}', space=vmem, size = 0x1000, scoped, tag = 'output window, operand 0, single buffered']
    %12 = vsyncpa [#allocation9], 0
    %13 = vsyncpa [#allocation12], 0
    %14 = vsyncpa [#allocation15], 0
    %15 = vsyncpa [#allocation10], 0
    // Predicated region
    $region2: #{tpu_custom_call.1} parent=1 // pred_check
      _
    $region3: #{tpu_custom_call.1} parent=1 // pred_check_branch
      %17 = sbr.rel (0) target = $region5
    $region4: #{tpu_custom_call.1} parent=1 // pred_region
      %s19 = ssub.s32 512, 512
      %20 = vsyncadd [#allocation9], %s19
      %s21 = sshll.u32 [#allocation8], 4
      %s22 = int_to_ptr.vmem [resolvable:$true] %s21
      %27 = dma.hbm_to_vmem [thread:$0]  %s0, 512, %s22, [#allocation9], 64, 64, 4
    $region5: #{tpu_custom_call.1} parent=1 // pred_fallthru
      _
    // Predicated region
    $region6: #{tpu_custom_call.1} parent=1 // pred_check
      _
    $region7: #{tpu_custom_call.1} parent=1 // pred_check_branch
      %29 = sbr.rel (0) target = $region9
    $region8: #{tpu_custom_call.1} parent=1 // pred_region
      %s31 = ssub.s32 2048, 2048
      %32 = vsyncadd [#allocation12], %s31
      %s33 = sshll.u32 [#allocation11], 4
      %s34 = int_to_ptr.vmem [resolvable:$true] %s33
      %39 = dma.hbm_to_vmem [thread:$0]  %s1, 2048, %s34, [#allocation12], 256, 256, 16
    $region9: #{tpu_custom_call.1} parent=1 // pred_fallthru
      _
    // Predicated region
    $region10: #{tpu_custom_call.1} parent=1 // pred_check
      _
    $region11: #{tpu_custom_call.1} parent=1 // pred_check_branch
      %41 = sbr.rel (0) target = $region13
    $region12: #{tpu_custom_call.1} parent=1 // pred_region
      %s43 = ssub.s32 4096, 4096
      %44 = vsyncadd [#allocation12], %s43
      %s45 = sshll.u32 [#allocation13], 4
      %s46 = int_to_ptr.vmem [resolvable:$true] %s45
      %51 = dma.hbm_to_vmem [thread:$0]  %s2, 4096, %s46, [#allocation12], 256, 256, 16
    $region13: #{tpu_custom_call.1} parent=1 // pred_fallthru
      _
    // Predicated region
    $region14: #{tpu_custom_call.1} parent=1 // pred_check
      _
    $region15: #{tpu_custom_call.1} parent=1 // pred_check_branch
      %53 = sbr.rel (0) target = $region17
    $region16: #{tpu_custom_call.1} parent=1 // pred_region
      _
    $region17: #{tpu_custom_call.1} parent=1 // pred_fallthru
      _
    // Predicated region
    $region18: #{tpu_custom_call.1} parent=1 // pred_check
      _
    $region19: #{tpu_custom_call.1} parent=1 // pred_check_branch
      %55 = sbr.rel (0) target = $region21
    $region20: #{tpu_custom_call.1} parent=1 // pred_region
      %s57 = ssub.s32 4096, 4096
      %58 = vsyncadd [#allocation15], %s57
      %s59 = sshll.u32 [#allocation14], 4
      %s60 = int_to_ptr.vmem [resolvable:$true] %s59
      %65 = dma.hbm_to_vmem [thread:$0]  %s4, 4096, %s60, [#allocation15], 256, 256, 16
    $region21: #{tpu_custom_call.1} parent=1 // pred_fallthru
      _
    // Predicated region
    $region22: #{tpu_custom_call.1} parent=1 // pred_check
      _
    $region23: #{tpu_custom_call.1} parent=1 // pred_check_branch
      %67 = sbr.rel (0) target = $region25
    $region24: #{tpu_custom_call.1} parent=1 // pred_region
      %s69 = ssub.s32 4096, 4096
      %70 = vsyncadd [#allocation15], %s69
      %s71 = sshll.u32 [#allocation16], 4
      %s72 = int_to_ptr.vmem [resolvable:$true] %s71
      %77 = dma.hbm_to_vmem [thread:$0]  %s5, 4096, %s72, [#allocation15], 256, 256, 16
    $region25: #{tpu_custom_call.1} parent=1 // pred_fallthru
      _
    // Predicated region
    $region26: #{tpu_custom_call.1} parent=1 // pred_check
      _
    $region27: #{tpu_custom_call.1} parent=1 // pred_check_branch
      %79 = sbr.rel (0) target = $region29
    $region28: #{tpu_custom_call.1} parent=1 // pred_region
      _
    $region29: #{tpu_custom_call.1} parent=1 // pred_fallthru
      _
    // Predicated region
    $region30: #{tpu_custom_call.1} parent=1 // pred_check
      _
    $region31: #{tpu_custom_call.1} parent=1 // pred_check_branch
      %81 = sbr.rel (0) target = $region33
    $region32: #{tpu_custom_call.1} parent=1 // pred_region
      %82 = dma.done [#allocation9], 512
    $region33: #{tpu_custom_call.1} parent=1 // pred_fallthru
      _
    // Predicated region
    $region34: #{tpu_custom_call.1} parent=1 // pred_check
      _
    $region35: #{tpu_custom_call.1} parent=1 // pred_check_branch
      %84 = sbr.rel (0) target = $region37
    $region36: #{tpu_custom_call.1} parent=1 // pred_region
      %85 = dma.done [#allocation12], 2048
    $region37: #{tpu_custom_call.1} parent=1 // pred_fallthru
      _
    // Predicated region
    $region38: #{tpu_custom_call.1} parent=1 // pred_check
      _
    $region39: #{tpu_custom_call.1} parent=1 // pred_check_branch
      %87 = sbr.rel (0) target = $region41
    $region40: #{tpu_custom_call.1} parent=1 // pred_region
      %88 = dma.done [#allocation12], 4096
    $region41: #{tpu_custom_call.1} parent=1 // pred_fallthru
      _
    // Predicated region
    $region42: #{tpu_custom_call.1} parent=1 // pred_check
      _
    $region43: #{tpu_custom_call.1} parent=1 // pred_check_branch
      %90 = sbr.rel (0) target = $region45
    $region44: #{tpu_custom_call.1} parent=1 // pred_region
      %91 = dma.done [#allocation15], 4096
    $region45: #{tpu_custom_call.1} parent=1 // pred_fallthru
      _
    // Predicated region
    $region46: #{tpu_custom_call.1} parent=1 // pred_check
      _
    $region47: #{tpu_custom_call.1} parent=1 // pred_check_branch
      %93 = sbr.rel (0) target = $region49
    $region48: #{tpu_custom_call.1} parent=1 // pred_region
      %94 = dma.done [#allocation15], 4096
    $region49: #{tpu_custom_call.1} parent=1 // pred_fallthru
      _
    %p96 = scmp.eq.s32.totalorder 0, 0
    // Predicated region
    $region50: #{tpu_custom_call.1} parent=1 // pred_check
      %p97 = pneg %p96
    $region51: #{tpu_custom_call.1} parent=1 // pred_check_branch
      %99 = sbr.rel (%p97) target = $region53
    $region52: #{tpu_custom_call.1} parent=1 // pred_region
      %100 = vst [vmem:[#allocation2] sm:$0xff] 0.0
      %101 = vst [vmem:[#allocation3] sm:$0xff] 0.0
      %102 = vst [vmem:[#allocation4] sm:$0xff] 0.0
      %103 = vst [vmem:[#allocation5] sm:$0xff] 0.0
    $region53: #{tpu_custom_call.1} parent=1 // pred_fallthru
      _
    %v104 = vld [vmem:[#allocation8] sm:$0xf]
    %v105 = vld [vmem:[#allocation8 + $0x4] sm:$0xf]
    %v106 = vld [vmem:[#allocation8 + $0x8] sm:$0xf]
    %v107 = vld [vmem:[#allocation8 + $0xc] sm:$0xf]
    %v108 = vld [vmem:[#allocation8 + $0x10] sm:$0xf]
    %v109 = vld [vmem:[#allocation8 + $0x14] sm:$0xf]
    %v110 = vld [vmem:[#allocation8 + $0x18] sm:$0xf]
    %v111 = vld [vmem:[#allocation8 + $0x1c] sm:$0xf]
    %v112 = vld [vmem:[#allocation11] sm:$0xff]
    %v113 = vld [vmem:[#allocation11 + $0x8] sm:$0xff]
    %v114 = vld [vmem:[#allocation11 + $0x10] sm:$0xff]
    %v115 = vld [vmem:[#allocation11 + $0x18] sm:$0xff]
    %v116 = vld [vmem:[#allocation11 + $0x20] sm:$0xff]
    %v117 = vld [vmem:[#allocation11 + $0x28] sm:$0xff]
    %v118 = vld [vmem:[#allocation11 + $0x30] sm:$0xff]
    %v119 = vld [vmem:[#allocation11 + $0x38] sm:$0xff]
    %v120 = vld [vmem:[#allocation11 + $0x40] sm:$0xff]
    %v121 = vld [vmem:[#allocation11 + $0x48] sm:$0xff]
    %v122 = vld [vmem:[#allocation11 + $0x50] sm:$0xff]
    %v123 = vld [vmem:[#allocation11 + $0x58] sm:$0xff]
    %v124 = vld [vmem:[#allocation11 + $0x60] sm:$0xff]
    %v125 = vld [vmem:[#allocation11 + $0x68] sm:$0xff]
    %v126 = vld [vmem:[#allocation11 + $0x70] sm:$0xff]
    %v127 = vld [vmem:[#allocation11 + $0x78] sm:$0xff]
    %v128 = vld [vmem:[%s3] sm:$0xf]
    %v130 = vlaneseq
    %v131 = vshrl.u32 %v130, 7
    %v132 = vsub.s32 0, %v131
    %v133 = vrot.slane %v128, %v132
    %v134 = vlaneseq
    %v135 = vshrl.u32 %v134, 7
    %v136 = vsub.s32 1, %v135
    %v137 = vrot.slane %v128, %v136
    %v138 = vlaneseq
    %v139 = vshrl.u32 %v138, 7
    %v140 = vsub.s32 2, %v139
    %v141 = vrot.slane %v128, %v140
    %v142 = vlaneseq
    %v143 = vshrl.u32 %v142, 7
    %v144 = vsub.s32 3, %v143
    %v145 = vrot.slane %v128, %v144
    %v158 = vunpack.c.l.b16 %v104
    %v159 = vunpack.c.l.b16 %v105
    %v160 = vunpack.c.l.b16 %v106
    %v161 = vunpack.c.l.b16 %v107
    %v162 = vunpack.c.l.b16 %v108
    %v163 = vunpack.c.l.b16 %v109
    %v164 = vunpack.c.l.b16 %v110
    %v165 = vunpack.c.l.b16 %v111
    %v166 = vpack.c.b16 %v159, %v158
    %v167 = vpack.c.b16 %v161, %v160
    %v168 = vpack.c.b16 %v163, %v162
    %v169 = vpack.c.b16 %v165, %v164
    %v186 = vunpack.c.l.b16 %v112
    %v187 = vunpack.c.h.b16 %v112
    %v188 = vunpack.c.l.b16 %v113
    %v189 = vunpack.c.h.b16 %v113
    %v190 = vunpack.c.l.b16 %v114
    %v191 = vunpack.c.h.b16 %v114
    %v192 = vunpack.c.l.b16 %v115
    %v193 = vunpack.c.h.b16 %v115
    %v194 = vunpack.c.l.b16 %v116
    %v195 = vunpack.c.h.b16 %v116
    %v196 = vunpack.c.l.b16 %v117
    %v197 = vunpack.c.h.b16 %v117
    %v198 = vunpack.c.l.b16 %v118
    %v199 = vunpack.c.h.b16 %v118
    %v200 = vunpack.c.l.b16 %v119
    %v201 = vunpack.c.h.b16 %v119
    %v202 = vunpack.c.l.b16 %v120
    %v203 = vunpack.c.h.b16 %v120
    %v204 = vunpack.c.l.b16 %v121
    %v205 = vunpack.c.h.b16 %v121
    %v206 = vunpack.c.l.b16 %v122
    %v207 = vunpack.c.h.b16 %v122
    %v208 = vunpack.c.l.b16 %v123
    %v209 = vunpack.c.h.b16 %v123
    %v210 = vunpack.c.l.b16 %v124
    %v211 = vunpack.c.h.b16 %v124
    %v212 = vunpack.c.l.b16 %v125
    %v213 = vunpack.c.h.b16 %v125
    %v214 = vunpack.c.l.b16 %v126
    %v215 = vunpack.c.h.b16 %v126
    %v216 = vunpack.c.l.b16 %v127
    %v217 = vunpack.c.h.b16 %v127
    %v218 = vpack.c.b16 %v190, %v186
    %v219 = vpack.c.b16 %v191, %v187
    %v220 = vpack.c.b16 %v192, %v188
    %v221 = vpack.c.b16 %v193, %v189
    %v222 = vpack.c.b16 %v198, %v194
    %v223 = vpack.c.b16 %v199, %v195
    %v224 = vpack.c.b16 %v200, %v196
    %v225 = vpack.c.b16 %v201, %v197
    %v226 = vpack.c.b16 %v206, %v202
    %v227 = vpack.c.b16 %v207, %v203
    %v228 = vpack.c.b16 %v208, %v204
    %v229 = vpack.c.b16 %v209, %v205
    %v230 = vpack.c.b16 %v214, %v210
    %v231 = vpack.c.b16 %v215, %v211
    %v232 = vpack.c.b16 %v216, %v212
    %v233 = vpack.c.b16 %v217, %v213
    %vm250 = vcmask 523264
    %v252 = vsel %vm250, %v166, 0
    %v255 = vsel %vm250, %v167, 0
    %v258 = vsel %vm250, %v168, 0
    %v261 = vsel %vm250, %v169, 0
    %263 = vmatprep.subr.bf16.mxu0 0
    %264 = vmatpush1.bf16.msra.mxu0 0
    %265 = vmatprep.subr.bf16.mxu0 0
    %266 = vmatpush1.bf16.msra.mxu0 0
    %267 = vmatprep.subr.bf16.mxu0 0
    %268 = vmatpush1.bf16.msra.mxu0 0
    %269 = vmatprep.subr.bf16.mxu0 0
    %270 = vmatpush1.bf16.msra.mxu0 0
    %271 = vmatprep.subr.bf16.mxu0 %v231
    %272 = vmatpush1.bf16.msra.mxu0 %v230
    %273 = vmatprep.subr.bf16.mxu0 %v227
    %274 = vmatpush1.bf16.msra.mxu0 %v226
    %275 = vmatprep.subr.bf16.mxu0 %v223
    %276 = vmatpush1.bf16.msra.mxu0 %v222
    %277 = vmatprep.subr.bf16.mxu0 %v219
    %278 = vmatpush1.bf16.msra.mxu0 %v218
    %279 = vmatprep.subr.bf16.mxu0 0
    %280 = vmatpush2.bf16.msra.mxu0 0
    %281 = vmatprep.subr.bf16.mxu0 0
    %282 = vmatpush2.bf16.msra.mxu0 0
    %283 = vmatprep.subr.bf16.mxu0 0
    %284 = vmatpush2.bf16.msra.mxu0 0
    %285 = vmatprep.subr.bf16.mxu0 0
    %286 = vmatpush2.bf16.msra.mxu0 0
    %287 = vmatprep.subr.bf16.mxu0 0
    %288 = vmatpush2.bf16.msra.mxu0 0
    %289 = vmatprep.subr.bf16.mxu0 0
    %290 = vmatpush2.bf16.msra.mxu0 0
    %291 = vmatprep.subr.bf16.mxu0 0
    %292 = vmatpush2.bf16.msra.mxu0 0
    %293 = vmatprep.subr.bf16.mxu0 0
    %294 = vmatpush2.bf16.msra.mxu0 0
    %295 = vmatprep.mubr.bf16.mxu0 0
    %296 = vmatmul.mubr.bf16.gmra.mxu0 %v252
    %v297 = vpop.f32.mrf.mxu0
    %v298 = vadd.f32 %v133, %v297
    %v299 = vpop.f32.mrf.mxu0
    %v300 = vadd.f32 %v137, %v299
    %v301 = vpop.f32.mrf.mxu0
    %v302 = vadd.f32 %v133, %v301
    %v303 = vpop.f32.mrf.mxu0
    %v304 = vadd.f32 %v137, %v303
    %305 = vmatprep.mubr.bf16.mxu0 0
    %306 = vmatmul.mubr.bf16.gmra.mxu0 %v255
    %v307 = vpop.f32.mrf.mxu0
    %v308 = vadd.f32 %v133, %v307
    %v309 = vpop.f32.mrf.mxu0
    %v310 = vadd.f32 %v137, %v309
    %v311 = vpop.f32.mrf.mxu0
    %v312 = vadd.f32 %v133, %v311
    %v313 = vpop.f32.mrf.mxu0
    %v314 = vadd.f32 %v137, %v313
    %315 = vmatprep.mubr.bf16.mxu0 0
    %316 = vmatmul.mubr.bf16.gmra.mxu0 %v258
    %v317 = vpop.f32.mrf.mxu0
    %v318 = vadd.f32 %v133, %v317
    %v319 = vpop.f32.mrf.mxu0
    %v320 = vadd.f32 %v137, %v319
    %v321 = vpop.f32.mrf.mxu0
    %v322 = vadd.f32 %v133, %v321
    %v323 = vpop.f32.mrf.mxu0
    %v324 = vadd.f32 %v137, %v323
    %325 = vmatprep.mubr.bf16.mxu0 0
    %326 = vmatmul.mubr.bf16.gmra.mxu0 %v261
    %v327 = vpop.f32.mrf.mxu0
    %v328 = vadd.f32 %v133, %v327
    %v329 = vpop.f32.mrf.mxu0
    %v330 = vadd.f32 %v137, %v329
    %v331 = vpop.f32.mrf.mxu0
    %v332 = vadd.f32 %v133, %v331
    %v333 = vpop.f32.mrf.mxu0
    %v334 = vadd.f32 %v137, %v333
    %335 = vdwg.mxu0
    %336 = vmatprep.subr.bf16.mxu0 0
    %337 = vmatpush1.bf16.msra.mxu0 0
    %338 = vmatprep.subr.bf16.mxu0 0
    %339 = vmatpush1.bf16.msra.mxu0 0
    %340 = vmatprep.subr.bf16.mxu0 0
    %341 = vmatpush1.bf16.msra.mxu0 0
    %342 = vmatprep.subr.bf16.mxu0 0
    %343 = vmatpush1.bf16.msra.mxu0 0
    %344 = vmatprep.subr.bf16.mxu0 %v233
    %345 = vmatpush1.bf16.msra.mxu0 %v232
    %346 = vmatprep.subr.bf16.mxu0 %v229
    %347 = vmatpush1.bf16.msra.mxu0 %v228
    %348 = vmatprep.subr.bf16.mxu0 %v225
    %349 = vmatpush1.bf16.msra.mxu0 %v224
    %350 = vmatprep.subr.bf16.mxu0 %v221
    %351 = vmatpush1.bf16.msra.mxu0 %v220
    %352 = vmatprep.subr.bf16.mxu0 0
    %353 = vmatpush2.bf16.msra.mxu0 0
    %354 = vmatprep.subr.bf16.mxu0 0
    %355 = vmatpush2.bf16.msra.mxu0 0
    %356 = vmatprep.subr.bf16.mxu0 0
    %357 = vmatpush2.bf16.msra.mxu0 0
    %358 = vmatprep.subr.bf16.mxu0 0
    %359 = vmatpush2.bf16.msra.mxu0 0
    %360 = vmatprep.subr.bf16.mxu0 0
    %361 = vmatpush2.bf16.msra.mxu0 0
    %362 = vmatprep.subr.bf16.mxu0 0
    %363 = vmatpush2.bf16.msra.mxu0 0
    %364 = vmatprep.subr.bf16.mxu0 0
    %365 = vmatpush2.bf16.msra.mxu0 0
    %366 = vmatprep.subr.bf16.mxu0 0
    %367 = vmatpush2.bf16.msra.mxu0 0
    %368 = vmatprep.mubr.bf16.mxu0 0
    %369 = vmatmul.mubr.bf16.gmra.mxu0 %v252
    %v370 = vpop.f32.mrf.mxu0
    %v371 = vadd.f32 %v141, %v370
    %v372 = vpop.f32.mrf.mxu0
    %v373 = vadd.f32 %v145, %v372
    %v374 = vpop.f32.mrf.mxu0
    %v375 = vadd.f32 %v141, %v374
    %v376 = vpop.f32.mrf.mxu0
    %v377 = vadd.f32 %v145, %v376
    %378 = vmatprep.mubr.bf16.mxu0 0
    %379 = vmatmul.mubr.bf16.gmra.mxu0 %v255
    %v380 = vpop.f32.mrf.mxu0
    %v381 = vadd.f32 %v141, %v380
    %v382 = vpop.f32.mrf.mxu0
    %v383 = vadd.f32 %v145, %v382
    %v384 = vpop.f32.mrf.mxu0
    %v385 = vadd.f32 %v141, %v384
    %v386 = vpop.f32.mrf.mxu0
    %v387 = vadd.f32 %v145, %v386
    %388 = vmatprep.mubr.bf16.mxu0 0
    %389 = vmatmul.mubr.bf16.gmra.mxu0 %v258
    %v390 = vpop.f32.mrf.mxu0
    %v391 = vadd.f32 %v141, %v390
    %v392 = vpop.f32.mrf.mxu0
    %v393 = vadd.f32 %v145, %v392
    %v394 = vpop.f32.mrf.mxu0
    %v395 = vadd.f32 %v141, %v394
    %v396 = vpop.f32.mrf.mxu0
    %v397 = vadd.f32 %v145, %v396
    %398 = vmatprep.mubr.bf16.mxu0 0
    %399 = vmatmul.mubr.bf16.gmra.mxu0 %v261
    %v400 = vpop.f32.mrf.mxu0
    %v401 = vadd.f32 %v141, %v400
    %v402 = vpop.f32.mrf.mxu0
    %v403 = vadd.f32 %v145, %v402
    %v404 = vpop.f32.mrf.mxu0
    %v405 = vadd.f32 %v141, %v404
    %v406 = vpop.f32.mrf.mxu0
    %v407 = vadd.f32 %v145, %v406
    %408 = vdwg.mxu0
    %409 = vst [vmem:[#allocation7] sm:$0xff] %v298
    %410 = vst [vmem:[#allocation7 + $0x8] sm:$0xff] %v300
    %411 = vst [vmem:[#allocation7 + $0x10] sm:$0xff] %v371
    %412 = vst [vmem:[#allocation7 + $0x18] sm:$0xff] %v373
    %413 = vst [vmem:[#allocation7 + $0x20] sm:$0xff] %v302
    %414 = vst [vmem:[#allocation7 + $0x28] sm:$0xff] %v304
    %415 = vst [vmem:[#allocation7 + $0x30] sm:$0xff] %v375
    %416 = vst [vmem:[#allocation7 + $0x38] sm:$0xff] %v377
    %417 = vst [vmem:[#allocation7 + $0x40] sm:$0xff] %v308
    %418 = vst [vmem:[#allocation7 + $0x48] sm:$0xff] %v310
    %419 = vst [vmem:[#allocation7 + $0x50] sm:$0xff] %v381
    %420 = vst [vmem:[#allocation7 + $0x58] sm:$0xff] %v383
    %421 = vst [vmem:[#allocation7 + $0x60] sm:$0xff] %v312
    %422 = vst [vmem:[#allocation7 + $0x68] sm:$0xff] %v314
    %423 = vst [vmem:[#allocation7 + $0x70] sm:$0xff] %v385
    %424 = vst [vmem:[#allocation7 + $0x78] sm:$0xff] %v387
    %425 = vst [vmem:[#allocation7 + $0x80] sm:$0xff] %v318
    %426 = vst [vmem:[#allocation7 + $0x88] sm:$0xff] %v320
    %427 = vst [vmem:[#allocation7 + $0x90] sm:$0xff] %v391
    %428 = vst [vmem:[#allocation7 + $0x98] sm:$0xff] %v393
    %429 = vst [vmem:[#allocation7 + $0xa0] sm:$0xff] %v322
    %430 = vst [vmem:[#allocation7 + $0xa8] sm:$0xff] %v324
    %431 = vst [vmem:[#allocation7 + $0xb0] sm:$0xff] %v395
    %432 = vst [vmem:[#allocation7 + $0xb8] sm:$0xff] %v397
    %433 = vst [vmem:[#allocation7 + $0xc0] sm:$0xff] %v328
    %434 = vst [vmem:[#allocation7 + $0xc8] sm:$0xff] %v330
    %435 = vst [vmem:[#allocation7 + $0xd0] sm:$0xff] %v401
    %436 = vst [vmem:[#allocation7 + $0xd8] sm:$0xff] %v403
    %437 = vst [vmem:[#allocation7 + $0xe0] sm:$0xff] %v332
    %438 = vst [vmem:[#allocation7 + $0xe8] sm:$0xff] %v334
    %439 = vst [vmem:[#allocation7 + $0xf0] sm:$0xff] %v405
    %440 = vst [vmem:[#allocation7 + $0xf8] sm:$0xff] %v407
    %v441 = vld [vmem:[#allocation2] sm:$0xff]
    %v442 = vld [vmem:[#allocation3] sm:$0xff]
    %s443 = smul.u32 0, 4
    %s444 = smul.addr %s443, 8
    %s445 = scalar_lea.vmem [#allocation7], %s444
    %v446 = vld [vmem:[%s445] sm:$0xff]
    %v447 = vld [vmem:[%s445 + $0x8] sm:$0xff]
    %v448 = vld [vmem:[%s445 + $0x10] sm:$0xff]
    %v449 = vld [vmem:[%s445 + $0x18] sm:$0xff]
    %v450 = vpack.c.bf16 %v441, %v441
    %v451 = vld [vmem:[#allocation13] sm:$0xff]
    %v452 = vld [vmem:[#allocation13 + $0x8] sm:$0xff]
    %v453 = vld [vmem:[#allocation13 + $0x10] sm:$0xff]
    %v454 = vld [vmem:[#allocation13 + $0x18] sm:$0xff]
    %v455 = vld [vmem:[#allocation13 + $0x20] sm:$0xff]
    %v456 = vld [vmem:[#allocation13 + $0x28] sm:$0xff]
    %v457 = vld [vmem:[#allocation13 + $0x30] sm:$0xff]
    %v458 = vld [vmem:[#allocation13 + $0x38] sm:$0xff]
    %v459 = vld [vmem:[#allocation13 + $0x40] sm:$0xff]
    %v460 = vld [vmem:[#allocation13 + $0x48] sm:$0xff]
    %v461 = vld [vmem:[#allocation13 + $0x50] sm:$0xff]
    %v462 = vld [vmem:[#allocation13 + $0x58] sm:$0xff]
    %v463 = vld [vmem:[#allocation13 + $0x60] sm:$0xff]
    %v464 = vld [vmem:[#allocation13 + $0x68] sm:$0xff]
    %v465 = vld [vmem:[#allocation13 + $0x70] sm:$0xff]
    %v466 = vld [vmem:[#allocation13 + $0x78] sm:$0xff]
    %v467 = vld [vmem:[#allocation13 + $0x80] sm:$0xff]
    %v468 = vld [vmem:[#allocation13 + $0x88] sm:$0xff]
    %v469 = vld [vmem:[#allocation13 + $0x90] sm:$0xff]
    %v470 = vld [vmem:[#allocation13 + $0x98] sm:$0xff]
    %v471 = vld [vmem:[#allocation13 + $0xa0] sm:$0xff]
    %v472 = vld [vmem:[#allocation13 + $0xa8] sm:$0xff]
    %v473 = vld [vmem:[#allocation13 + $0xb0] sm:$0xff]
    %v474 = vld [vmem:[#allocation13 + $0xb8] sm:$0xff]
    %v475 = vld [vmem:[#allocation13 + $0xc0] sm:$0xff]
    %v476 = vld [vmem:[#allocation13 + $0xc8] sm:$0xff]
    %v477 = vld [vmem:[#allocation13 + $0xd0] sm:$0xff]
    %v478 = vld [vmem:[#allocation13 + $0xd8] sm:$0xff]
    %v479 = vld [vmem:[#allocation13 + $0xe0] sm:$0xff]
    %v480 = vld [vmem:[#allocation13 + $0xe8] sm:$0xff]
    %v481 = vld [vmem:[#allocation13 + $0xf0] sm:$0xff]
    %v482 = vld [vmem:[#allocation13 + $0xf8] sm:$0xff]
    %v515 = vunpack.c.l.b16 %v451
    %v516 = vunpack.c.h.b16 %v451
    %v517 = vunpack.c.l.b16 %v452
    %v518 = vunpack.c.h.b16 %v452
    %v519 = vunpack.c.l.b16 %v453
    %v520 = vunpack.c.h.b16 %v453
    %v521 = vunpack.c.l.b16 %v454
    %v522 = vunpack.c.h.b16 %v454
    %v523 = vunpack.c.l.b16 %v455
    %v524 = vunpack.c.h.b16 %v455
    %v525 = vunpack.c.l.b16 %v456
    %v526 = vunpack.c.h.b16 %v456
    %v527 = vunpack.c.l.b16 %v457
    %v528 = vunpack.c.h.b16 %v457
    %v529 = vunpack.c.l.b16 %v458
    %v530 = vunpack.c.h.b16 %v458
    %v531 = vunpack.c.l.b16 %v459
    %v532 = vunpack.c.h.b16 %v459
    %v533 = vunpack.c.l.b16 %v460
    %v534 = vunpack.c.h.b16 %v460
    %v535 = vunpack.c.l.b16 %v461
    %v536 = vunpack.c.h.b16 %v461
    %v537 = vunpack.c.l.b16 %v462
    %v538 = vunpack.c.h.b16 %v462
    %v539 = vunpack.c.l.b16 %v463
    %v540 = vunpack.c.h.b16 %v463
    %v541 = vunpack.c.l.b16 %v464
    %v542 = vunpack.c.h.b16 %v464
    %v543 = vunpack.c.l.b16 %v465
    %v544 = vunpack.c.h.b16 %v465
    %v545 = vunpack.c.l.b16 %v466
    %v546 = vunpack.c.h.b16 %v466
    %v547 = vunpack.c.l.b16 %v467
    %v548 = vunpack.c.h.b16 %v467
    %v549 = vunpack.c.l.b16 %v468
    %v550 = vunpack.c.h.b16 %v468
    %v551 = vunpack.c.l.b16 %v469
    %v552 = vunpack.c.h.b16 %v469
    %v553 = vunpack.c.l.b16 %v470
    %v554 = vunpack.c.h.b16 %v470
    %v555 = vunpack.c.l.b16 %v471
    %v556 = vunpack.c.h.b16 %v471
    %v557 = vunpack.c.l.b16 %v472
    %v558 = vunpack.c.h.b16 %v472
    %v559 = vunpack.c.l.b16 %v473
    %v560 = vunpack.c.h.b16 %v473
    %v561 = vunpack.c.l.b16 %v474
    %v562 = vunpack.c.h.b16 %v474
    %v563 = vunpack.c.l.b16 %v475
    %v564 = vunpack.c.h.b16 %v475
    %v565 = vunpack.c.l.b16 %v476
    %v566 = vunpack.c.h.b16 %v476
    %v567 = vunpack.c.l.b16 %v477
    %v568 = vunpack.c.h.b16 %v477
    %v569 = vunpack.c.l.b16 %v478
    %v570 = vunpack.c.h.b16 %v478
    %v571 = vunpack.c.l.b16 %v479
    %v572 = vunpack.c.h.b16 %v479
    %v573 = vunpack.c.l.b16 %v480
    %v574 = vunpack.c.h.b16 %v480
    %v575 = vunpack.c.l.b16 %v481
    %v576 = vunpack.c.h.b16 %v481
    %v577 = vunpack.c.l.b16 %v482
    %v578 = vunpack.c.h.b16 %v482
    %v579 = vpack.c.b16 %v519, %v515
    %v580 = vpack.c.b16 %v520, %v516
    %v581 = vpack.c.b16 %v521, %v517
    %v582 = vpack.c.b16 %v522, %v518
    %v583 = vpack.c.b16 %v527, %v523
    %v584 = vpack.c.b16 %v528, %v524
    %v585 = vpack.c.b16 %v529, %v525
    %v586 = vpack.c.b16 %v530, %v526
    %v587 = vpack.c.b16 %v535, %v531
    %v588 = vpack.c.b16 %v536, %v532
    %v589 = vpack.c.b16 %v537, %v533
    %v590 = vpack.c.b16 %v538, %v534
    %v591 = vpack.c.b16 %v543, %v539
    %v592 = vpack.c.b16 %v544, %v540
    %v593 = vpack.c.b16 %v545, %v541
    %v594 = vpack.c.b16 %v546, %v542
    %v595 = vpack.c.b16 %v551, %v547
    %v596 = vpack.c.b16 %v552, %v548
    %v597 = vpack.c.b16 %v553, %v549
    %v598 = vpack.c.b16 %v554, %v550
    %v599 = vpack.c.b16 %v559, %v555
    %v600 = vpack.c.b16 %v560, %v556
    %v601 = vpack.c.b16 %v561, %v557
    %v602 = vpack.c.b16 %v562, %v558
    %v603 = vpack.c.b16 %v567, %v563
    %v604 = vpack.c.b16 %v568, %v564
    %v605 = vpack.c.b16 %v569, %v565
    %v606 = vpack.c.b16 %v570, %v566
    %v607 = vpack.c.b16 %v575, %v571
    %v608 = vpack.c.b16 %v576, %v572
    %v609 = vpack.c.b16 %v577, %v573
    %v610 = vpack.c.b16 %v578, %v574
    %643 = vmatprep.subr.bf16.mxu0 %v608
    %644 = vmatpush1.bf16.msra.mxu0 %v607
    %645 = vmatprep.subr.bf16.mxu0 %v604
    %646 = vmatpush1.bf16.msra.mxu0 %v603
    %647 = vmatprep.subr.bf16.mxu0 %v600
    %648 = vmatpush1.bf16.msra.mxu0 %v599
    %649 = vmatprep.subr.bf16.mxu0 %v596
    %650 = vmatpush1.bf16.msra.mxu0 %v595
    %651 = vmatprep.subr.bf16.mxu0 %v592
    %652 = vmatpush1.bf16.msra.mxu0 %v591
    %653 = vmatprep.subr.bf16.mxu0 %v588
    %654 = vmatpush1.bf16.msra.mxu0 %v587
    %655 = vmatprep.subr.bf16.mxu0 %v584
    %656 = vmatpush1.bf16.msra.mxu0 %v583
    %657 = vmatprep.subr.bf16.mxu0 %v580
    %658 = vmatpush1.bf16.msra.mxu0 %v579
    %659 = vmatprep.subr.bf16.mxu0 0
    %660 = vmatpush2.bf16.msra.mxu0 0
    %661 = vmatprep.subr.bf16.mxu0 0
    %662 = vmatpush2.bf16.msra.mxu0 0
    %663 = vmatprep.subr.bf16.mxu0 0
    %664 = vmatpush2.bf16.msra.mxu0 0
    %665 = vmatprep.subr.bf16.mxu0 0
    %666 = vmatpush2.bf16.msra.mxu0 0
    %667 = vmatprep.subr.bf16.mxu0 0
    %668 = vmatpush2.bf16.msra.mxu0 0
    %669 = vmatprep.subr.bf16.mxu0 0
    %670 = vmatpush2.bf16.msra.mxu0 0
    %671 = vmatprep.subr.bf16.mxu0 0
    %672 = vmatpush2.bf16.msra.mxu0 0
    %673 = vmatprep.subr.bf16.mxu0 0
    %674 = vmatpush2.bf16.msra.mxu0 0
    %675 = vmatprep.mubr.bf16.mxu0 0
    %676 = vmatmul.mubr.bf16.gmra.mxu0 %v450
    %v677 = vpop.f32.mrf.mxu0
    %v678 = vadd.f32 0.0, %v677
    %v679 = vpop.f32.mrf.mxu0
    %v680 = vadd.f32 0.0, %v679
    %v681 = vpop.f32.mrf.mxu0
    %v682 = vpop.f32.mrf.mxu0
    %683 = vdwg.mxu0
    %684 = vmatprep.subr.bf16.mxu0 %v610
    %685 = vmatpush1.bf16.msra.mxu0 %v609
    %686 = vmatprep.subr.bf16.mxu0 %v606
    %687 = vmatpush1.bf16.msra.mxu0 %v605
    %688 = vmatprep.subr.bf16.mxu0 %v602
    %689 = vmatpush1.bf16.msra.mxu0 %v601
    %690 = vmatprep.subr.bf16.mxu0 %v598
    %691 = vmatpush1.bf16.msra.mxu0 %v597
    %692 = vmatprep.subr.bf16.mxu0 %v594
    %693 = vmatpush1.bf16.msra.mxu0 %v593
    %694 = vmatprep.subr.bf16.mxu0 %v590
    %695 = vmatpush1.bf16.msra.mxu0 %v589
    %696 = vmatprep.subr.bf16.mxu0 %v586
    %697 = vmatpush1.bf16.msra.mxu0 %v585
    %698 = vmatprep.subr.bf16.mxu0 %v582
    %699 = vmatpush1.bf16.msra.mxu0 %v581
    %700 = vmatprep.subr.bf16.mxu0 0
    %701 = vmatpush2.bf16.msra.mxu0 0
    %702 = vmatprep.subr.bf16.mxu0 0
    %703 = vmatpush2.bf16.msra.mxu0 0
    %704 = vmatprep.subr.bf16.mxu0 0
    %705 = vmatpush2.bf16.msra.mxu0 0
    %706 = vmatprep.subr.bf16.mxu0 0
    %707 = vmatpush2.bf16.msra.mxu0 0
    %708 = vmatprep.subr.bf16.mxu0 0
    %709 = vmatpush2.bf16.msra.mxu0 0
    %710 = vmatprep.subr.bf16.mxu0 0
    %711 = vmatpush2.bf16.msra.mxu0 0
    %712 = vmatprep.subr.bf16.mxu0 0
    %713 = vmatpush2.bf16.msra.mxu0 0
    %714 = vmatprep.subr.bf16.mxu0 0
    %715 = vmatpush2.bf16.msra.mxu0 0
    %716 = vmatprep.mubr.bf16.mxu0 0
    %717 = vmatmul.mubr.bf16.gmra.mxu0 %v450
    %v718 = vpop.f32.mrf.mxu0
    %v719 = vadd.f32 0.0, %v718
    %v720 = vpop.f32.mrf.mxu0
    %v721 = vadd.f32 0.0, %v720
    %v722 = vpop.f32.mrf.mxu0
    %v723 = vpop.f32.mrf.mxu0
    %724 = vdwg.mxu0
    %v725 = vadd.f32 %v446, %v678
    %v726 = vadd.f32 %v447, %v680
    %v727 = vadd.f32 %v448, %v719
    %v728 = vadd.f32 %v449, %v721
    %v729 = vtanh.pop %v725
    %v730 = vtanh.pop %v726
    %v731 = vtanh.pop %v727
    %v732 = vtanh.pop %v728
    %v733 = vmul.f32 %v729, 0.5
    %v734 = vadd.f32 %v733, 0.5
    %v735 = vmul.f32 %v730, 0.5
    %v736 = vadd.f32 %v735, 0.5
    %v737 = vmul.f32 %v732, 0.5
    %v738 = vadd.f32 %v737, 0.5
    %v739 = vmul.f32 %v736, %v442
    %v740 = vmul.f32 %v734, %v731
    %v741 = vadd.f32 %v739, %v740
    %v742 = vtanh.pop %v741
    %v743 = vmul.f32 %v738, %v742
    %744 = vst [vmem:[#allocation6] sm:$0xff] %v743
    %s745 = smul.u32 1, 4
    %s746 = smul.addr %s745, 8
    %s747 = scalar_lea.vmem [#allocation7], %s746
    %v748 = vld [vmem:[%s747] sm:$0xff]
    %v749 = vld [vmem:[%s747 + $0x8] sm:$0xff]
    %v750 = vld [vmem:[%s747 + $0x10] sm:$0xff]
    %v751 = vld [vmem:[%s747 + $0x18] sm:$0xff]
    %v752 = vpack.c.bf16 %v743, %v743
    %v753 = vld [vmem:[#allocation13] sm:$0xff]
    %v754 = vld [vmem:[#allocation13 + $0x8] sm:$0xff]
    %v755 = vld [vmem:[#allocation13 + $0x10] sm:$0xff]
    %v756 = vld [vmem:[#allocation13 + $0x18] sm:$0xff]
    %v757 = vld [vmem:[#allocation13 + $0x20] sm:$0xff]
    %v758 = vld [vmem:[#allocation13 + $0x28] sm:$0xff]
    %v759 = vld [vmem:[#allocation13 + $0x30] sm:$0xff]
    %v760 = vld [vmem:[#allocation13 + $0x38] sm:$0xff]
    %v761 = vld [vmem:[#allocation13 + $0x40] sm:$0xff]
    %v762 = vld [vmem:[#allocation13 + $0x48] sm:$0xff]
    %v763 = vld [vmem:[#allocation13 + $0x50] sm:$0xff]
    %v764 = vld [vmem:[#allocation13 + $0x58] sm:$0xff]
    %v765 = vld [vmem:[#allocation13 + $0x60] sm:$0xff]
    %v766 = vld [vmem:[#allocation13 + $0x68] sm:$0xff]
    %v767 = vld [vmem:[#allocation13 + $0x70] sm:$0xff]
    %v768 = vld [vmem:[#allocation13 + $0x78] sm:$0xff]
    %v769 = vld [vmem:[#allocation13 + $0x80] sm:$0xff]
    %v770 = vld [vmem:[#allocation13 + $0x88] sm:$0xff]
    %v771 = vld [vmem:[#allocation13 + $0x90] sm:$0xff]
    %v772 = vld [vmem:[#allocation13 + $0x98] sm:$0xff]
    %v773 = vld [vmem:[#allocation13 + $0xa0] sm:$0xff]
    %v774 = vld [vmem:[#allocation13 + $0xa8] sm:$0xff]
    %v775 = vld [vmem:[#allocation13 + $0xb0] sm:$0xff]
    %v776 = vld [vmem:[#allocation13 + $0xb8] sm:$0xff]
    %v777 = vld [vmem:[#allocation13 + $0xc0] sm:$0xff]
    %v778 = vld [vmem:[#allocation13 + $0xc8] sm:$0xff]
    %v779 = vld [vmem:[#allocation13 + $0xd0] sm:$0xff]
    %v780 = vld [vmem:[#allocation13 + $0xd8] sm:$0xff]
    %v781 = vld [vmem:[#allocation13 + $0xe0] sm:$0xff]
    %v782 = vld [vmem:[#allocation13 + $0xe8] sm:$0xff]
    %v783 = vld [vmem:[#allocation13 + $0xf0] sm:$0xff]
    %v784 = vld [vmem:[#allocation13 + $0xf8] sm:$0xff]
    %v817 = vunpack.c.l.b16 %v753
    %v818 = vunpack.c.h.b16 %v753
    %v819 = vunpack.c.l.b16 %v754
    %v820 = vunpack.c.h.b16 %v754
    %v821 = vunpack.c.l.b16 %v755
    %v822 = vunpack.c.h.b16 %v755
    %v823 = vunpack.c.l.b16 %v756
    %v824 = vunpack.c.h.b16 %v756
    %v825 = vunpack.c.l.b16 %v757
    %v826 = vunpack.c.h.b16 %v757
    %v827 = vunpack.c.l.b16 %v758
    %v828 = vunpack.c.h.b16 %v758
    %v829 = vunpack.c.l.b16 %v759
    %v830 = vunpack.c.h.b16 %v759
    %v831 = vunpack.c.l.b16 %v760
    %v832 = vunpack.c.h.b16 %v760
    %v833 = vunpack.c.l.b16 %v761
    %v834 = vunpack.c.h.b16 %v761
    %v835 = vunpack.c.l.b16 %v762
    %v836 = vunpack.c.h.b16 %v762
    %v837 = vunpack.c.l.b16 %v763
    %v838 = vunpack.c.h.b16 %v763
    %v839 = vunpack.c.l.b16 %v764
    %v840 = vunpack.c.h.b16 %v764
    %v841 = vunpack.c.l.b16 %v765
    %v842 = vunpack.c.h.b16 %v765
    %v843 = vunpack.c.l.b16 %v766
    %v844 = vunpack.c.h.b16 %v766
    %v845 = vunpack.c.l.b16 %v767
    %v846 = vunpack.c.h.b16 %v767
    %v847 = vunpack.c.l.b16 %v768
    %v848 = vunpack.c.h.b16 %v768
    %v849 = vunpack.c.l.b16 %v769
    %v850 = vunpack.c.h.b16 %v769
    %v851 = vunpack.c.l.b16 %v770
    %v852 = vunpack.c.h.b16 %v770
    %v853 = vunpack.c.l.b16 %v771
    %v854 = vunpack.c.h.b16 %v771
    %v855 = vunpack.c.l.b16 %v772
    %v856 = vunpack.c.h.b16 %v772
    %v857 = vunpack.c.l.b16 %v773
    %v858 = vunpack.c.h.b16 %v773
    %v859 = vunpack.c.l.b16 %v774
    %v860 = vunpack.c.h.b16 %v774
    %v861 = vunpack.c.l.b16 %v775
    %v862 = vunpack.c.h.b16 %v775
    %v863 = vunpack.c.l.b16 %v776
    %v864 = vunpack.c.h.b16 %v776
    %v865 = vunpack.c.l.b16 %v777
    %v866 = vunpack.c.h.b16 %v777
    %v867 = vunpack.c.l.b16 %v778
    %v868 = vunpack.c.h.b16 %v778
    %v869 = vunpack.c.l.b16 %v779
    %v870 = vunpack.c.h.b16 %v779
    %v871 = vunpack.c.l.b16 %v780
    %v872 = vunpack.c.h.b16 %v780
    %v873 = vunpack.c.l.b16 %v781
    %v874 = vunpack.c.h.b16 %v781
    %v875 = vunpack.c.l.b16 %v782
    %v876 = vunpack.c.h.b16 %v782
    %v877 = vunpack.c.l.b16 %v783
    %v878 = vunpack.c.h.b16 %v783
    %v879 = vunpack.c.l.b16 %v784
    %v880 = vunpack.c.h.b16 %v784
    %v881 = vpack.c.b16 %v821, %v817
    %v882 = vpack.c.b16 %v822, %v818
    %v883 = vpack.c.b16 %v823, %v819
    %v884 = vpack.c.b16 %v824, %v820
    %v885 = vpack.c.b16 %v829, %v825
    %v886 = vpack.c.b16 %v830, %v826
    %v887 = vpack.c.b16 %v831, %v827
    %v888 = vpack.c.b16 %v832, %v828
    %v889 = vpack.c.b16 %v837, %v833
    %v890 = vpack.c.b16 %v838, %v834
    %v891 = vpack.c.b16 %v839, %v835
    %v892 = vpack.c.b16 %v840, %v836
    %v893 = vpack.c.b16 %v845, %v841
    %v894 = vpack.c.b16 %v846, %v842
    %v895 = vpack.c.b16 %v847, %v843
    %v896 = vpack.c.b16 %v848, %v844
    %v897 = vpack.c.b16 %v853, %v849
    %v898 = vpack.c.b16 %v854, %v850
    %v899 = vpack.c.b16 %v855, %v851
    %v900 = vpack.c.b16 %v856, %v852
    %v901 = vpack.c.b16 %v861, %v857
    %v902 = vpack.c.b16 %v862, %v858
    %v903 = vpack.c.b16 %v863, %v859
    %v904 = vpack.c.b16 %v864, %v860
    %v905 = vpack.c.b16 %v869, %v865
    %v906 = vpack.c.b16 %v870, %v866
    %v907 = vpack.c.b16 %v871, %v867
    %v908 = vpack.c.b16 %v872, %v868
    %v909 = vpack.c.b16 %v877, %v873
    %v910 = vpack.c.b16 %v878, %v874
    %v911 = vpack.c.b16 %v879, %v875
    %v912 = vpack.c.b16 %v880, %v876
    %945 = vmatprep.subr.bf16.mxu0 %v910
    %946 = vmatpush1.bf16.msra.mxu0 %v909
    %947 = vmatprep.subr.bf16.mxu0 %v906
    %948 = vmatpush1.bf16.msra.mxu0 %v905
    %949 = vmatprep.subr.bf16.mxu0 %v902
    %950 = vmatpush1.bf16.msra.mxu0 %v901
    %951 = vmatprep.subr.bf16.mxu0 %v898
    %952 = vmatpush1.bf16.msra.mxu0 %v897
    %953 = vmatprep.subr.bf16.mxu0 %v894
    %954 = vmatpush1.bf16.msra.mxu0 %v893
    %955 = vmatprep.subr.bf16.mxu0 %v890
    %956 = vmatpush1.bf16.msra.mxu0 %v889
    %957 = vmatprep.subr.bf16.mxu0 %v886
    %958 = vmatpush1.bf16.msra.mxu0 %v885
    %959 = vmatprep.subr.bf16.mxu0 %v882
    %960 = vmatpush1.bf16.msra.mxu0 %v881
    %961 = vmatprep.subr.bf16.mxu0 0
    %962 = vmatpush2.bf16.msra.mxu0 0
    %963 = vmatprep.subr.bf16.mxu0 0
    %964 = vmatpush2.bf16.msra.mxu0 0
    %965 = vmatprep.subr.bf16.mxu0 0
    %966 = vmatpush2.bf16.msra.mxu0 0
    %967 = vmatprep.subr.bf16.mxu0 0
    %968 = vmatpush2.bf16.msra.mxu0 0
    %969 = vmatprep.subr.bf16.mxu0 0
    %970 = vmatpush2.bf16.msra.mxu0 0
    %971 = vmatprep.subr.bf16.mxu0 0
    %972 = vmatpush2.bf16.msra.mxu0 0
    %973 = vmatprep.subr.bf16.mxu0 0
    %974 = vmatpush2.bf16.msra.mxu0 0
    %975 = vmatprep.subr.bf16.mxu0 0
    %976 = vmatpush2.bf16.msra.mxu0 0
    %977 = vmatprep.mubr.bf16.mxu0 0
    %978 = vmatmul.mubr.bf16.gmra.mxu0 %v752
    %v979 = vpop.f32.mrf.mxu0
    %v980 = vadd.f32 0.0, %v979
    %v981 = vpop.f32.mrf.mxu0
    %v982 = vadd.f32 0.0, %v981
    %v983 = vpop.f32.mrf.mxu0
    %v984 = vpop.f32.mrf.mxu0
    %985 = vdwg.mxu0
    %986 = vmatprep.subr.bf16.mxu0 %v912
    %987 = vmatpush1.bf16.msra.mxu0 %v911
    %988 = vmatprep.subr.bf16.mxu0 %v908
    %989 = vmatpush1.bf16.msra.mxu0 %v907
    %990 = vmatprep.subr.bf16.mxu0 %v904
    %991 = vmatpush1.bf16.msra.mxu0 %v903
    %992 = vmatprep.subr.bf16.mxu0 %v900
    %993 = vmatpush1.bf16.msra.mxu0 %v899
    %994 = vmatprep.subr.bf16.mxu0 %v896
    %995 = vmatpush1.bf16.msra.mxu0 %v895
    %996 = vmatprep.subr.bf16.mxu0 %v892
    %997 = vmatpush1.bf16.msra.mxu0 %v891
    %998 = vmatprep.subr.bf16.mxu0 %v888
    %999 = vmatpush1.bf16.msra.mxu0 %v887
    %1000 = vmatprep.subr.bf16.mxu0 %v884
    %1001 = vmatpush1.bf16.msra.mxu0 %v883
    %1002 = vmatprep.subr.bf16.mxu0 0
    %1003 = vmatpush2.bf16.msra.mxu0 0
    %1004 = vmatprep.subr.bf16.mxu0 0
    %1005 = vmatpush2.bf16.msra.mxu0 0
    %1006 = vmatprep.subr.bf16.mxu0 0
    %1007 = vmatpush2.bf16.msra.mxu0 0
    %1008 = vmatprep.subr.bf16.mxu0 0
    %1009 = vmatpush2.bf16.msra.mxu0 0
    %1010 = vmatprep.subr.bf16.mxu0 0
    %1011 = vmatpush2.bf16.msra.mxu0 0
    %1012 = vmatprep.subr.bf16.mxu0 0
    %1013 = vmatpush2.bf16.msra.mxu0 0
    %1014 = vmatprep.subr.bf16.mxu0 0
    %1015 = vmatpush2.bf16.msra.mxu0 0
    %1016 = vmatprep.subr.bf16.mxu0 0
    %1017 = vmatpush2.bf16.msra.mxu0 0
    %1018 = vmatprep.mubr.bf16.mxu0 0
    %1019 = vmatmul.mubr.bf16.gmra.mxu0 %v752
    %v1020 = vpop.f32.mrf.mxu0
    %v1021 = vadd.f32 0.0, %v1020
    %v1022 = vpop.f32.mrf.mxu0
    %v1023 = vadd.f32 0.0, %v1022
    %v1024 = vpop.f32.mrf.mxu0
    %v1025 = vpop.f32.mrf.mxu0
    %1026 = vdwg.mxu0
    %v1027 = vadd.f32 %v748, %v980
    %v1028 = vadd.f32 %v749, %v982
    %v1029 = vadd.f32 %v750, %v1021
    %v1030 = vadd.f32 %v751, %v1023
    %v1031 = vtanh.pop %v1027
    %v1032 = vtanh.pop %v1028
    %v1033 = vtanh.pop %v1029
    %v1034 = vtanh.pop %v1030
    %v1035 = vmul.f32 %v1031, 0.5
    %v1036 = vadd.f32 %v1035, 0.5
    %v1037 = vmul.f32 %v1032, 0.5
    %v1038 = vadd.f32 %v1037, 0.5
    %v1039 = vmul.f32 %v1034, 0.5
    %v1040 = vadd.f32 %v1039, 0.5
    %v1041 = vmul.f32 %v1038, %v741
    %v1042 = vmul.f32 %v1036, %v1033
    %v1043 = vadd.f32 %v1041, %v1042
    %v1044 = vtanh.pop %v1043
    %v1045 = vmul.f32 %v1040, %v1044
    %s1046 = scalar_lea.vmem [#allocation6], 8
    %1047 = vst [vmem:[%s1046] sm:$0xff] %v1045
    %s1048 = smul.u32 2, 4
    %s1049 = smul.addr %s1048, 8
    %s1050 = scalar_lea.vmem [#allocation7], %s1049
    %v1051 = vld [vmem:[%s1050] sm:$0xff]
    %v1052 = vld [vmem:[%s1050 + $0x8] sm:$0xff]
    %v1053 = vld [vmem:[%s1050 + $0x10] sm:$0xff]
    %v1054 = vld [vmem:[%s1050 + $0x18] sm:$0xff]
    %v1055 = vpack.c.bf16 %v1045, %v1045
    %v1056 = vld [vmem:[#allocation13] sm:$0xff]
    %v1057 = vld [vmem:[#allocation13 + $0x8] sm:$0xff]
    %v1058 = vld [vmem:[#allocation13 + $0x10] sm:$0xff]
    %v1059 = vld [vmem:[#allocation13 + $0x18] sm:$0xff]
    %v1060 = vld [vmem:[#allocation13 + $0x20] sm:$0xff]
    %v1061 = vld [vmem:[#allocation13 + $0x28] sm:$0xff]
    %v1062 = vld [vmem:[#allocation13 + $0x30] sm:$0xff]
    %v1063 = vld [vmem:[#allocation13 + $0x38] sm:$0xff]
    %v1064 = vld [vmem:[#allocation13 + $0x40] sm:$0xff]
    %v1065 = vld [vmem:[#allocation13 + $0x48] sm:$0xff]
    %v1066 = vld [vmem:[#allocation13 + $0x50] sm:$0xff]
    %v1067 = vld [vmem:[#allocation13 + $0x58] sm:$0xff]
    %v1068 = vld [vmem:[#allocation13 + $0x60] sm:$0xff]
    %v1069 = vld [vmem:[#allocation13 + $0x68] sm:$0xff]
    %v1070 = vld [vmem:[#allocation13 + $0x70] sm:$0xff]
    %v1071 = vld [vmem:[#allocation13 + $0x78] sm:$0xff]
    %v1072 = vld [vmem:[#allocation13 + $0x80] sm:$0xff]
    %v1073 = vld [vmem:[#allocation13 + $0x88] sm:$0xff]
    %v1074 = vld [vmem:[#allocation13 + $0x90] sm:$0xff]
    %v1075 = vld [vmem:[#allocation13 + $0x98] sm:$0xff]
    %v1076 = vld [vmem:[#allocation13 + $0xa0] sm:$0xff]
    %v1077 = vld [vmem:[#allocation13 + $0xa8] sm:$0xff]
    %v1078 = vld [vmem:[#allocation13 + $0xb0] sm:$0xff]
    %v1079 = vld [vmem:[#allocation13 + $0xb8] sm:$0xff]
    %v1080 = vld [vmem:[#allocation13 + $0xc0] sm:$0xff]
    %v1081 = vld [vmem:[#allocation13 + $0xc8] sm:$0xff]
    %v1082 = vld [vmem:[#allocation13 + $0xd0] sm:$0xff]
    %v1083 = vld [vmem:[#allocation13 + $0xd8] sm:$0xff]
    %v1084 = vld [vmem:[#allocation13 + $0xe0] sm:$0xff]
    %v1085 = vld [vmem:[#allocation13 + $0xe8] sm:$0xff]
    %v1086 = vld [vmem:[#allocation13 + $0xf0] sm:$0xff]
    %v1087 = vld [vmem:[#allocation13 + $0xf8] sm:$0xff]
    %v1120 = vunpack.c.l.b16 %v1056
    %v1121 = vunpack.c.h.b16 %v1056
    %v1122 = vunpack.c.l.b16 %v1057
    %v1123 = vunpack.c.h.b16 %v1057
    %v1124 = vunpack.c.l.b16 %v1058
    %v1125 = vunpack.c.h.b16 %v1058
    %v1126 = vunpack.c.l.b16 %v1059
    %v1127 = vunpack.c.h.b16 %v1059
    %v1128 = vunpack.c.l.b16 %v1060
    %v1129 = vunpack.c.h.b16 %v1060
    %v1130 = vunpack.c.l.b16 %v1061
    %v1131 = vunpack.c.h.b16 %v1061
    %v1132 = vunpack.c.l.b16 %v1062
    %v1133 = vunpack.c.h.b16 %v1062
    %v1134 = vunpack.c.l.b16 %v1063
    %v1135 = vunpack.c.h.b16 %v1063
    %v1136 = vunpack.c.l.b16 %v1064
    %v1137 = vunpack.c.h.b16 %v1064
    %v1138 = vunpack.c.l.b16 %v1065
    %v1139 = vunpack.c.h.b16 %v1065
    %v1140 = vunpack.c.l.b16 %v1066
    %v1141 = vunpack.c.h.b16 %v1066
    %v1142 = vunpack.c.l.b16 %v1067
    %v1143 = vunpack.c.h.b16 %v1067
    %v1144 = vunpack.c.l.b16 %v1068
    %v1145 = vunpack.c.h.b16 %v1068
    %v1146 = vunpack.c.l.b16 %v1069
    %v1147 = vunpack.c.h.b16 %v1069
    %v1148 = vunpack.c.l.b16 %v1070
    %v1149 = vunpack.c.h.b16 %v1070
    %v1150 = vunpack.c.l.b16 %v1071
    %v1151 = vunpack.c.h.b16 %v1071
    %v1152 = vunpack.c.l.b16 %v1072
    %v1153 = vunpack.c.h.b16 %v1072
    %v1154 = vunpack.c.l.b16 %v1073
    %v1155 = vunpack.c.h.b16 %v1073
    %v1156 = vunpack.c.l.b16 %v1074
    %v1157 = vunpack.c.h.b16 %v1074
    %v1158 = vunpack.c.l.b16 %v1075
    %v1159 = vunpack.c.h.b16 %v1075
    %v1160 = vunpack.c.l.b16 %v1076
    %v1161 = vunpack.c.h.b16 %v1076
    %v1162 = vunpack.c.l.b16 %v1077
    %v1163 = vunpack.c.h.b16 %v1077
    %v1164 = vunpack.c.l.b16 %v1078
    %v1165 = vunpack.c.h.b16 %v1078
    %v1166 = vunpack.c.l.b16 %v1079
    %v1167 = vunpack.c.h.b16 %v1079
    %v1168 = vunpack.c.l.b16 %v1080
    %v1169 = vunpack.c.h.b16 %v1080
    %v1170 = vunpack.c.l.b16 %v1081
    %v1171 = vunpack.c.h.b16 %v1081
    %v1172 = vunpack.c.l.b16 %v1082
    %v1173 = vunpack.c.h.b16 %v1082
    %v1174 = vunpack.c.l.b16 %v1083
    %v1175 = vunpack.c.h.b16 %v1083
    %v1176 = vunpack.c.l.b16 %v1084
    %v1177 = vunpack.c.h.b16 %v1084
    %v1178 = vunpack.c.l.b16 %v1085
    %v1179 = vunpack.c.h.b16 %v1085
    %v1180 = vunpack.c.l.b16 %v1086
    %v1181 = vunpack.c.h.b16 %v1086
    %v1182 = vunpack.c.l.b16 %v1087
    %v1183 = vunpack.c.h.b16 %v1087
    %v1184 = vpack.c.b16 %v1124, %v1120
    %v1185 = vpack.c.b16 %v1125, %v1121
    %v1186 = vpack.c.b16 %v1126, %v1122
    %v1187 = vpack.c.b16 %v1127, %v1123
    %v1188 = vpack.c.b16 %v1132, %v1128
    %v1189 = vpack.c.b16 %v1133, %v1129
    %v1190 = vpack.c.b16 %v1134, %v1130
    %v1191 = vpack.c.b16 %v1135, %v1131
    %v1192 = vpack.c.b16 %v1140, %v1136
    %v1193 = vpack.c.b16 %v1141, %v1137
    %v1194 = vpack.c.b16 %v1142, %v1138
    %v1195 = vpack.c.b16 %v1143, %v1139
    %v1196 = vpack.c.b16 %v1148, %v1144
    %v1197 = vpack.c.b16 %v1149, %v1145
    %v1198 = vpack.c.b16 %v1150, %v1146
    %v1199 = vpack.c.b16 %v1151, %v1147
    %v1200 = vpack.c.b16 %v1156, %v1152
    %v1201 = vpack.c.b16 %v1157, %v1153
    %v1202 = vpack.c.b16 %v1158, %v1154
    %v1203 = vpack.c.b16 %v1159, %v1155
    %v1204 = vpack.c.b16 %v1164, %v1160
    %v1205 = vpack.c.b16 %v1165, %v1161
    %v1206 = vpack.c.b16 %v1166, %v1162
    %v1207 = vpack.c.b16 %v1167, %v1163
    %v1208 = vpack.c.b16 %v1172, %v1168
    %v1209 = vpack.c.b16 %v1173, %v1169
    %v1210 = vpack.c.b16 %v1174, %v1170
    %v1211 = vpack.c.b16 %v1175, %v1171
    %v1212 = vpack.c.b16 %v1180, %v1176
    %v1213 = vpack.c.b16 %v1181, %v1177
    %v1214 = vpack.c.b16 %v1182, %v1178
    %v1215 = vpack.c.b16 %v1183, %v1179
    %1248 = vmatprep.subr.bf16.mxu0 %v1213
    %1249 = vmatpush1.bf16.msra.mxu0 %v1212
    %1250 = vmatprep.subr.bf16.mxu0 %v1209
    %1251 = vmatpush1.bf16.msra.mxu0 %v1208
    %1252 = vmatprep.subr.bf16.mxu0 %v1205
    %1253 = vmatpush1.bf16.msra.mxu0 %v1204
    %1254 = vmatprep.subr.bf16.mxu0 %v1201
    %1255 = vmatpush1.bf16.msra.mxu0 %v1200
    %1256 = vmatprep.subr.bf16.mxu0 %v1197
    %1257 = vmatpush1.bf16.msra.mxu0 %v1196
    %1258 = vmatprep.subr.bf16.mxu0 %v1193
    %1259 = vmatpush1.bf16.msra.mxu0 %v1192
    %1260 = vmatprep.subr.bf16.mxu0 %v1189
    %1261 = vmatpush1.bf16.msra.mxu0 %v1188
    %1262 = vmatprep.subr.bf16.mxu0 %v1185
    %1263 = vmatpush1.bf16.msra.mxu0 %v1184
    %1264 = vmatprep.subr.bf16.mxu0 0
    %1265 = vmatpush2.bf16.msra.mxu0 0
    %1266 = vmatprep.subr.bf16.mxu0 0
    %1267 = vmatpush2.bf16.msra.mxu0 0
    %1268 = vmatprep.subr.bf16.mxu0 0
    %1269 = vmatpush2.bf16.msra.mxu0 0
    %1270 = vmatprep.subr.bf16.mxu0 0
    %1271 = vmatpush2.bf16.msra.mxu0 0
    %1272 = vmatprep.subr.bf16.mxu0 0
    %1273 = vmatpush2.bf16.msra.mxu0 0
    %1274 = vmatprep.subr.bf16.mxu0 0
    %1275 = vmatpush2.bf16.msra.mxu0 0
    %1276 = vmatprep.subr.bf16.mxu0 0
    %1277 = vmatpush2.bf16.msra.mxu0 0
    %1278 = vmatprep.subr.bf16.mxu0 0
    %1279 = vmatpush2.bf16.msra.mxu0 0
    %1280 = vmatprep.mubr.bf16.mxu0 0
    %1281 = vmatmul.mubr.bf16.gmra.mxu0 %v1055
    %v1282 = vpop.f32.mrf.mxu0
    %v1283 = vadd.f32 0.0, %v1282
    %v1284 = vpop.f32.mrf.mxu0
    %v1285 = vadd.f32 0.0, %v1284
    %v1286 = vpop.f32.mrf.mxu0
    %v1287 = vpop.f32.mrf.mxu0
    %1288 = vdwg.mxu0
    %1289 = vmatprep.subr.bf16.mxu0 %v1215
    %1290 = vmatpush1.bf16.msra.mxu0 %v1214
    %1291 = vmatprep.subr.bf16.mxu0 %v1211
    %1292 = vmatpush1.bf16.msra.mxu0 %v1210
    %1293 = vmatprep.subr.bf16.mxu0 %v1207
    %1294 = vmatpush1.bf16.msra.mxu0 %v1206
    %1295 = vmatprep.subr.bf16.mxu0 %v1203
    %1296 = vmatpush1.bf16.msra.mxu0 %v1202
    %1297 = vmatprep.subr.bf16.mxu0 %v1199
    %1298 = vmatpush1.bf16.msra.mxu0 %v1198
    %1299 = vmatprep.subr.bf16.mxu0 %v1195
    %1300 = vmatpush1.bf16.msra.mxu0 %v1194
    %1301 = vmatprep.subr.bf16.mxu0 %v1191
    %1302 = vmatpush1.bf16.msra.mxu0 %v1190
    %1303 = vmatprep.subr.bf16.mxu0 %v1187
    %1304 = vmatpush1.bf16.msra.mxu0 %v1186
    %1305 = vmatprep.subr.bf16.mxu0 0
    %1306 = vmatpush2.bf16.msra.mxu0 0
    %1307 = vmatprep.subr.bf16.mxu0 0
    %1308 = vmatpush2.bf16.msra.mxu0 0
    %1309 = vmatprep.subr.bf16.mxu0 0
    %1310 = vmatpush2.bf16.msra.mxu0 0
    %1311 = vmatprep.subr.bf16.mxu0 0
    %1312 = vmatpush2.bf16.msra.mxu0 0
    %1313 = vmatprep.subr.bf16.mxu0 0
    %1314 = vmatpush2.bf16.msra.mxu0 0
    %1315 = vmatprep.subr.bf16.mxu0 0
    %1316 = vmatpush2.bf16.msra.mxu0 0
    %1317 = vmatprep.subr.bf16.mxu0 0
    %1318 = vmatpush2.bf16.msra.mxu0 0
    %1319 = vmatprep.subr.bf16.mxu0 0
    %1320 = vmatpush2.bf16.msra.mxu0 0
    %1321 = vmatprep.mubr.bf16.mxu0 0
    %1322 = vmatmul.mubr.bf16.gmra.mxu0 %v1055
    %v1323 = vpop.f32.mrf.mxu0
    %v1324 = vadd.f32 0.0, %v1323
    %v1325 = vpop.f32.mrf.mxu0
    %v1326 = vadd.f32 0.0, %v1325
    %v1327 = vpop.f32.mrf.mxu0
    %v1328 = vpop.f32.mrf.mxu0
    %1329 = vdwg.mxu0
    %v1330 = vadd.f32 %v1051, %v1283
    %v1331 = vadd.f32 %v1052, %v1285
    %v1332 = vadd.f32 %v1053, %v1324
    %v1333 = vadd.f32 %v1054, %v1326
    %v1334 = vtanh.pop %v1330
    %v1335 = vtanh.pop %v1331
    %v1336 = vtanh.pop %v1332
    %v1337 = vtanh.pop %v1333
    %v1338 = vmul.f32 %v1334, 0.5
    %v1339 = vadd.f32 %v1338, 0.5
    %v1340 = vmul.f32 %v1335, 0.5
    %v1341 = vadd.f32 %v1340, 0.5
    %v1342 = vmul.f32 %v1337, 0.5
    %v1343 = vadd.f32 %v1342, 0.5
    %v1344 = vmul.f32 %v1341, %v1043
    %v1345 = vmul.f32 %v1339, %v1336
    %v1346 = vadd.f32 %v1344, %v1345
    %v1347 = vtanh.pop %v1346
    %v1348 = vmul.f32 %v1343, %v1347
    %s1349 = scalar_lea.vmem [#allocation6], 16
    %1350 = vst [vmem:[%s1349] sm:$0xff] %v1348
    %s1351 = smul.u32 3, 4
    %s1352 = smul.addr %s1351, 8
    %s1353 = scalar_lea.vmem [#allocation7], %s1352
    %v1354 = vld [vmem:[%s1353] sm:$0xff]
    %v1355 = vld [vmem:[%s1353 + $0x8] sm:$0xff]
    %v1356 = vld [vmem:[%s1353 + $0x10] sm:$0xff]
    %v1357 = vld [vmem:[%s1353 + $0x18] sm:$0xff]
    %v1358 = vpack.c.bf16 %v1348, %v1348
    %v1359 = vld [vmem:[#allocation13] sm:$0xff]
    %v1360 = vld [vmem:[#allocation13 + $0x8] sm:$0xff]
    %v1361 = vld [vmem:[#allocation13 + $0x10] sm:$0xff]
    %v1362 = vld [vmem:[#allocation13 + $0x18] sm:$0xff]
    %v1363 = vld [vmem:[#allocation13 + $0x20] sm:$0xff]
    %v1364 = vld [vmem:[#allocation13 + $0x28] sm:$0xff]
    %v1365 = vld [vmem:[#allocation13 + $0x30] sm:$0xff]
    %v1366 = vld [vmem:[#allocation13 + $0x38] sm:$0xff]
    %v1367 = vld [vmem:[#allocation13 + $0x40] sm:$0xff]
    %v1368 = vld [vmem:[#allocation13 + $0x48] sm:$0xff]
    %v1369 = vld [vmem:[#allocation13 + $0x50] sm:$0xff]
    %v1370 = vld [vmem:[#allocation13 + $0x58] sm:$0xff]
    %v1371 = vld [vmem:[#allocation13 + $0x60] sm:$0xff]
    %v1372 = vld [vmem:[#allocation13 + $0x68] sm:$0xff]
    %v1373 = vld [vmem:[#allocation13 + $0x70] sm:$0xff]
    %v1374 = vld [vmem:[#allocation13 + $0x78] sm:$0xff]
    %v1375 = vld [vmem:[#allocation13 + $0x80] sm:$0xff]
    %v1376 = vld [vmem:[#allocation13 + $0x88] sm:$0xff]
    %v1377 = vld [vmem:[#allocation13 + $0x90] sm:$0xff]
    %v1378 = vld [vmem:[#allocation13 + $0x98] sm:$0xff]
    %v1379 = vld [vmem:[#allocation13 + $0xa0] sm:$0xff]
    %v1380 = vld [vmem:[#allocation13 + $0xa8] sm:$0xff]
    %v1381 = vld [vmem:[#allocation13 + $0xb0] sm:$0xff]
    %v1382 = vld [vmem:[#allocation13 + $0xb8] sm:$0xff]
    %v1383 = vld [vmem:[#allocation13 + $0xc0] sm:$0xff]
    %v1384 = vld [vmem:[#allocation13 + $0xc8] sm:$0xff]
    %v1385 = vld [vmem:[#allocation13 + $0xd0] sm:$0xff]
    %v1386 = vld [vmem:[#allocation13 + $0xd8] sm:$0xff]
    %v1387 = vld [vmem:[#allocation13 + $0xe0] sm:$0xff]
    %v1388 = vld [vmem:[#allocation13 + $0xe8] sm:$0xff]
    %v1389 = vld [vmem:[#allocation13 + $0xf0] sm:$0xff]
    %v1390 = vld [vmem:[#allocation13 + $0xf8] sm:$0xff]
    %v1423 = vunpack.c.l.b16 %v1359
    %v1424 = vunpack.c.h.b16 %v1359
    %v1425 = vunpack.c.l.b16 %v1360
    %v1426 = vunpack.c.h.b16 %v1360
    %v1427 = vunpack.c.l.b16 %v1361
    %v1428 = vunpack.c.h.b16 %v1361
    %v1429 = vunpack.c.l.b16 %v1362
    %v1430 = vunpack.c.h.b16 %v1362
    %v1431 = vunpack.c.l.b16 %v1363
    %v1432 = vunpack.c.h.b16 %v1363
    %v1433 = vunpack.c.l.b16 %v1364
    %v1434 = vunpack.c.h.b16 %v1364
    %v1435 = vunpack.c.l.b16 %v1365
    %v1436 = vunpack.c.h.b16 %v1365
    %v1437 = vunpack.c.l.b16 %v1366
    %v1438 = vunpack.c.h.b16 %v1366
    %v1439 = vunpack.c.l.b16 %v1367
    %v1440 = vunpack.c.h.b16 %v1367
    %v1441 = vunpack.c.l.b16 %v1368
    %v1442 = vunpack.c.h.b16 %v1368
    %v1443 = vunpack.c.l.b16 %v1369
    %v1444 = vunpack.c.h.b16 %v1369
    %v1445 = vunpack.c.l.b16 %v1370
    %v1446 = vunpack.c.h.b16 %v1370
    %v1447 = vunpack.c.l.b16 %v1371
    %v1448 = vunpack.c.h.b16 %v1371
    %v1449 = vunpack.c.l.b16 %v1372
    %v1450 = vunpack.c.h.b16 %v1372
    %v1451 = vunpack.c.l.b16 %v1373
    %v1452 = vunpack.c.h.b16 %v1373
    %v1453 = vunpack.c.l.b16 %v1374
    %v1454 = vunpack.c.h.b16 %v1374
    %v1455 = vunpack.c.l.b16 %v1375
    %v1456 = vunpack.c.h.b16 %v1375
    %v1457 = vunpack.c.l.b16 %v1376
    %v1458 = vunpack.c.h.b16 %v1376
    %v1459 = vunpack.c.l.b16 %v1377
    %v1460 = vunpack.c.h.b16 %v1377
    %v1461 = vunpack.c.l.b16 %v1378
    %v1462 = vunpack.c.h.b16 %v1378
    %v1463 = vunpack.c.l.b16 %v1379
    %v1464 = vunpack.c.h.b16 %v1379
    %v1465 = vunpack.c.l.b16 %v1380
    %v1466 = vunpack.c.h.b16 %v1380
    %v1467 = vunpack.c.l.b16 %v1381
    %v1468 = vunpack.c.h.b16 %v1381
    %v1469 = vunpack.c.l.b16 %v1382
    %v1470 = vunpack.c.h.b16 %v1382
    %v1471 = vunpack.c.l.b16 %v1383
    %v1472 = vunpack.c.h.b16 %v1383
    %v1473 = vunpack.c.l.b16 %v1384
    %v1474 = vunpack.c.h.b16 %v1384
    %v1475 = vunpack.c.l.b16 %v1385
    %v1476 = vunpack.c.h.b16 %v1385
    %v1477 = vunpack.c.l.b16 %v1386
    %v1478 = vunpack.c.h.b16 %v1386
    %v1479 = vunpack.c.l.b16 %v1387
    %v1480 = vunpack.c.h.b16 %v1387
    %v1481 = vunpack.c.l.b16 %v1388
    %v1482 = vunpack.c.h.b16 %v1388
    %v1483 = vunpack.c.l.b16 %v1389
    %v1484 = vunpack.c.h.b16 %v1389
    %v1485 = vunpack.c.l.b16 %v1390
    %v1486 = vunpack.c.h.b16 %v1390
    %v1487 = vpack.c.b16 %v1427, %v1423
    %v1488 = vpack.c.b16 %v1428, %v1424
    %v1489 = vpack.c.b16 %v1429, %v1425
    %v1490 = vpack.c.b16 %v1430, %v1426
    %v1491 = vpack.c.b16 %v1435, %v1431
    %v1492 = vpack.c.b16 %v1436, %v1432
    %v1493 = vpack.c.b16 %v1437, %v1433
    %v1494 = vpack.c.b16 %v1438, %v1434
    %v1495 = vpack.c.b16 %v1443, %v1439
    %v1496 = vpack.c.b16 %v1444, %v1440
    %v1497 = vpack.c.b16 %v1445, %v1441
    %v1498 = vpack.c.b16 %v1446, %v1442
    %v1499 = vpack.c.b16 %v1451, %v1447
    %v1500 = vpack.c.b16 %v1452, %v1448
    %v1501 = vpack.c.b16 %v1453, %v1449
    %v1502 = vpack.c.b16 %v1454, %v1450
    %v1503 = vpack.c.b16 %v1459, %v1455
    %v1504 = vpack.c.b16 %v1460, %v1456
    %v1505 = vpack.c.b16 %v1461, %v1457
    %v1506 = vpack.c.b16 %v1462, %v1458
    %v1507 = vpack.c.b16 %v1467, %v1463
    %v1508 = vpack.c.b16 %v1468, %v1464
    %v1509 = vpack.c.b16 %v1469, %v1465
    %v1510 = vpack.c.b16 %v1470, %v1466
    %v1511 = vpack.c.b16 %v1475, %v1471
    %v1512 = vpack.c.b16 %v1476, %v1472
    %v1513 = vpack.c.b16 %v1477, %v1473
    %v1514 = vpack.c.b16 %v1478, %v1474
    %v1515 = vpack.c.b16 %v1483, %v1479
    %v1516 = vpack.c.b16 %v1484, %v1480
    %v1517 = vpack.c.b16 %v1485, %v1481
    %v1518 = vpack.c.b16 %v1486, %v1482
    %1551 = vmatprep.subr.bf16.mxu0 %v1516
    %1552 = vmatpush1.bf16.msra.mxu0 %v1515
    %1553 = vmatprep.subr.bf16.mxu0 %v1512
    %1554 = vmatpush1.bf16.msra.mxu0 %v1511
    %1555 = vmatprep.subr.bf16.mxu0 %v1508
    %1556 = vmatpush1.bf16.msra.mxu0 %v1507
    %1557 = vmatprep.subr.bf16.mxu0 %v1504
    %1558 = vmatpush1.bf16.msra.mxu0 %v1503
    %1559 = vmatprep.subr.bf16.mxu0 %v1500
    %1560 = vmatpush1.bf16.msra.mxu0 %v1499
    %1561 = vmatprep.subr.bf16.mxu0 %v1496
    %1562 = vmatpush1.bf16.msra.mxu0 %v1495
    %1563 = vmatprep.subr.bf16.mxu0 %v1492
    %1564 = vmatpush1.bf16.msra.mxu0 %v1491
    %1565 = vmatprep.subr.bf16.mxu0 %v1488
    %1566 = vmatpush1.bf16.msra.mxu0 %v1487
    %1567 = vmatprep.subr.bf16.mxu0 0
    %1568 = vmatpush2.bf16.msra.mxu0 0
    %1569 = vmatprep.subr.bf16.mxu0 0
    %1570 = vmatpush2.bf16.msra.mxu0 0
    %1571 = vmatprep.subr.bf16.mxu0 0
    %1572 = vmatpush2.bf16.msra.mxu0 0
    %1573 = vmatprep.subr.bf16.mxu0 0
    %1574 = vmatpush2.bf16.msra.mxu0 0
    %1575 = vmatprep.subr.bf16.mxu0 0
    %1576 = vmatpush2.bf16.msra.mxu0 0
    %1577 = vmatprep.subr.bf16.mxu0 0
    %1578 = vmatpush2.bf16.msra.mxu0 0
    %1579 = vmatprep.subr.bf16.mxu0 0
    %1580 = vmatpush2.bf16.msra.mxu0 0
    %1581 = vmatprep.subr.bf16.mxu0 0
    %1582 = vmatpush2.bf16.msra.mxu0 0
    %1583 = vmatprep.mubr.bf16.mxu0 0
    %1584 = vmatmul.mubr.bf16.gmra.mxu0 %v1358
    %v1585 = vpop.f32.mrf.mxu0
    %v1586 = vadd.f32 0.0, %v1585
    %v1587 = vpop.f32.mrf.mxu0
    %v1588 = vadd.f32 0.0, %v1587
    %v1589 = vpop.f32.mrf.mxu0
    %v1590 = vpop.f32.mrf.mxu0
    %1591 = vdwg.mxu0
    %1592 = vmatprep.subr.bf16.mxu0 %v1518
    %1593 = vmatpush1.bf16.msra.mxu0 %v1517
    %1594 = vmatprep.subr.bf16.mxu0 %v1514
    %1595 = vmatpush1.bf16.msra.mxu0 %v1513
    %1596 = vmatprep.subr.bf16.mxu0 %v1510
    %1597 = vmatpush1.bf16.msra.mxu0 %v1509
    %1598 = vmatprep.subr.bf16.mxu0 %v1506
    %1599 = vmatpush1.bf16.msra.mxu0 %v1505
    %1600 = vmatprep.subr.bf16.mxu0 %v1502
    %1601 = vmatpush1.bf16.msra.mxu0 %v1501
    %1602 = vmatprep.subr.bf16.mxu0 %v1498
    %1603 = vmatpush1.bf16.msra.mxu0 %v1497
    %1604 = vmatprep.subr.bf16.mxu0 %v1494
    %1605 = vmatpush1.bf16.msra.mxu0 %v1493
    %1606 = vmatprep.subr.bf16.mxu0 %v1490
    %1607 = vmatpush1.bf16.msra.mxu0 %v1489
    %1608 = vmatprep.subr.bf16.mxu0 0
    %1609 = vmatpush2.bf16.msra.mxu0 0
    %1610 = vmatprep.subr.bf16.mxu0 0
    %1611 = vmatpush2.bf16.msra.mxu0 0
    %1612 = vmatprep.subr.bf16.mxu0 0
    %1613 = vmatpush2.bf16.msra.mxu0 0
    %1614 = vmatprep.subr.bf16.mxu0 0
    %1615 = vmatpush2.bf16.msra.mxu0 0
    %1616 = vmatprep.subr.bf16.mxu0 0
    %1617 = vmatpush2.bf16.msra.mxu0 0
    %1618 = vmatprep.subr.bf16.mxu0 0
    %1619 = vmatpush2.bf16.msra.mxu0 0
    %1620 = vmatprep.subr.bf16.mxu0 0
    %1621 = vmatpush2.bf16.msra.mxu0 0
    %1622 = vmatprep.subr.bf16.mxu0 0
    %1623 = vmatpush2.bf16.msra.mxu0 0
    %1624 = vmatprep.mubr.bf16.mxu0 0
    %1625 = vmatmul.mubr.bf16.gmra.mxu0 %v1358
    %v1626 = vpop.f32.mrf.mxu0
    %v1627 = vadd.f32 0.0, %v1626
    %v1628 = vpop.f32.mrf.mxu0
    %v1629 = vadd.f32 0.0, %v1628
    %v1630 = vpop.f32.mrf.mxu0
    %v1631 = vpop.f32.mrf.mxu0
    %1632 = vdwg.mxu0
    %v1633 = vadd.f32 %v1354, %v1586
    %v1634 = vadd.f32 %v1355, %v1588
    %v1635 = vadd.f32 %v1356, %v1627
    %v1636 = vadd.f32 %v1357, %v1629
    %v1637 = vtanh.pop %v1633
    %v1638 = vtanh.pop %v1634
    %v1639 = vtanh.pop %v1635
    %v1640 = vtanh.pop %v1636
    %v1641 = vmul.f32 %v1637, 0.5
    %v1642 = vadd.f32 %v1641, 0.5
    %v1643 = vmul.f32 %v1638, 0.5
    %v1644 = vadd.f32 %v1643, 0.5
    %v1645 = vmul.f32 %v1640, 0.5
    %v1646 = vadd.f32 %v1645, 0.5
    %v1647 = vmul.f32 %v1644, %v1346
    %v1648 = vmul.f32 %v1642, %v1639
    %v1649 = vadd.f32 %v1647, %v1648
    %v1650 = vtanh.pop %v1649
    %v1651 = vmul.f32 %v1646, %v1650
    %s1652 = scalar_lea.vmem [#allocation6], 24
    %1653 = vst [vmem:[%s1652] sm:$0xff] %v1651
    %s1654 = smul.u32 4, 4
    %s1655 = smul.addr %s1654, 8
    %s1656 = scalar_lea.vmem [#allocation7], %s1655
    %v1657 = vld [vmem:[%s1656] sm:$0xff]
    %v1658 = vld [vmem:[%s1656 + $0x8] sm:$0xff]
    %v1659 = vld [vmem:[%s1656 + $0x10] sm:$0xff]
    %v1660 = vld [vmem:[%s1656 + $0x18] sm:$0xff]
    %v1661 = vpack.c.bf16 %v1651, %v1651
    %v1662 = vld [vmem:[#allocation13] sm:$0xff]
    %v1663 = vld [vmem:[#allocation13 + $0x8] sm:$0xff]
    %v1664 = vld [vmem:[#allocation13 + $0x10] sm:$0xff]
    %v1665 = vld [vmem:[#allocation13 + $0x18] sm:$0xff]
    %v1666 = vld [vmem:[#allocation13 + $0x20] sm:$0xff]
    %v1667 = vld [vmem:[#allocation13 + $0x28] sm:$0xff]
    %v1668 = vld [vmem:[#allocation13 + $0x30] sm:$0xff]
    %v1669 = vld [vmem:[#allocation13 + $0x38] sm:$0xff]
    %v1670 = vld [vmem:[#allocation13 + $0x40] sm:$0xff]
    %v1671 = vld [vmem:[#allocation13 + $0x48] sm:$0xff]
    %v1672 = vld [vmem:[#allocation13 + $0x50] sm:$0xff]
    %v1673 = vld [vmem:[#allocation13 + $0x58] sm:$0xff]
    %v1674 = vld [vmem:[#allocation13 + $0x60] sm:$0xff]
    %v1675 = vld [vmem:[#allocation13 + $0x68] sm:$0xff]
    %v1676 = vld [vmem:[#allocation13 + $0x70] sm:$0xff]
    %v1677 = vld [vmem:[#allocation13 + $0x78] sm:$0xff]
    %v1678 = vld [vmem:[#allocation13 + $0x80] sm:$0xff]
    %v1679 = vld [vmem:[#allocation13 + $0x88] sm:$0xff]
    %v1680 = vld [vmem:[#allocation13 + $0x90] sm:$0xff]
    %v1681 = vld [vmem:[#allocation13 + $0x98] sm:$0xff]
    %v1682 = vld [vmem:[#allocation13 + $0xa0] sm:$0xff]
    %v1683 = vld [vmem:[#allocation13 + $0xa8] sm:$0xff]
    %v1684 = vld [vmem:[#allocation13 + $0xb0] sm:$0xff]
    %v1685 = vld [vmem:[#allocation13 + $0xb8] sm:$0xff]
    %v1686 = vld [vmem:[#allocation13 + $0xc0] sm:$0xff]
    %v1687 = vld [vmem:[#allocation13 + $0xc8] sm:$0xff]
    %v1688 = vld [vmem:[#allocation13 + $0xd0] sm:$0xff]
    %v1689 = vld [vmem:[#allocation13 + $0xd8] sm:$0xff]
    %v1690 = vld [vmem:[#allocation13 + $0xe0] sm:$0xff]
    %v1691 = vld [vmem:[#allocation13 + $0xe8] sm:$0xff]
    %v1692 = vld [vmem:[#allocation13 + $0xf0] sm:$0xff]
    %v1693 = vld [vmem:[#allocation13 + $0xf8] sm:$0xff]
    %v1726 = vunpack.c.l.b16 %v1662
    %v1727 = vunpack.c.h.b16 %v1662
    %v1728 = vunpack.c.l.b16 %v1663
    %v1729 = vunpack.c.h.b16 %v1663
    %v1730 = vunpack.c.l.b16 %v1664
    %v1731 = vunpack.c.h.b16 %v1664
    %v1732 = vunpack.c.l.b16 %v1665
    %v1733 = vunpack.c.h.b16 %v1665
    %v1734 = vunpack.c.l.b16 %v1666
    %v1735 = vunpack.c.h.b16 %v1666
    %v1736 = vunpack.c.l.b16 %v1667
    %v1737 = vunpack.c.h.b16 %v1667
    %v1738 = vunpack.c.l.b16 %v1668
    %v1739 = vunpack.c.h.b16 %v1668
    %v1740 = vunpack.c.l.b16 %v1669
    %v1741 = vunpack.c.h.b16 %v1669
    %v1742 = vunpack.c.l.b16 %v1670
    %v1743 = vunpack.c.h.b16 %v1670
    %v1744 = vunpack.c.l.b16 %v1671
    %v1745 = vunpack.c.h.b16 %v1671
    %v1746 = vunpack.c.l.b16 %v1672
    %v1747 = vunpack.c.h.b16 %v1672
    %v1748 = vunpack.c.l.b16 %v1673
    %v1749 = vunpack.c.h.b16 %v1673
    %v1750 = vunpack.c.l.b16 %v1674
    %v1751 = vunpack.c.h.b16 %v1674
    %v1752 = vunpack.c.l.b16 %v1675
    %v1753 = vunpack.c.h.b16 %v1675
    %v1754 = vunpack.c.l.b16 %v1676
    %v1755 = vunpack.c.h.b16 %v1676
    %v1756 = vunpack.c.l.b16 %v1677
    %v1757 = vunpack.c.h.b16 %v1677
    %v1758 = vunpack.c.l.b16 %v1678
    %v1759 = vunpack.c.h.b16 %v1678
    %v1760 = vunpack.c.l.b16 %v1679
    %v1761 = vunpack.c.h.b16 %v1679
    %v1762 = vunpack.c.l.b16 %v1680
    %v1763 = vunpack.c.h.b16 %v1680
    %v1764 = vunpack.c.l.b16 %v1681
    %v1765 = vunpack.c.h.b16 %v1681
    %v1766 = vunpack.c.l.b16 %v1682
    %v1767 = vunpack.c.h.b16 %v1682
    %v1768 = vunpack.c.l.b16 %v1683
    %v1769 = vunpack.c.h.b16 %v1683
    %v1770 = vunpack.c.l.b16 %v1684
    %v1771 = vunpack.c.h.b16 %v1684
    %v1772 = vunpack.c.l.b16 %v1685
    %v1773 = vunpack.c.h.b16 %v1685
    %v1774 = vunpack.c.l.b16 %v1686
    %v1775 = vunpack.c.h.b16 %v1686
    %v1776 = vunpack.c.l.b16 %v1687
    %v1777 = vunpack.c.h.b16 %v1687
    %v1778 = vunpack.c.l.b16 %v1688
    %v1779 = vunpack.c.h.b16 %v1688
    %v1780 = vunpack.c.l.b16 %v1689
    %v1781 = vunpack.c.h.b16 %v1689
    %v1782 = vunpack.c.l.b16 %v1690
    %v1783 = vunpack.c.h.b16 %v1690
    %v1784 = vunpack.c.l.b16 %v1691
    %v1785 = vunpack.c.h.b16 %v1691
    %v1786 = vunpack.c.l.b16 %v1692
    %v1787 = vunpack.c.h.b16 %v1692
    %v1788 = vunpack.c.l.b16 %v1693
    %v1789 = vunpack.c.h.b16 %v1693
    %v1790 = vpack.c.b16 %v1730, %v1726
    %v1791 = vpack.c.b16 %v1731, %v1727
    %v1792 = vpack.c.b16 %v1732, %v1728
    %v1793 = vpack.c.b16 %v1733, %v1729
    %v1794 = vpack.c.b16 %v1738, %v1734
    %v1795 = vpack.c.b16 %v1739, %v1735
    %v1796 = vpack.c.b16 %v1740, %v1736
    %v1797 = vpack.c.b16 %v1741, %v1737
    %v1798 = vpack.c.b16 %v1746, %v1742
    %v1799 = vpack.c.b16 %v1747, %v1743
    %v1800 = vpack.c.b16 %v1748, %v1744
    %v1801 = vpack.c.b16 %v1749, %v1745
    %v1802 = vpack.c.b16 %v1754, %v1750
    %v1803 = vpack.c.b16 %v1755, %v1751
    %v1804 = vpack.c.b16 %v1756, %v1752
    %v1805 = vpack.c.b16 %v1757, %v1753
    %v1806 = vpack.c.b16 %v1762, %v1758
    %v1807 = vpack.c.b16 %v1763, %v1759
    %v1808 = vpack.c.b16 %v1764, %v1760
    %v1809 = vpack.c.b16 %v1765, %v1761
    %v1810 = vpack.c.b16 %v1770, %v1766
    %v1811 = vpack.c.b16 %v1771, %v1767
    %v1812 = vpack.c.b16 %v1772, %v1768
    %v1813 = vpack.c.b16 %v1773, %v1769
    %v1814 = vpack.c.b16 %v1778, %v1774
    %v1815 = vpack.c.b16 %v1779, %v1775
    %v1816 = vpack.c.b16 %v1780, %v1776
    %v1817 = vpack.c.b16 %v1781, %v1777
    %v1818 = vpack.c.b16 %v1786, %v1782
    %v1819 = vpack.c.b16 %v1787, %v1783
    %v1820 = vpack.c.b16 %v1788, %v1784
    %v1821 = vpack.c.b16 %v1789, %v1785
    %1854 = vmatprep.subr.bf16.mxu0 %v1819
    %1855 = vmatpush1.bf16.msra.mxu0 %v1818
    %1856 = vmatprep.subr.bf16.mxu0 %v1815
    %1857 = vmatpush1.bf16.msra.mxu0 %v1814
    %1858 = vmatprep.subr.bf16.mxu0 %v1811
    %1859 = vmatpush1.bf16.msra.mxu0 %v1810
    %1860 = vmatprep.subr.bf16.mxu0 %v1807
    %1861 = vmatpush1.bf16.msra.mxu0 %v1806
    %1862 = vmatprep.subr.bf16.mxu0 %v1803
    %1863 = vmatpush1.bf16.msra.mxu0 %v1802
    %1864 = vmatprep.subr.bf16.mxu0 %v1799
    %1865 = vmatpush1.bf16.msra.mxu0 %v1798
    %1866 = vmatprep.subr.bf16.mxu0 %v1795
    %1867 = vmatpush1.bf16.msra.mxu0 %v1794
    %1868 = vmatprep.subr.bf16.mxu0 %v1791
    %1869 = vmatpush1.bf16.msra.mxu0 %v1790
    %1870 = vmatprep.subr.bf16.mxu0 0
    %1871 = vmatpush2.bf16.msra.mxu0 0
    %1872 = vmatprep.subr.bf16.mxu0 0
    %1873 = vmatpush2.bf16.msra.mxu0 0
    %1874 = vmatprep.subr.bf16.mxu0 0
    %1875 = vmatpush2.bf16.msra.mxu0 0
    %1876 = vmatprep.subr.bf16.mxu0 0
    %1877 = vmatpush2.bf16.msra.mxu0 0
    %1878 = vmatprep.subr.bf16.mxu0 0
    %1879 = vmatpush2.bf16.msra.mxu0 0
    %1880 = vmatprep.subr.bf16.mxu0 0
    %1881 = vmatpush2.bf16.msra.mxu0 0
    %1882 = vmatprep.subr.bf16.mxu0 0
    %1883 = vmatpush2.bf16.msra.mxu0 0
    %1884 = vmatprep.subr.bf16.mxu0 0
    %1885 = vmatpush2.bf16.msra.mxu0 0
    %1886 = vmatprep.mubr.bf16.mxu0 0
    %1887 = vmatmul.mubr.bf16.gmra.mxu0 %v1661
    %v1888 = vpop.f32.mrf.mxu0
    %v1889 = vadd.f32 0.0, %v1888
    %v1890 = vpop.f32.mrf.mxu0
    %v1891 = vadd.f32 0.0, %v1890
    %v1892 = vpop.f32.mrf.mxu0
    %v1893 = vpop.f32.mrf.mxu0
    %1894 = vdwg.mxu0
    %1895 = vmatprep.subr.bf16.mxu0 %v1821
    %1896 = vmatpush1.bf16.msra.mxu0 %v1820
    %1897 = vmatprep.subr.bf16.mxu0 %v1817
    %1898 = vmatpush1.bf16.msra.mxu0 %v1816
    %1899 = vmatprep.subr.bf16.mxu0 %v1813
    %1900 = vmatpush1.bf16.msra.mxu0 %v1812
    %1901 = vmatprep.subr.bf16.mxu0 %v1809
    %1902 = vmatpush1.bf16.msra.mxu0 %v1808
    %1903 = vmatprep.subr.bf16.mxu0 %v1805
    %1904 = vmatpush1.bf16.msra.mxu0 %v1804
    %1905 = vmatprep.subr.bf16.mxu0 %v1801
    %1906 = vmatpush1.bf16.msra.mxu0 %v1800
    %1907 = vmatprep.subr.bf16.mxu0 %v1797
    %1908 = vmatpush1.bf16.msra.mxu0 %v1796
    %1909 = vmatprep.subr.bf16.mxu0 %v1793
    %1910 = vmatpush1.bf16.msra.mxu0 %v1792
    %1911 = vmatprep.subr.bf16.mxu0 0
    %1912 = vmatpush2.bf16.msra.mxu0 0
    %1913 = vmatprep.subr.bf16.mxu0 0
    %1914 = vmatpush2.bf16.msra.mxu0 0
    %1915 = vmatprep.subr.bf16.mxu0 0
    %1916 = vmatpush2.bf16.msra.mxu0 0
    %1917 = vmatprep.subr.bf16.mxu0 0
    %1918 = vmatpush2.bf16.msra.mxu0 0
    %1919 = vmatprep.subr.bf16.mxu0 0
    %1920 = vmatpush2.bf16.msra.mxu0 0
    %1921 = vmatprep.subr.bf16.mxu0 0
    %1922 = vmatpush2.bf16.msra.mxu0 0
    %1923 = vmatprep.subr.bf16.mxu0 0
    %1924 = vmatpush2.bf16.msra.mxu0 0
    %1925 = vmatprep.subr.bf16.mxu0 0
    %1926 = vmatpush2.bf16.msra.mxu0 0
    %1927 = vmatprep.mubr.bf16.mxu0 0
    %1928 = vmatmul.mubr.bf16.gmra.mxu0 %v1661
    %v1929 = vpop.f32.mrf.mxu0
    %v1930 = vadd.f32 0.0, %v1929
    %v1931 = vpop.f32.mrf.mxu0
    %v1932 = vadd.f32 0.0, %v1931
    %v1933 = vpop.f32.mrf.mxu0
    %v1934 = vpop.f32.mrf.mxu0
    %1935 = vdwg.mxu0
    %v1936 = vadd.f32 %v1657, %v1889
    %v1937 = vadd.f32 %v1658, %v1891
    %v1938 = vadd.f32 %v1659, %v1930
    %v1939 = vadd.f32 %v1660, %v1932
    %v1940 = vtanh.pop %v1936
    %v1941 = vtanh.pop %v1937
    %v1942 = vtanh.pop %v1938
    %v1943 = vtanh.pop %v1939
    %v1944 = vmul.f32 %v1940, 0.5
    %v1945 = vadd.f32 %v1944, 0.5
    %v1946 = vmul.f32 %v1941, 0.5
    %v1947 = vadd.f32 %v1946, 0.5
    %v1948 = vmul.f32 %v1943, 0.5
    %v1949 = vadd.f32 %v1948, 0.5
    %v1950 = vmul.f32 %v1947, %v1649
    %v1951 = vmul.f32 %v1945, %v1942
    %v1952 = vadd.f32 %v1950, %v1951
    %v1953 = vtanh.pop %v1952
    %v1954 = vmul.f32 %v1949, %v1953
    %s1955 = scalar_lea.vmem [#allocation6], 32
    %1956 = vst [vmem:[%s1955] sm:$0xff] %v1954
    %s1957 = smul.u32 5, 4
    %s1958 = smul.addr %s1957, 8
    %s1959 = scalar_lea.vmem [#allocation7], %s1958
    %v1960 = vld [vmem:[%s1959] sm:$0xff]
    %v1961 = vld [vmem:[%s1959 + $0x8] sm:$0xff]
    %v1962 = vld [vmem:[%s1959 + $0x10] sm:$0xff]
    %v1963 = vld [vmem:[%s1959 + $0x18] sm:$0xff]
    %v1964 = vpack.c.bf16 %v1954, %v1954
    %v1965 = vld [vmem:[#allocation13] sm:$0xff]
    %v1966 = vld [vmem:[#allocation13 + $0x8] sm:$0xff]
    %v1967 = vld [vmem:[#allocation13 + $0x10] sm:$0xff]
    %v1968 = vld [vmem:[#allocation13 + $0x18] sm:$0xff]
    %v1969 = vld [vmem:[#allocation13 + $0x20] sm:$0xff]
    %v1970 = vld [vmem:[#allocation13 + $0x28] sm:$0xff]
    %v1971 = vld [vmem:[#allocation13 + $0x30] sm:$0xff]
    %v1972 = vld [vmem:[#allocation13 + $0x38] sm:$0xff]
    %v1973 = vld [vmem:[#allocation13 + $0x40] sm:$0xff]
    %v1974 = vld [vmem:[#allocation13 + $0x48] sm:$0xff]
    %v1975 = vld [vmem:[#allocation13 + $0x50] sm:$0xff]
    %v1976 = vld [vmem:[#allocation13 + $0x58] sm:$0xff]
    %v1977 = vld [vmem:[#allocation13 + $0x60] sm:$0xff]
    %v1978 = vld [vmem:[#allocation13 + $0x68] sm:$0xff]
    %v1979 = vld [vmem:[#allocation13 + $0x70] sm:$0xff]
    %v1980 = vld [vmem:[#allocation13 + $0x78] sm:$0xff]
    %v1981 = vld [vmem:[#allocation13 + $0x80] sm:$0xff]
    %v1982 = vld [vmem:[#allocation13 + $0x88] sm:$0xff]
    %v1983 = vld [vmem:[#allocation13 + $0x90] sm:$0xff]
    %v1984 = vld [vmem:[#allocation13 + $0x98] sm:$0xff]
    %v1985 = vld [vmem:[#allocation13 + $0xa0] sm:$0xff]
    %v1986 = vld [vmem:[#allocation13 + $0xa8] sm:$0xff]
    %v1987 = vld [vmem:[#allocation13 + $0xb0] sm:$0xff]
    %v1988 = vld [vmem:[#allocation13 + $0xb8] sm:$0xff]
    %v1989 = vld [vmem:[#allocation13 + $0xc0] sm:$0xff]
    %v1990 = vld [vmem:[#allocation13 + $0xc8] sm:$0xff]
    %v1991 = vld [vmem:[#allocation13 + $0xd0] sm:$0xff]
    %v1992 = vld [vmem:[#allocation13 + $0xd8] sm:$0xff]
    %v1993 = vld [vmem:[#allocation13 + $0xe0] sm:$0xff]
    %v1994 = vld [vmem:[#allocation13 + $0xe8] sm:$0xff]
    %v1995 = vld [vmem:[#allocation13 + $0xf0] sm:$0xff]
    %v1996 = vld [vmem:[#allocation13 + $0xf8] sm:$0xff]
    %v2029 = vunpack.c.l.b16 %v1965
    %v2030 = vunpack.c.h.b16 %v1965
    %v2031 = vunpack.c.l.b16 %v1966
    %v2032 = vunpack.c.h.b16 %v1966
    %v2033 = vunpack.c.l.b16 %v1967
    %v2034 = vunpack.c.h.b16 %v1967
    %v2035 = vunpack.c.l.b16 %v1968
    %v2036 = vunpack.c.h.b16 %v1968
    %v2037 = vunpack.c.l.b16 %v1969
    %v2038 = vunpack.c.h.b16 %v1969
    %v2039 = vunpack.c.l.b16 %v1970
    %v2040 = vunpack.c.h.b16 %v1970
    %v2041 = vunpack.c.l.b16 %v1971
    %v2042 = vunpack.c.h.b16 %v1971
    %v2043 = vunpack.c.l.b16 %v1972
    %v2044 = vunpack.c.h.b16 %v1972
    %v2045 = vunpack.c.l.b16 %v1973
    %v2046 = vunpack.c.h.b16 %v1973
    %v2047 = vunpack.c.l.b16 %v1974
    %v2048 = vunpack.c.h.b16 %v1974
    %v2049 = vunpack.c.l.b16 %v1975
    %v2050 = vunpack.c.h.b16 %v1975
    %v2051 = vunpack.c.l.b16 %v1976
    %v2052 = vunpack.c.h.b16 %v1976
    %v2053 = vunpack.c.l.b16 %v1977
    %v2054 = vunpack.c.h.b16 %v1977
    %v2055 = vunpack.c.l.b16 %v1978
    %v2056 = vunpack.c.h.b16 %v1978
    %v2057 = vunpack.c.l.b16 %v1979
    %v2058 = vunpack.c.h.b16 %v1979
    %v2059 = vunpack.c.l.b16 %v1980
    %v2060 = vunpack.c.h.b16 %v1980
    %v2061 = vunpack.c.l.b16 %v1981
    %v2062 = vunpack.c.h.b16 %v1981
    %v2063 = vunpack.c.l.b16 %v1982
    %v2064 = vunpack.c.h.b16 %v1982
    %v2065 = vunpack.c.l.b16 %v1983
    %v2066 = vunpack.c.h.b16 %v1983
    %v2067 = vunpack.c.l.b16 %v1984
    %v2068 = vunpack.c.h.b16 %v1984
    %v2069 = vunpack.c.l.b16 %v1985
    %v2070 = vunpack.c.h.b16 %v1985
    %v2071 = vunpack.c.l.b16 %v1986
    %v2072 = vunpack.c.h.b16 %v1986
    %v2073 = vunpack.c.l.b16 %v1987
    %v2074 = vunpack.c.h.b16 %v1987
    %v2075 = vunpack.c.l.b16 %v1988
    %v2076 = vunpack.c.h.b16 %v1988
    %v2077 = vunpack.c.l.b16 %v1989
    %v2078 = vunpack.c.h.b16 %v1989
    %v2079 = vunpack.c.l.b16 %v1990
    %v2080 = vunpack.c.h.b16 %v1990
    %v2081 = vunpack.c.l.b16 %v1991
    %v2082 = vunpack.c.h.b16 %v1991
    %v2083 = vunpack.c.l.b16 %v1992
    %v2084 = vunpack.c.h.b16 %v1992
    %v2085 = vunpack.c.l.b16 %v1993
    %v2086 = vunpack.c.h.b16 %v1993
    %v2087 = vunpack.c.l.b16 %v1994
    %v2088 = vunpack.c.h.b16 %v1994
    %v2089 = vunpack.c.l.b16 %v1995
    %v2090 = vunpack.c.h.b16 %v1995
    %v2091 = vunpack.c.l.b16 %v1996
    %v2092 = vunpack.c.h.b16 %v1996
    %v2093 = vpack.c.b16 %v2033, %v2029
    %v2094 = vpack.c.b16 %v2034, %v2030
    %v2095 = vpack.c.b16 %v2035, %v2031
    %v2096 = vpack.c.b16 %v2036, %v2032
    %v2097 = vpack.c.b16 %v2041, %v2037
    %v2098 = vpack.c.b16 %v2042, %v2038
    %v2099 = vpack.c.b16 %v2043, %v2039
    %v2100 = vpack.c.b16 %v2044, %v2040
    %v2101 = vpack.c.b16 %v2049, %v2045
    %v2102 = vpack.c.b16 %v2050, %v2046
    %v2103 = vpack.c.b16 %v2051, %v2047
    %v2104 = vpack.c.b16 %v2052, %v2048
    %v2105 = vpack.c.b16 %v2057, %v2053
    %v2106 = vpack.c.b16 %v2058, %v2054
    %v2107 = vpack.c.b16 %v2059, %v2055
    %v2108 = vpack.c.b16 %v2060, %v2056
    %v2109 = vpack.c.b16 %v2065, %v2061
    %v2110 = vpack.c.b16 %v2066, %v2062
    %v2111 = vpack.c.b16 %v2067, %v2063
    %v2112 = vpack.c.b16 %v2068, %v2064
    %v2113 = vpack.c.b16 %v2073, %v2069
    %v2114 = vpack.c.b16 %v2074, %v2070
    %v2115 = vpack.c.b16 %v2075, %v2071
    %v2116 = vpack.c.b16 %v2076, %v2072
    %v2117 = vpack.c.b16 %v2081, %v2077
    %v2118 = vpack.c.b16 %v2082, %v2078
    %v2119 = vpack.c.b16 %v2083, %v2079
    %v2120 = vpack.c.b16 %v2084, %v2080
    %v2121 = vpack.c.b16 %v2089, %v2085
    %v2122 = vpack.c.b16 %v2090, %v2086
    %v2123 = vpack.c.b16 %v2091, %v2087
    %v2124 = vpack.c.b16 %v2092, %v2088
    %2157 = vmatprep.subr.bf16.mxu0 %v2122
    %2158 = vmatpush1.bf16.msra.mxu0 %v2121
    %2159 = vmatprep.subr.bf16.mxu0 %v2118
    %2160 = vmatpush1.bf16.msra.mxu0 %v2117
    %2161 = vmatprep.subr.bf16.mxu0 %v2114
    %2162 = vmatpush1.bf16.msra.mxu0 %v2113
    %2163 = vmatprep.subr.bf16.mxu0 %v2110
    %2164 = vmatpush1.bf16.msra.mxu0 %v2109
    %2165 = vmatprep.subr.bf16.mxu0 %v2106
    %2166 = vmatpush1.bf16.msra.mxu0 %v2105
    %2167 = vmatprep.subr.bf16.mxu0 %v2102
    %2168 = vmatpush1.bf16.msra.mxu0 %v2101
    %2169 = vmatprep.subr.bf16.mxu0 %v2098
    %2170 = vmatpush1.bf16.msra.mxu0 %v2097
    %2171 = vmatprep.subr.bf16.mxu0 %v2094
    %2172 = vmatpush1.bf16.msra.mxu0 %v2093
    %2173 = vmatprep.subr.bf16.mxu0 0
    %2174 = vmatpush2.bf16.msra.mxu0 0
    %2175 = vmatprep.subr.bf16.mxu0 0
    %2176 = vmatpush2.bf16.msra.mxu0 0
    %2177 = vmatprep.subr.bf16.mxu0 0
    %2178 = vmatpush2.bf16.msra.mxu0 0
    %2179 = vmatprep.subr.bf16.mxu0 0
    %2180 = vmatpush2.bf16.msra.mxu0 0
    %2181 = vmatprep.subr.bf16.mxu0 0
    %2182 = vmatpush2.bf16.msra.mxu0 0
    %2183 = vmatprep.subr.bf16.mxu0 0
    %2184 = vmatpush2.bf16.msra.mxu0 0
    %2185 = vmatprep.subr.bf16.mxu0 0
    %2186 = vmatpush2.bf16.msra.mxu0 0
    %2187 = vmatprep.subr.bf16.mxu0 0
    %2188 = vmatpush2.bf16.msra.mxu0 0
    %2189 = vmatprep.mubr.bf16.mxu0 0
    %2190 = vmatmul.mubr.bf16.gmra.mxu0 %v1964
    %v2191 = vpop.f32.mrf.mxu0
    %v2192 = vadd.f32 0.0, %v2191
    %v2193 = vpop.f32.mrf.mxu0
    %v2194 = vadd.f32 0.0, %v2193
    %v2195 = vpop.f32.mrf.mxu0
    %v2196 = vpop.f32.mrf.mxu0
    %2197 = vdwg.mxu0
    %2198 = vmatprep.subr.bf16.mxu0 %v2124
    %2199 = vmatpush1.bf16.msra.mxu0 %v2123
    %2200 = vmatprep.subr.bf16.mxu0 %v2120
    %2201 = vmatpush1.bf16.msra.mxu0 %v2119
    %2202 = vmatprep.subr.bf16.mxu0 %v2116
    %2203 = vmatpush1.bf16.msra.mxu0 %v2115
    %2204 = vmatprep.subr.bf16.mxu0 %v2112
    %2205 = vmatpush1.bf16.msra.mxu0 %v2111
    %2206 = vmatprep.subr.bf16.mxu0 %v2108
    %2207 = vmatpush1.bf16.msra.mxu0 %v2107
    %2208 = vmatprep.subr.bf16.mxu0 %v2104
    %2209 = vmatpush1.bf16.msra.mxu0 %v2103
    %2210 = vmatprep.subr.bf16.mxu0 %v2100
    %2211 = vmatpush1.bf16.msra.mxu0 %v2099
    %2212 = vmatprep.subr.bf16.mxu0 %v2096
    %2213 = vmatpush1.bf16.msra.mxu0 %v2095
    %2214 = vmatprep.subr.bf16.mxu0 0
    %2215 = vmatpush2.bf16.msra.mxu0 0
    %2216 = vmatprep.subr.bf16.mxu0 0
    %2217 = vmatpush2.bf16.msra.mxu0 0
    %2218 = vmatprep.subr.bf16.mxu0 0
    %2219 = vmatpush2.bf16.msra.mxu0 0
    %2220 = vmatprep.subr.bf16.mxu0 0
    %2221 = vmatpush2.bf16.msra.mxu0 0
    %2222 = vmatprep.subr.bf16.mxu0 0
    %2223 = vmatpush2.bf16.msra.mxu0 0
    %2224 = vmatprep.subr.bf16.mxu0 0
    %2225 = vmatpush2.bf16.msra.mxu0 0
    %2226 = vmatprep.subr.bf16.mxu0 0
    %2227 = vmatpush2.bf16.msra.mxu0 0
    %2228 = vmatprep.subr.bf16.mxu0 0
    %2229 = vmatpush2.bf16.msra.mxu0 0
    %2230 = vmatprep.mubr.bf16.mxu0 0
    %2231 = vmatmul.mubr.bf16.gmra.mxu0 %v1964
    %v2232 = vpop.f32.mrf.mxu0
    %v2233 = vadd.f32 0.0, %v2232
    %v2234 = vpop.f32.mrf.mxu0
    %v2235 = vadd.f32 0.0, %v2234
    %v2236 = vpop.f32.mrf.mxu0
    %v2237 = vpop.f32.mrf.mxu0
    %2238 = vdwg.mxu0
    %v2239 = vadd.f32 %v1960, %v2192
    %v2240 = vadd.f32 %v1961, %v2194
    %v2241 = vadd.f32 %v1962, %v2233
    %v2242 = vadd.f32 %v1963, %v2235
    %v2243 = vtanh.pop %v2239
    %v2244 = vtanh.pop %v2240
    %v2245 = vtanh.pop %v2241
    %v2246 = vtanh.pop %v2242
    %v2247 = vmul.f32 %v2243, 0.5
    %v2248 = vadd.f32 %v2247, 0.5
    %v2249 = vmul.f32 %v2244, 0.5
    %v2250 = vadd.f32 %v2249, 0.5
    %v2251 = vmul.f32 %v2246, 0.5
    %v2252 = vadd.f32 %v2251, 0.5
    %v2253 = vmul.f32 %v2250, %v1952
    %v2254 = vmul.f32 %v2248, %v2245
    %v2255 = vadd.f32 %v2253, %v2254
    %v2256 = vtanh.pop %v2255
    %v2257 = vmul.f32 %v2252, %v2256
    %s2258 = scalar_lea.vmem [#allocation6], 40
    %2259 = vst [vmem:[%s2258] sm:$0xff] %v2257
    %s2260 = smul.u32 6, 4
    %s2261 = smul.addr %s2260, 8
    %s2262 = scalar_lea.vmem [#allocation7], %s2261
    %v2263 = vld [vmem:[%s2262] sm:$0xff]
    %v2264 = vld [vmem:[%s2262 + $0x8] sm:$0xff]
    %v2265 = vld [vmem:[%s2262 + $0x10] sm:$0xff]
    %v2266 = vld [vmem:[%s2262 + $0x18] sm:$0xff]
    %v2267 = vpack.c.bf16 %v2257, %v2257
    %v2268 = vld [vmem:[#allocation13] sm:$0xff]
    %v2269 = vld [vmem:[#allocation13 + $0x8] sm:$0xff]
    %v2270 = vld [vmem:[#allocation13 + $0x10] sm:$0xff]
    %v2271 = vld [vmem:[#allocation13 + $0x18] sm:$0xff]
    %v2272 = vld [vmem:[#allocation13 + $0x20] sm:$0xff]
    %v2273 = vld [vmem:[#allocation13 + $0x28] sm:$0xff]
    %v2274 = vld [vmem:[#allocation13 + $0x30] sm:$0xff]
    %v2275 = vld [vmem:[#allocation13 + $0x38] sm:$0xff]
    %v2276 = vld [vmem:[#allocation13 + $0x40] sm:$0xff]
    %v2277 = vld [vmem:[#allocation13 + $0x48] sm:$0xff]
    %v2278 = vld [vmem:[#allocation13 + $0x50] sm:$0xff]
    %v2279 = vld [vmem:[#allocation13 + $0x58] sm:$0xff]
    %v2280 = vld [vmem:[#allocation13 + $0x60] sm:$0xff]
    %v2281 = vld [vmem:[#allocation13 + $0x68] sm:$0xff]
    %v2282 = vld [vmem:[#allocation13 + $0x70] sm:$0xff]
    %v2283 = vld [vmem:[#allocation13 + $0x78] sm:$0xff]
    %v2284 = vld [vmem:[#allocation13 + $0x80] sm:$0xff]
    %v2285 = vld [vmem:[#allocation13 + $0x88] sm:$0xff]
    %v2286 = vld [vmem:[#allocation13 + $0x90] sm:$0xff]
    %v2287 = vld [vmem:[#allocation13 + $0x98] sm:$0xff]
    %v2288 = vld [vmem:[#allocation13 + $0xa0] sm:$0xff]
    %v2289 = vld [vmem:[#allocation13 + $0xa8] sm:$0xff]
    %v2290 = vld [vmem:[#allocation13 + $0xb0] sm:$0xff]
    %v2291 = vld [vmem:[#allocation13 + $0xb8] sm:$0xff]
    %v2292 = vld [vmem:[#allocation13 + $0xc0] sm:$0xff]
    %v2293 = vld [vmem:[#allocation13 + $0xc8] sm:$0xff]
    %v2294 = vld [vmem:[#allocation13 + $0xd0] sm:$0xff]
    %v2295 = vld [vmem:[#allocation13 + $0xd8] sm:$0xff]
    %v2296 = vld [vmem:[#allocation13 + $0xe0] sm:$0xff]
    %v2297 = vld [vmem:[#allocation13 + $0xe8] sm:$0xff]
    %v2298 = vld [vmem:[#allocation13 + $0xf0] sm:$0xff]
    %v2299 = vld [vmem:[#allocation13 + $0xf8] sm:$0xff]
    %v2332 = vunpack.c.l.b16 %v2268
    %v2333 = vunpack.c.h.b16 %v2268
    %v2334 = vunpack.c.l.b16 %v2269
    %v2335 = vunpack.c.h.b16 %v2269
    %v2336 = vunpack.c.l.b16 %v2270
    %v2337 = vunpack.c.h.b16 %v2270
    %v2338 = vunpack.c.l.b16 %v2271
    %v2339 = vunpack.c.h.b16 %v2271
    %v2340 = vunpack.c.l.b16 %v2272
    %v2341 = vunpack.c.h.b16 %v2272
    %v2342 = vunpack.c.l.b16 %v2273
    %v2343 = vunpack.c.h.b16 %v2273
    %v2344 = vunpack.c.l.b16 %v2274
    %v2345 = vunpack.c.h.b16 %v2274
    %v2346 = vunpack.c.l.b16 %v2275
    %v2347 = vunpack.c.h.b16 %v2275
    %v2348 = vunpack.c.l.b16 %v2276
    %v2349 = vunpack.c.h.b16 %v2276
    %v2350 = vunpack.c.l.b16 %v2277
    %v2351 = vunpack.c.h.b16 %v2277
    %v2352 = vunpack.c.l.b16 %v2278
    %v2353 = vunpack.c.h.b16 %v2278
    %v2354 = vunpack.c.l.b16 %v2279
    %v2355 = vunpack.c.h.b16 %v2279
    %v2356 = vunpack.c.l.b16 %v2280
    %v2357 = vunpack.c.h.b16 %v2280
    %v2358 = vunpack.c.l.b16 %v2281
    %v2359 = vunpack.c.h.b16 %v2281
    %v2360 = vunpack.c.l.b16 %v2282
    %v2361 = vunpack.c.h.b16 %v2282
    %v2362 = vunpack.c.l.b16 %v2283
    %v2363 = vunpack.c.h.b16 %v2283
    %v2364 = vunpack.c.l.b16 %v2284
    %v2365 = vunpack.c.h.b16 %v2284
    %v2366 = vunpack.c.l.b16 %v2285
    %v2367 = vunpack.c.h.b16 %v2285
    %v2368 = vunpack.c.l.b16 %v2286
    %v2369 = vunpack.c.h.b16 %v2286
    %v2370 = vunpack.c.l.b16 %v2287
    %v2371 = vunpack.c.h.b16 %v2287
    %v2372 = vunpack.c.l.b16 %v2288
    %v2373 = vunpack.c.h.b16 %v2288
    %v2374 = vunpack.c.l.b16 %v2289
    %v2375 = vunpack.c.h.b16 %v2289
    %v2376 = vunpack.c.l.b16 %v2290
    %v2377 = vunpack.c.h.b16 %v2290
    %v2378 = vunpack.c.l.b16 %v2291
    %v2379 = vunpack.c.h.b16 %v2291
    %v2380 = vunpack.c.l.b16 %v2292
    %v2381 = vunpack.c.h.b16 %v2292
    %v2382 = vunpack.c.l.b16 %v2293
    %v2383 = vunpack.c.h.b16 %v2293
    %v2384 = vunpack.c.l.b16 %v2294
    %v2385 = vunpack.c.h.b16 %v2294
    %v2386 = vunpack.c.l.b16 %v2295
    %v2387 = vunpack.c.h.b16 %v2295
    %v2388 = vunpack.c.l.b16 %v2296
    %v2389 = vunpack.c.h.b16 %v2296
    %v2390 = vunpack.c.l.b16 %v2297
    %v2391 = vunpack.c.h.b16 %v2297
    %v2392 = vunpack.c.l.b16 %v2298
    %v2393 = vunpack.c.h.b16 %v2298
    %v2394 = vunpack.c.l.b16 %v2299
    %v2395 = vunpack.c.h.b16 %v2299
    %v2396 = vpack.c.b16 %v2336, %v2332
    %v2397 = vpack.c.b16 %v2337, %v2333
    %v2398 = vpack.c.b16 %v2338, %v2334
    %v2399 = vpack.c.b16 %v2339, %v2335
    %v2400 = vpack.c.b16 %v2344, %v2340
    %v2401 = vpack.c.b16 %v2345, %v2341
    %v2402 = vpack.c.b16 %v2346, %v2342
    %v2403 = vpack.c.b16 %v2347, %v2343
    %v2404 = vpack.c.b16 %v2352, %v2348
    %v2405 = vpack.c.b16 %v2353, %v2349
    %v2406 = vpack.c.b16 %v2354, %v2350
    %v2407 = vpack.c.b16 %v2355, %v2351
    %v2408 = vpack.c.b16 %v2360, %v2356
    %v2409 = vpack.c.b16 %v2361, %v2357
    %v2410 = vpack.c.b16 %v2362, %v2358
    %v2411 = vpack.c.b16 %v2363, %v2359
    %v2412 = vpack.c.b16 %v2368, %v2364
    %v2413 = vpack.c.b16 %v2369, %v2365
    %v2414 = vpack.c.b16 %v2370, %v2366
    %v2415 = vpack.c.b16 %v2371, %v2367
    %v2416 = vpack.c.b16 %v2376, %v2372
    %v2417 = vpack.c.b16 %v2377, %v2373
    %v2418 = vpack.c.b16 %v2378, %v2374
    %v2419 = vpack.c.b16 %v2379, %v2375
    %v2420 = vpack.c.b16 %v2384, %v2380
    %v2421 = vpack.c.b16 %v2385, %v2381
    %v2422 = vpack.c.b16 %v2386, %v2382
    %v2423 = vpack.c.b16 %v2387, %v2383
    %v2424 = vpack.c.b16 %v2392, %v2388
    %v2425 = vpack.c.b16 %v2393, %v2389
    %v2426 = vpack.c.b16 %v2394, %v2390
    %v2427 = vpack.c.b16 %v2395, %v2391
    %2460 = vmatprep.subr.bf16.mxu0 %v2425
    %2461 = vmatpush1.bf16.msra.mxu0 %v2424
    %2462 = vmatprep.subr.bf16.mxu0 %v2421
    %2463 = vmatpush1.bf16.msra.mxu0 %v2420
    %2464 = vmatprep.subr.bf16.mxu0 %v2417
    %2465 = vmatpush1.bf16.msra.mxu0 %v2416
    %2466 = vmatprep.subr.bf16.mxu0 %v2413
    %2467 = vmatpush1.bf16.msra.mxu0 %v2412
    %2468 = vmatprep.subr.bf16.mxu0 %v2409
    %2469 = vmatpush1.bf16.msra.mxu0 %v2408
    %2470 = vmatprep.subr.bf16.mxu0 %v2405
    %2471 = vmatpush1.bf16.msra.mxu0 %v2404
    %2472 = vmatprep.subr.bf16.mxu0 %v2401
    %2473 = vmatpush1.bf16.msra.mxu0 %v2400
    %2474 = vmatprep.subr.bf16.mxu0 %v2397
    %2475 = vmatpush1.bf16.msra.mxu0 %v2396
    %2476 = vmatprep.subr.bf16.mxu0 0
    %2477 = vmatpush2.bf16.msra.mxu0 0
    %2478 = vmatprep.subr.bf16.mxu0 0
    %2479 = vmatpush2.bf16.msra.mxu0 0
    %2480 = vmatprep.subr.bf16.mxu0 0
    %2481 = vmatpush2.bf16.msra.mxu0 0
    %2482 = vmatprep.subr.bf16.mxu0 0
    %2483 = vmatpush2.bf16.msra.mxu0 0
    %2484 = vmatprep.subr.bf16.mxu0 0
    %2485 = vmatpush2.bf16.msra.mxu0 0
    %2486 = vmatprep.subr.bf16.mxu0 0
    %2487 = vmatpush2.bf16.msra.mxu0 0
    %2488 = vmatprep.subr.bf16.mxu0 0
    %2489 = vmatpush2.bf16.msra.mxu0 0
    %2490 = vmatprep.subr.bf16.mxu0 0
    %2491 = vmatpush2.bf16.msra.mxu0 0
    %2492 = vmatprep.mubr.bf16.mxu0 0
    %2493 = vmatmul.mubr.bf16.gmra.mxu0 %v2267
    %v2494 = vpop.f32.mrf.mxu0
    %v2495 = vadd.f32 0.0, %v2494
    %v2496 = vpop.f32.mrf.mxu0
    %v2497 = vadd.f32 0.0, %v2496
    %v2498 = vpop.f32.mrf.mxu0
    %v2499 = vpop.f32.mrf.mxu0
    %2500 = vdwg.mxu0
    %2501 = vmatprep.subr.bf16.mxu0 %v2427
    %2502 = vmatpush1.bf16.msra.mxu0 %v2426
    %2503 = vmatprep.subr.bf16.mxu0 %v2423
    %2504 = vmatpush1.bf16.msra.mxu0 %v2422
    %2505 = vmatprep.subr.bf16.mxu0 %v2419
    %2506 = vmatpush1.bf16.msra.mxu0 %v2418
    %2507 = vmatprep.subr.bf16.mxu0 %v2415
    %2508 = vmatpush1.bf16.msra.mxu0 %v2414
    %2509 = vmatprep.subr.bf16.mxu0 %v2411
    %2510 = vmatpush1.bf16.msra.mxu0 %v2410
    %2511 = vmatprep.subr.bf16.mxu0 %v2407
    %2512 = vmatpush1.bf16.msra.mxu0 %v2406
    %2513 = vmatprep.subr.bf16.mxu0 %v2403
    %2514 = vmatpush1.bf16.msra.mxu0 %v2402
    %2515 = vmatprep.subr.bf16.mxu0 %v2399
    %2516 = vmatpush1.bf16.msra.mxu0 %v2398
    %2517 = vmatprep.subr.bf16.mxu0 0
    %2518 = vmatpush2.bf16.msra.mxu0 0
    %2519 = vmatprep.subr.bf16.mxu0 0
    %2520 = vmatpush2.bf16.msra.mxu0 0
    %2521 = vmatprep.subr.bf16.mxu0 0
    %2522 = vmatpush2.bf16.msra.mxu0 0
    %2523 = vmatprep.subr.bf16.mxu0 0
    %2524 = vmatpush2.bf16.msra.mxu0 0
    %2525 = vmatprep.subr.bf16.mxu0 0
    %2526 = vmatpush2.bf16.msra.mxu0 0
    %2527 = vmatprep.subr.bf16.mxu0 0
    %2528 = vmatpush2.bf16.msra.mxu0 0
    %2529 = vmatprep.subr.bf16.mxu0 0
    %2530 = vmatpush2.bf16.msra.mxu0 0
    %2531 = vmatprep.subr.bf16.mxu0 0
    %2532 = vmatpush2.bf16.msra.mxu0 0
    %2533 = vmatprep.mubr.bf16.mxu0 0
    %2534 = vmatmul.mubr.bf16.gmra.mxu0 %v2267
    %v2535 = vpop.f32.mrf.mxu0
    %v2536 = vadd.f32 0.0, %v2535
    %v2537 = vpop.f32.mrf.mxu0
    %v2538 = vadd.f32 0.0, %v2537
    %v2539 = vpop.f32.mrf.mxu0
    %v2540 = vpop.f32.mrf.mxu0
    %2541 = vdwg.mxu0
    %v2542 = vadd.f32 %v2263, %v2495
    %v2543 = vadd.f32 %v2264, %v2497
    %v2544 = vadd.f32 %v2265, %v2536
    %v2545 = vadd.f32 %v2266, %v2538
    %v2546 = vtanh.pop %v2542
    %v2547 = vtanh.pop %v2543
    %v2548 = vtanh.pop %v2544
    %v2549 = vtanh.pop %v2545
    %v2550 = vmul.f32 %v2546, 0.5
    %v2551 = vadd.f32 %v2550, 0.5
    %v2552 = vmul.f32 %v2547, 0.5
    %v2553 = vadd.f32 %v2552, 0.5
    %v2554 = vmul.f32 %v2549, 0.5
    %v2555 = vadd.f32 %v2554, 0.5
    %v2556 = vmul.f32 %v2553, %v2255
    %v2557 = vmul.f32 %v2551, %v2548
    %v2558 = vadd.f32 %v2556, %v2557
    %v2559 = vtanh.pop %v2558
    %v2560 = vmul.f32 %v2555, %v2559
    %s2561 = scalar_lea.vmem [#allocation6], 48
    %2562 = vst [vmem:[%s2561] sm:$0xff] %v2560
    %s2563 = smul.u32 7, 4
    %s2564 = smul.addr %s2563, 8
    %s2565 = scalar_lea.vmem [#allocation7], %s2564
    %v2566 = vld [vmem:[%s2565] sm:$0xff]
    %v2567 = vld [vmem:[%s2565 + $0x8] sm:$0xff]
    %v2568 = vld [vmem:[%s2565 + $0x10] sm:$0xff]
    %v2569 = vld [vmem:[%s2565 + $0x18] sm:$0xff]
    %v2570 = vpack.c.bf16 %v2560, %v2560
    %v2571 = vld [vmem:[#allocation13] sm:$0xff]
    %v2572 = vld [vmem:[#allocation13 + $0x8] sm:$0xff]
    %v2573 = vld [vmem:[#allocation13 + $0x10] sm:$0xff]
    %v2574 = vld [vmem:[#allocation13 + $0x18] sm:$0xff]
    %v2575 = vld [vmem:[#allocation13 + $0x20] sm:$0xff]
    %v2576 = vld [vmem:[#allocation13 + $0x28] sm:$0xff]
    %v2577 = vld [vmem:[#allocation13 + $0x30] sm:$0xff]
    %v2578 = vld [vmem:[#allocation13 + $0x38] sm:$0xff]
    %v2579 = vld [vmem:[#allocation13 + $0x40] sm:$0xff]
    %v2580 = vld [vmem:[#allocation13 + $0x48] sm:$0xff]
    %v2581 = vld [vmem:[#allocation13 + $0x50] sm:$0xff]
    %v2582 = vld [vmem:[#allocation13 + $0x58] sm:$0xff]
    %v2583 = vld [vmem:[#allocation13 + $0x60] sm:$0xff]
    %v2584 = vld [vmem:[#allocation13 + $0x68] sm:$0xff]
    %v2585 = vld [vmem:[#allocation13 + $0x70] sm:$0xff]
    %v2586 = vld [vmem:[#allocation13 + $0x78] sm:$0xff]
    %v2587 = vld [vmem:[#allocation13 + $0x80] sm:$0xff]
    %v2588 = vld [vmem:[#allocation13 + $0x88] sm:$0xff]
    %v2589 = vld [vmem:[#allocation13 + $0x90] sm:$0xff]
    %v2590 = vld [vmem:[#allocation13 + $0x98] sm:$0xff]
    %v2591 = vld [vmem:[#allocation13 + $0xa0] sm:$0xff]
    %v2592 = vld [vmem:[#allocation13 + $0xa8] sm:$0xff]
    %v2593 = vld [vmem:[#allocation13 + $0xb0] sm:$0xff]
    %v2594 = vld [vmem:[#allocation13 + $0xb8] sm:$0xff]
    %v2595 = vld [vmem:[#allocation13 + $0xc0] sm:$0xff]
    %v2596 = vld [vmem:[#allocation13 + $0xc8] sm:$0xff]
    %v2597 = vld [vmem:[#allocation13 + $0xd0] sm:$0xff]
    %v2598 = vld [vmem:[#allocation13 + $0xd8] sm:$0xff]
    %v2599 = vld [vmem:[#allocation13 + $0xe0] sm:$0xff]
    %v2600 = vld [vmem:[#allocation13 + $0xe8] sm:$0xff]
    %v2601 = vld [vmem:[#allocation13 + $0xf0] sm:$0xff]
    %v2602 = vld [vmem:[#allocation13 + $0xf8] sm:$0xff]
    %v2635 = vunpack.c.l.b16 %v2571
    %v2636 = vunpack.c.h.b16 %v2571
    %v2637 = vunpack.c.l.b16 %v2572
    %v2638 = vunpack.c.h.b16 %v2572
    %v2639 = vunpack.c.l.b16 %v2573
    %v2640 = vunpack.c.h.b16 %v2573
    %v2641 = vunpack.c.l.b16 %v2574
    %v2642 = vunpack.c.h.b16 %v2574
    %v2643 = vunpack.c.l.b16 %v2575
    %v2644 = vunpack.c.h.b16 %v2575
    %v2645 = vunpack.c.l.b16 %v2576
    %v2646 = vunpack.c.h.b16 %v2576
    %v2647 = vunpack.c.l.b16 %v2577
    %v2648 = vunpack.c.h.b16 %v2577
    %v2649 = vunpack.c.l.b16 %v2578
    %v2650 = vunpack.c.h.b16 %v2578
    %v2651 = vunpack.c.l.b16 %v2579
    %v2652 = vunpack.c.h.b16 %v2579
    %v2653 = vunpack.c.l.b16 %v2580
    %v2654 = vunpack.c.h.b16 %v2580
    %v2655 = vunpack.c.l.b16 %v2581
    %v2656 = vunpack.c.h.b16 %v2581
    %v2657 = vunpack.c.l.b16 %v2582
    %v2658 = vunpack.c.h.b16 %v2582
    %v2659 = vunpack.c.l.b16 %v2583
    %v2660 = vunpack.c.h.b16 %v2583
    %v2661 = vunpack.c.l.b16 %v2584
    %v2662 = vunpack.c.h.b16 %v2584
    %v2663 = vunpack.c.l.b16 %v2585
    %v2664 = vunpack.c.h.b16 %v2585
    %v2665 = vunpack.c.l.b16 %v2586
    %v2666 = vunpack.c.h.b16 %v2586
    %v2667 = vunpack.c.l.b16 %v2587
    %v2668 = vunpack.c.h.b16 %v2587
    %v2669 = vunpack.c.l.b16 %v2588
    %v2670 = vunpack.c.h.b16 %v2588
    %v2671 = vunpack.c.l.b16 %v2589
    %v2672 = vunpack.c.h.b16 %v2589
    %v2673 = vunpack.c.l.b16 %v2590
    %v2674 = vunpack.c.h.b16 %v2590
    %v2675 = vunpack.c.l.b16 %v2591
    %v2676 = vunpack.c.h.b16 %v2591
    %v2677 = vunpack.c.l.b16 %v2592
    %v2678 = vunpack.c.h.b16 %v2592
    %v2679 = vunpack.c.l.b16 %v2593
    %v2680 = vunpack.c.h.b16 %v2593
    %v2681 = vunpack.c.l.b16 %v2594
    %v2682 = vunpack.c.h.b16 %v2594
    %v2683 = vunpack.c.l.b16 %v2595
    %v2684 = vunpack.c.h.b16 %v2595
    %v2685 = vunpack.c.l.b16 %v2596
    %v2686 = vunpack.c.h.b16 %v2596
    %v2687 = vunpack.c.l.b16 %v2597
    %v2688 = vunpack.c.h.b16 %v2597
    %v2689 = vunpack.c.l.b16 %v2598
    %v2690 = vunpack.c.h.b16 %v2598
    %v2691 = vunpack.c.l.b16 %v2599
    %v2692 = vunpack.c.h.b16 %v2599
    %v2693 = vunpack.c.l.b16 %v2600
    %v2694 = vunpack.c.h.b16 %v2600
    %v2695 = vunpack.c.l.b16 %v2601
    %v2696 = vunpack.c.h.b16 %v2601
    %v2697 = vunpack.c.l.b16 %v2602
    %v2698 = vunpack.c.h.b16 %v2602
    %v2699 = vpack.c.b16 %v2639, %v2635
    %v2700 = vpack.c.b16 %v2640, %v2636
    %v2701 = vpack.c.b16 %v2641, %v2637
    %v2702 = vpack.c.b16 %v2642, %v2638
    %v2703 = vpack.c.b16 %v2647, %v2643
    %v2704 = vpack.c.b16 %v2648, %v2644
    %v2705 = vpack.c.b16 %v2649, %v2645
    %v2706 = vpack.c.b16 %v2650, %v2646
    %v2707 = vpack.c.b16 %v2655, %v2651
    %v2708 = vpack.c.b16 %v2656, %v2652
    %v2709 = vpack.c.b16 %v2657, %v2653
    %v2710 = vpack.c.b16 %v2658, %v2654
    %v2711 = vpack.c.b16 %v2663, %v2659
    %v2712 = vpack.c.b16 %v2664, %v2660
    %v2713 = vpack.c.b16 %v2665, %v2661
    %v2714 = vpack.c.b16 %v2666, %v2662
    %v2715 = vpack.c.b16 %v2671, %v2667
    %v2716 = vpack.c.b16 %v2672, %v2668
    %v2717 = vpack.c.b16 %v2673, %v2669
    %v2718 = vpack.c.b16 %v2674, %v2670
    %v2719 = vpack.c.b16 %v2679, %v2675
    %v2720 = vpack.c.b16 %v2680, %v2676
    %v2721 = vpack.c.b16 %v2681, %v2677
    %v2722 = vpack.c.b16 %v2682, %v2678
    %v2723 = vpack.c.b16 %v2687, %v2683
    %v2724 = vpack.c.b16 %v2688, %v2684
    %v2725 = vpack.c.b16 %v2689, %v2685
    %v2726 = vpack.c.b16 %v2690, %v2686
    %v2727 = vpack.c.b16 %v2695, %v2691
    %v2728 = vpack.c.b16 %v2696, %v2692
    %v2729 = vpack.c.b16 %v2697, %v2693
    %v2730 = vpack.c.b16 %v2698, %v2694
    %2763 = vmatprep.subr.bf16.mxu0 %v2728
    %2764 = vmatpush1.bf16.msra.mxu0 %v2727
    %2765 = vmatprep.subr.bf16.mxu0 %v2724
    %2766 = vmatpush1.bf16.msra.mxu0 %v2723
    %2767 = vmatprep.subr.bf16.mxu0 %v2720
    %2768 = vmatpush1.bf16.msra.mxu0 %v2719
    %2769 = vmatprep.subr.bf16.mxu0 %v2716
    %2770 = vmatpush1.bf16.msra.mxu0 %v2715
    %2771 = vmatprep.subr.bf16.mxu0 %v2712
    %2772 = vmatpush1.bf16.msra.mxu0 %v2711
    %2773 = vmatprep.subr.bf16.mxu0 %v2708
    %2774 = vmatpush1.bf16.msra.mxu0 %v2707
    %2775 = vmatprep.subr.bf16.mxu0 %v2704
    %2776 = vmatpush1.bf16.msra.mxu0 %v2703
    %2777 = vmatprep.subr.bf16.mxu0 %v2700
    %2778 = vmatpush1.bf16.msra.mxu0 %v2699
    %2779 = vmatprep.subr.bf16.mxu0 0
    %2780 = vmatpush2.bf16.msra.mxu0 0
    %2781 = vmatprep.subr.bf16.mxu0 0
    %2782 = vmatpush2.bf16.msra.mxu0 0
    %2783 = vmatprep.subr.bf16.mxu0 0
    %2784 = vmatpush2.bf16.msra.mxu0 0
    %2785 = vmatprep.subr.bf16.mxu0 0
    %2786 = vmatpush2.bf16.msra.mxu0 0
    %2787 = vmatprep.subr.bf16.mxu0 0
    %2788 = vmatpush2.bf16.msra.mxu0 0
    %2789 = vmatprep.subr.bf16.mxu0 0
    %2790 = vmatpush2.bf16.msra.mxu0 0
    %2791 = vmatprep.subr.bf16.mxu0 0
    %2792 = vmatpush2.bf16.msra.mxu0 0
    %2793 = vmatprep.subr.bf16.mxu0 0
    %2794 = vmatpush2.bf16.msra.mxu0 0
    %2795 = vmatprep.mubr.bf16.mxu0 0
    %2796 = vmatmul.mubr.bf16.gmra.mxu0 %v2570
    %v2797 = vpop.f32.mrf.mxu0
    %v2798 = vadd.f32 0.0, %v2797
    %v2799 = vpop.f32.mrf.mxu0
    %v2800 = vadd.f32 0.0, %v2799
    %v2801 = vpop.f32.mrf.mxu0
    %v2802 = vpop.f32.mrf.mxu0
    %2803 = vdwg.mxu0
    %2804 = vmatprep.subr.bf16.mxu0 %v2730
    %2805 = vmatpush1.bf16.msra.mxu0 %v2729
    %2806 = vmatprep.subr.bf16.mxu0 %v2726
    %2807 = vmatpush1.bf16.msra.mxu0 %v2725
    %2808 = vmatprep.subr.bf16.mxu0 %v2722
    %2809 = vmatpush1.bf16.msra.mxu0 %v2721
    %2810 = vmatprep.subr.bf16.mxu0 %v2718
    %2811 = vmatpush1.bf16.msra.mxu0 %v2717
    %2812 = vmatprep.subr.bf16.mxu0 %v2714
    %2813 = vmatpush1.bf16.msra.mxu0 %v2713
    %2814 = vmatprep.subr.bf16.mxu0 %v2710
    %2815 = vmatpush1.bf16.msra.mxu0 %v2709
    %2816 = vmatprep.subr.bf16.mxu0 %v2706
    %2817 = vmatpush1.bf16.msra.mxu0 %v2705
    %2818 = vmatprep.subr.bf16.mxu0 %v2702
    %2819 = vmatpush1.bf16.msra.mxu0 %v2701
    %2820 = vmatprep.subr.bf16.mxu0 0
    %2821 = vmatpush2.bf16.msra.mxu0 0
    %2822 = vmatprep.subr.bf16.mxu0 0
    %2823 = vmatpush2.bf16.msra.mxu0 0
    %2824 = vmatprep.subr.bf16.mxu0 0
    %2825 = vmatpush2.bf16.msra.mxu0 0
    %2826 = vmatprep.subr.bf16.mxu0 0
    %2827 = vmatpush2.bf16.msra.mxu0 0
    %2828 = vmatprep.subr.bf16.mxu0 0
    %2829 = vmatpush2.bf16.msra.mxu0 0
    %2830 = vmatprep.subr.bf16.mxu0 0
    %2831 = vmatpush2.bf16.msra.mxu0 0
    %2832 = vmatprep.subr.bf16.mxu0 0
    %2833 = vmatpush2.bf16.msra.mxu0 0
    %2834 = vmatprep.subr.bf16.mxu0 0
    %2835 = vmatpush2.bf16.msra.mxu0 0
    %2836 = vmatprep.mubr.bf16.mxu0 0
    %2837 = vmatmul.mubr.bf16.gmra.mxu0 %v2570
    %v2838 = vpop.f32.mrf.mxu0
    %v2839 = vadd.f32 0.0, %v2838
    %v2840 = vpop.f32.mrf.mxu0
    %v2841 = vadd.f32 0.0, %v2840
    %v2842 = vpop.f32.mrf.mxu0
    %v2843 = vpop.f32.mrf.mxu0
    %2844 = vdwg.mxu0
    %v2845 = vadd.f32 %v2566, %v2798
    %v2846 = vadd.f32 %v2567, %v2800
    %v2847 = vadd.f32 %v2568, %v2839
    %v2848 = vadd.f32 %v2569, %v2841
    %v2849 = vtanh.pop %v2845
    %v2850 = vtanh.pop %v2846
    %v2851 = vtanh.pop %v2847
    %v2852 = vtanh.pop %v2848
    %v2853 = vmul.f32 %v2849, 0.5
    %v2854 = vadd.f32 %v2853, 0.5
    %v2855 = vmul.f32 %v2850, 0.5
    %v2856 = vadd.f32 %v2855, 0.5
    %v2857 = vmul.f32 %v2852, 0.5
    %v2858 = vadd.f32 %v2857, 0.5
    %v2859 = vmul.f32 %v2856, %v2558
    %v2860 = vmul.f32 %v2854, %v2851
    %v2861 = vadd.f32 %v2859, %v2860
    %v2862 = vtanh.pop %v2861
    %v2863 = vmul.f32 %v2858, %v2862
    %s2864 = scalar_lea.vmem [#allocation6], 56
    %2865 = vst [vmem:[%s2864] sm:$0xff] %v2863
    %2866 = vst [vmem:[#allocation2] sm:$0xff] %v2863
    %2867 = vst [vmem:[#allocation3] sm:$0xff] %v2861
    %v2868 = vld [vmem:[#allocation6] sm:$0xff]
    %v2869 = vld [vmem:[#allocation6 + $0x8] sm:$0xff]
    %v2870 = vld [vmem:[#allocation6 + $0x10] sm:$0xff]
    %v2871 = vld [vmem:[#allocation6 + $0x18] sm:$0xff]
    %v2872 = vld [vmem:[#allocation6 + $0x20] sm:$0xff]
    %v2873 = vld [vmem:[#allocation6 + $0x28] sm:$0xff]
    %v2874 = vld [vmem:[#allocation6 + $0x30] sm:$0xff]
    %v2875 = vld [vmem:[#allocation6 + $0x38] sm:$0xff]
    %v2876 = vpack.c.bf16 %v2869, %v2868
    %v2877 = vpack.c.bf16 %v2871, %v2870
    %v2878 = vpack.c.bf16 %v2873, %v2872
    %v2879 = vpack.c.bf16 %v2875, %v2874
    %v2880 = vld [vmem:[#allocation14] sm:$0xff]
    %v2881 = vld [vmem:[#allocation14 + $0x8] sm:$0xff]
    %v2882 = vld [vmem:[#allocation14 + $0x10] sm:$0xff]
    %v2883 = vld [vmem:[#allocation14 + $0x18] sm:$0xff]
    %v2884 = vld [vmem:[#allocation14 + $0x20] sm:$0xff]
    %v2885 = vld [vmem:[#allocation14 + $0x28] sm:$0xff]
    %v2886 = vld [vmem:[#allocation14 + $0x30] sm:$0xff]
    %v2887 = vld [vmem:[#allocation14 + $0x38] sm:$0xff]
    %v2888 = vld [vmem:[#allocation14 + $0x40] sm:$0xff]
    %v2889 = vld [vmem:[#allocation14 + $0x48] sm:$0xff]
    %v2890 = vld [vmem:[#allocation14 + $0x50] sm:$0xff]
    %v2891 = vld [vmem:[#allocation14 + $0x58] sm:$0xff]
    %v2892 = vld [vmem:[#allocation14 + $0x60] sm:$0xff]
    %v2893 = vld [vmem:[#allocation14 + $0x68] sm:$0xff]
    %v2894 = vld [vmem:[#allocation14 + $0x70] sm:$0xff]
    %v2895 = vld [vmem:[#allocation14 + $0x78] sm:$0xff]
    %v2896 = vld [vmem:[#allocation14 + $0x80] sm:$0xff]
    %v2897 = vld [vmem:[#allocation14 + $0x88] sm:$0xff]
    %v2898 = vld [vmem:[#allocation14 + $0x90] sm:$0xff]
    %v2899 = vld [vmem:[#allocation14 + $0x98] sm:$0xff]
    %v2900 = vld [vmem:[#allocation14 + $0xa0] sm:$0xff]
    %v2901 = vld [vmem:[#allocation14 + $0xa8] sm:$0xff]
    %v2902 = vld [vmem:[#allocation14 + $0xb0] sm:$0xff]
    %v2903 = vld [vmem:[#allocation14 + $0xb8] sm:$0xff]
    %v2904 = vld [vmem:[#allocation14 + $0xc0] sm:$0xff]
    %v2905 = vld [vmem:[#allocation14 + $0xc8] sm:$0xff]
    %v2906 = vld [vmem:[#allocation14 + $0xd0] sm:$0xff]
    %v2907 = vld [vmem:[#allocation14 + $0xd8] sm:$0xff]
    %v2908 = vld [vmem:[#allocation14 + $0xe0] sm:$0xff]
    %v2909 = vld [vmem:[#allocation14 + $0xe8] sm:$0xff]
    %v2910 = vld [vmem:[#allocation14 + $0xf0] sm:$0xff]
    %v2911 = vld [vmem:[#allocation14 + $0xf8] sm:$0xff]
    %v2912 = vld [vmem:[%s6] sm:$0xf]
    %v2914 = vlaneseq
    %v2915 = vshrl.u32 %v2914, 7
    %v2916 = vsub.s32 0, %v2915
    %v2917 = vrot.slane %v2912, %v2916
    %v2918 = vlaneseq
    %v2919 = vshrl.u32 %v2918, 7
    %v2920 = vsub.s32 1, %v2919
    %v2921 = vrot.slane %v2912, %v2920
    %v2922 = vlaneseq
    %v2923 = vshrl.u32 %v2922, 7
    %v2924 = vsub.s32 2, %v2923
    %v2925 = vrot.slane %v2912, %v2924
    %v2926 = vlaneseq
    %v2927 = vshrl.u32 %v2926, 7
    %v2928 = vsub.s32 3, %v2927
    %v2929 = vrot.slane %v2912, %v2928
    %v2966 = vunpack.c.l.b16 %v2880
    %v2967 = vunpack.c.h.b16 %v2880
    %v2968 = vunpack.c.l.b16 %v2881
    %v2969 = vunpack.c.h.b16 %v2881
    %v2970 = vunpack.c.l.b16 %v2882
    %v2971 = vunpack.c.h.b16 %v2882
    %v2972 = vunpack.c.l.b16 %v2883
    %v2973 = vunpack.c.h.b16 %v2883
    %v2974 = vunpack.c.l.b16 %v2884
    %v2975 = vunpack.c.h.b16 %v2884
    %v2976 = vunpack.c.l.b16 %v2885
    %v2977 = vunpack.c.h.b16 %v2885
    %v2978 = vunpack.c.l.b16 %v2886
    %v2979 = vunpack.c.h.b16 %v2886
    %v2980 = vunpack.c.l.b16 %v2887
    %v2981 = vunpack.c.h.b16 %v2887
    %v2982 = vunpack.c.l.b16 %v2888
    %v2983 = vunpack.c.h.b16 %v2888
    %v2984 = vunpack.c.l.b16 %v2889
    %v2985 = vunpack.c.h.b16 %v2889
    %v2986 = vunpack.c.l.b16 %v2890
    %v2987 = vunpack.c.h.b16 %v2890
    %v2988 = vunpack.c.l.b16 %v2891
    %v2989 = vunpack.c.h.b16 %v2891
    %v2990 = vunpack.c.l.b16 %v2892
    %v2991 = vunpack.c.h.b16 %v2892
    %v2992 = vunpack.c.l.b16 %v2893
    %v2993 = vunpack.c.h.b16 %v2893
    %v2994 = vunpack.c.l.b16 %v2894
    %v2995 = vunpack.c.h.b16 %v2894
    %v2996 = vunpack.c.l.b16 %v2895
    %v2997 = vunpack.c.h.b16 %v2895
    %v2998 = vunpack.c.l.b16 %v2896
    %v2999 = vunpack.c.h.b16 %v2896
    %v3000 = vunpack.c.l.b16 %v2897
    %v3001 = vunpack.c.h.b16 %v2897
    %v3002 = vunpack.c.l.b16 %v2898
    %v3003 = vunpack.c.h.b16 %v2898
    %v3004 = vunpack.c.l.b16 %v2899
    %v3005 = vunpack.c.h.b16 %v2899
    %v3006 = vunpack.c.l.b16 %v2900
    %v3007 = vunpack.c.h.b16 %v2900
    %v3008 = vunpack.c.l.b16 %v2901
    %v3009 = vunpack.c.h.b16 %v2901
    %v3010 = vunpack.c.l.b16 %v2902
    %v3011 = vunpack.c.h.b16 %v2902
    %v3012 = vunpack.c.l.b16 %v2903
    %v3013 = vunpack.c.h.b16 %v2903
    %v3014 = vunpack.c.l.b16 %v2904
    %v3015 = vunpack.c.h.b16 %v2904
    %v3016 = vunpack.c.l.b16 %v2905
    %v3017 = vunpack.c.h.b16 %v2905
    %v3018 = vunpack.c.l.b16 %v2906
    %v3019 = vunpack.c.h.b16 %v2906
    %v3020 = vunpack.c.l.b16 %v2907
    %v3021 = vunpack.c.h.b16 %v2907
    %v3022 = vunpack.c.l.b16 %v2908
    %v3023 = vunpack.c.h.b16 %v2908
    %v3024 = vunpack.c.l.b16 %v2909
    %v3025 = vunpack.c.h.b16 %v2909
    %v3026 = vunpack.c.l.b16 %v2910
    %v3027 = vunpack.c.h.b16 %v2910
    %v3028 = vunpack.c.l.b16 %v2911
    %v3029 = vunpack.c.h.b16 %v2911
    %v3030 = vpack.c.b16 %v2970, %v2966
    %v3031 = vpack.c.b16 %v2971, %v2967
    %v3032 = vpack.c.b16 %v2972, %v2968
    %v3033 = vpack.c.b16 %v2973, %v2969
    %v3034 = vpack.c.b16 %v2978, %v2974
    %v3035 = vpack.c.b16 %v2979, %v2975
    %v3036 = vpack.c.b16 %v2980, %v2976
    %v3037 = vpack.c.b16 %v2981, %v2977
    %v3038 = vpack.c.b16 %v2986, %v2982
    %v3039 = vpack.c.b16 %v2987, %v2983
    %v3040 = vpack.c.b16 %v2988, %v2984
    %v3041 = vpack.c.b16 %v2989, %v2985
    %v3042 = vpack.c.b16 %v2994, %v2990
    %v3043 = vpack.c.b16 %v2995, %v2991
    %v3044 = vpack.c.b16 %v2996, %v2992
    %v3045 = vpack.c.b16 %v2997, %v2993
    %v3046 = vpack.c.b16 %v3002, %v2998
    %v3047 = vpack.c.b16 %v3003, %v2999
    %v3048 = vpack.c.b16 %v3004, %v3000
    %v3049 = vpack.c.b16 %v3005, %v3001
    %v3050 = vpack.c.b16 %v3010, %v3006
    %v3051 = vpack.c.b16 %v3011, %v3007
    %v3052 = vpack.c.b16 %v3012, %v3008
    %v3053 = vpack.c.b16 %v3013, %v3009
    %v3054 = vpack.c.b16 %v3018, %v3014
    %v3055 = vpack.c.b16 %v3019, %v3015
    %v3056 = vpack.c.b16 %v3020, %v3016
    %v3057 = vpack.c.b16 %v3021, %v3017
    %v3058 = vpack.c.b16 %v3026, %v3022
    %v3059 = vpack.c.b16 %v3027, %v3023
    %v3060 = vpack.c.b16 %v3028, %v3024
    %v3061 = vpack.c.b16 %v3029, %v3025
    %3094 = vmatprep.subr.bf16.mxu0 %v3059
    %3095 = vmatpush1.bf16.msra.mxu0 %v3058
    %3096 = vmatprep.subr.bf16.mxu0 %v3055
    %3097 = vmatpush1.bf16.msra.mxu0 %v3054
    %3098 = vmatprep.subr.bf16.mxu0 %v3051
    %3099 = vmatpush1.bf16.msra.mxu0 %v3050
    %3100 = vmatprep.subr.bf16.mxu0 %v3047
    %3101 = vmatpush1.bf16.msra.mxu0 %v3046
    %3102 = vmatprep.subr.bf16.mxu0 %v3043
    %3103 = vmatpush1.bf16.msra.mxu0 %v3042
    %3104 = vmatprep.subr.bf16.mxu0 %v3039
    %3105 = vmatpush1.bf16.msra.mxu0 %v3038
    %3106 = vmatprep.subr.bf16.mxu0 %v3035
    %3107 = vmatpush1.bf16.msra.mxu0 %v3034
    %3108 = vmatprep.subr.bf16.mxu0 %v3031
    %3109 = vmatpush1.bf16.msra.mxu0 %v3030
    %3110 = vmatprep.subr.bf16.mxu0 0
    %3111 = vmatpush2.bf16.msra.mxu0 0
    %3112 = vmatprep.subr.bf16.mxu0 0
    %3113 = vmatpush2.bf16.msra.mxu0 0
    %3114 = vmatprep.subr.bf16.mxu0 0
    %3115 = vmatpush2.bf16.msra.mxu0 0
    %3116 = vmatprep.subr.bf16.mxu0 0
    %3117 = vmatpush2.bf16.msra.mxu0 0
    %3118 = vmatprep.subr.bf16.mxu0 0
    %3119 = vmatpush2.bf16.msra.mxu0 0
    %3120 = vmatprep.subr.bf16.mxu0 0
    %3121 = vmatpush2.bf16.msra.mxu0 0
    %3122 = vmatprep.subr.bf16.mxu0 0
    %3123 = vmatpush2.bf16.msra.mxu0 0
    %3124 = vmatprep.subr.bf16.mxu0 0
    %3125 = vmatpush2.bf16.msra.mxu0 0
    %3126 = vmatprep.mubr.bf16.mxu0 0
    %3127 = vmatmul.mubr.bf16.gmra.mxu0 %v2876
    %v3128 = vpop.f32.mrf.mxu0
    %v3129 = vadd.f32 %v2917, %v3128
    %v3130 = vpop.f32.mrf.mxu0
    %v3131 = vadd.f32 %v2921, %v3130
    %v3132 = vpop.f32.mrf.mxu0
    %v3133 = vadd.f32 %v2917, %v3132
    %v3134 = vpop.f32.mrf.mxu0
    %v3135 = vadd.f32 %v2921, %v3134
    %3136 = vmatprep.mubr.bf16.mxu0 0
    %3137 = vmatmul.mubr.bf16.gmra.mxu0 %v2877
    %v3138 = vpop.f32.mrf.mxu0
    %v3139 = vadd.f32 %v2917, %v3138
    %v3140 = vpop.f32.mrf.mxu0
    %v3141 = vadd.f32 %v2921, %v3140
    %v3142 = vpop.f32.mrf.mxu0
    %v3143 = vadd.f32 %v2917, %v3142
    %v3144 = vpop.f32.mrf.mxu0
    %v3145 = vadd.f32 %v2921, %v3144
    %3146 = vmatprep.mubr.bf16.mxu0 0
    %3147 = vmatmul.mubr.bf16.gmra.mxu0 %v2878
    %v3148 = vpop.f32.mrf.mxu0
    %v3149 = vadd.f32 %v2917, %v3148
    %v3150 = vpop.f32.mrf.mxu0
    %v3151 = vadd.f32 %v2921, %v3150
    %v3152 = vpop.f32.mrf.mxu0
    %v3153 = vadd.f32 %v2917, %v3152
    %v3154 = vpop.f32.mrf.mxu0
    %v3155 = vadd.f32 %v2921, %v3154
    %3156 = vmatprep.mubr.bf16.mxu0 0
    %3157 = vmatmul.mubr.bf16.gmra.mxu0 %v2879
    %v3158 = vpop.f32.mrf.mxu0
    %v3159 = vadd.f32 %v2917, %v3158
    %v3160 = vpop.f32.mrf.mxu0
    %v3161 = vadd.f32 %v2921, %v3160
    %v3162 = vpop.f32.mrf.mxu0
    %v3163 = vadd.f32 %v2917, %v3162
    %v3164 = vpop.f32.mrf.mxu0
    %v3165 = vadd.f32 %v2921, %v3164
    %3166 = vdwg.mxu0
    %3167 = vmatprep.subr.bf16.mxu0 %v3061
    %3168 = vmatpush1.bf16.msra.mxu0 %v3060
    %3169 = vmatprep.subr.bf16.mxu0 %v3057
    %3170 = vmatpush1.bf16.msra.mxu0 %v3056
    %3171 = vmatprep.subr.bf16.mxu0 %v3053
    %3172 = vmatpush1.bf16.msra.mxu0 %v3052
    %3173 = vmatprep.subr.bf16.mxu0 %v3049
    %3174 = vmatpush1.bf16.msra.mxu0 %v3048
    %3175 = vmatprep.subr.bf16.mxu0 %v3045
    %3176 = vmatpush1.bf16.msra.mxu0 %v3044
    %3177 = vmatprep.subr.bf16.mxu0 %v3041
    %3178 = vmatpush1.bf16.msra.mxu0 %v3040
    %3179 = vmatprep.subr.bf16.mxu0 %v3037
    %3180 = vmatpush1.bf16.msra.mxu0 %v3036
    %3181 = vmatprep.subr.bf16.mxu0 %v3033
    %3182 = vmatpush1.bf16.msra.mxu0 %v3032
    %3183 = vmatprep.subr.bf16.mxu0 0
    %3184 = vmatpush2.bf16.msra.mxu0 0
    %3185 = vmatprep.subr.bf16.mxu0 0
    %3186 = vmatpush2.bf16.msra.mxu0 0
    %3187 = vmatprep.subr.bf16.mxu0 0
    %3188 = vmatpush2.bf16.msra.mxu0 0
    %3189 = vmatprep.subr.bf16.mxu0 0
    %3190 = vmatpush2.bf16.msra.mxu0 0
    %3191 = vmatprep.subr.bf16.mxu0 0
    %3192 = vmatpush2.bf16.msra.mxu0 0
    %3193 = vmatprep.subr.bf16.mxu0 0
    %3194 = vmatpush2.bf16.msra.mxu0 0
    %3195 = vmatprep.subr.bf16.mxu0 0
    %3196 = vmatpush2.bf16.msra.mxu0 0
    %3197 = vmatprep.subr.bf16.mxu0 0
    %3198 = vmatpush2.bf16.msra.mxu0 0
    %3199 = vmatprep.mubr.bf16.mxu0 0
    %3200 = vmatmul.mubr.bf16.gmra.mxu0 %v2876
    %v3201 = vpop.f32.mrf.mxu0
    %v3202 = vadd.f32 %v2925, %v3201
    %v3203 = vpop.f32.mrf.mxu0
    %v3204 = vadd.f32 %v2929, %v3203
    %v3205 = vpop.f32.mrf.mxu0
    %v3206 = vadd.f32 %v2925, %v3205
    %v3207 = vpop.f32.mrf.mxu0
    %v3208 = vadd.f32 %v2929, %v3207
    %3209 = vmatprep.mubr.bf16.mxu0 0
    %3210 = vmatmul.mubr.bf16.gmra.mxu0 %v2877
    %v3211 = vpop.f32.mrf.mxu0
    %v3212 = vadd.f32 %v2925, %v3211
    %v3213 = vpop.f32.mrf.mxu0
    %v3214 = vadd.f32 %v2929, %v3213
    %v3215 = vpop.f32.mrf.mxu0
    %v3216 = vadd.f32 %v2925, %v3215
    %v3217 = vpop.f32.mrf.mxu0
    %v3218 = vadd.f32 %v2929, %v3217
    %3219 = vmatprep.mubr.bf16.mxu0 0
    %3220 = vmatmul.mubr.bf16.gmra.mxu0 %v2878
    %v3221 = vpop.f32.mrf.mxu0
    %v3222 = vadd.f32 %v2925, %v3221
    %v3223 = vpop.f32.mrf.mxu0
    %v3224 = vadd.f32 %v2929, %v3223
    %v3225 = vpop.f32.mrf.mxu0
    %v3226 = vadd.f32 %v2925, %v3225
    %v3227 = vpop.f32.mrf.mxu0
    %v3228 = vadd.f32 %v2929, %v3227
    %3229 = vmatprep.mubr.bf16.mxu0 0
    %3230 = vmatmul.mubr.bf16.gmra.mxu0 %v2879
    %v3231 = vpop.f32.mrf.mxu0
    %v3232 = vadd.f32 %v2925, %v3231
    %v3233 = vpop.f32.mrf.mxu0
    %v3234 = vadd.f32 %v2929, %v3233
    %v3235 = vpop.f32.mrf.mxu0
    %v3236 = vadd.f32 %v2925, %v3235
    %v3237 = vpop.f32.mrf.mxu0
    %v3238 = vadd.f32 %v2929, %v3237
    %3239 = vdwg.mxu0
    %3240 = vst [vmem:[#allocation7] sm:$0xff] %v3129
    %3241 = vst [vmem:[#allocation7 + $0x8] sm:$0xff] %v3131
    %3242 = vst [vmem:[#allocation7 + $0x10] sm:$0xff] %v3202
    %3243 = vst [vmem:[#allocation7 + $0x18] sm:$0xff] %v3204
    %3244 = vst [vmem:[#allocation7 + $0x20] sm:$0xff] %v3133
    %3245 = vst [vmem:[#allocation7 + $0x28] sm:$0xff] %v3135
    %3246 = vst [vmem:[#allocation7 + $0x30] sm:$0xff] %v3206
    %3247 = vst [vmem:[#allocation7 + $0x38] sm:$0xff] %v3208
    %3248 = vst [vmem:[#allocation7 + $0x40] sm:$0xff] %v3139
    %3249 = vst [vmem:[#allocation7 + $0x48] sm:$0xff] %v3141
    %3250 = vst [vmem:[#allocation7 + $0x50] sm:$0xff] %v3212
    %3251 = vst [vmem:[#allocation7 + $0x58] sm:$0xff] %v3214
    %3252 = vst [vmem:[#allocation7 + $0x60] sm:$0xff] %v3143
    %3253 = vst [vmem:[#allocation7 + $0x68] sm:$0xff] %v3145
    %3254 = vst [vmem:[#allocation7 + $0x70] sm:$0xff] %v3216
    %3255 = vst [vmem:[#allocation7 + $0x78] sm:$0xff] %v3218
    %3256 = vst [vmem:[#allocation7 + $0x80] sm:$0xff] %v3149
    %3257 = vst [vmem:[#allocation7 + $0x88] sm:$0xff] %v3151
    %3258 = vst [vmem:[#allocation7 + $0x90] sm:$0xff] %v3222
    %3259 = vst [vmem:[#allocation7 + $0x98] sm:$0xff] %v3224
    %3260 = vst [vmem:[#allocation7 + $0xa0] sm:$0xff] %v3153
    %3261 = vst [vmem:[#allocation7 + $0xa8] sm:$0xff] %v3155
    %3262 = vst [vmem:[#allocation7 + $0xb0] sm:$0xff] %v3226
    %3263 = vst [vmem:[#allocation7 + $0xb8] sm:$0xff] %v3228
    %3264 = vst [vmem:[#allocation7 + $0xc0] sm:$0xff] %v3159
    %3265 = vst [vmem:[#allocation7 + $0xc8] sm:$0xff] %v3161
    %3266 = vst [vmem:[#allocation7 + $0xd0] sm:$0xff] %v3232
    %3267 = vst [vmem:[#allocation7 + $0xd8] sm:$0xff] %v3234
    %3268 = vst [vmem:[#allocation7 + $0xe0] sm:$0xff] %v3163
    %3269 = vst [vmem:[#allocation7 + $0xe8] sm:$0xff] %v3165
    %3270 = vst [vmem:[#allocation7 + $0xf0] sm:$0xff] %v3236
    %3271 = vst [vmem:[#allocation7 + $0xf8] sm:$0xff] %v3238
    %v3272 = vld [vmem:[#allocation4] sm:$0xff]
    %v3273 = vld [vmem:[#allocation5] sm:$0xff]
    %v3274 = vld [vmem:[%s445] sm:$0xff]
    %v3275 = vld [vmem:[%s445 + $0x8] sm:$0xff]
    %v3276 = vld [vmem:[%s445 + $0x10] sm:$0xff]
    %v3277 = vld [vmem:[%s445 + $0x18] sm:$0xff]
    %v3278 = vpack.c.bf16 %v3272, %v3272
    %v3279 = vld [vmem:[#allocation16] sm:$0xff]
    %v3280 = vld [vmem:[#allocation16 + $0x8] sm:$0xff]
    %v3281 = vld [vmem:[#allocation16 + $0x10] sm:$0xff]
    %v3282 = vld [vmem:[#allocation16 + $0x18] sm:$0xff]
    %v3283 = vld [vmem:[#allocation16 + $0x20] sm:$0xff]
    %v3284 = vld [vmem:[#allocation16 + $0x28] sm:$0xff]
    %v3285 = vld [vmem:[#allocation16 + $0x30] sm:$0xff]
    %v3286 = vld [vmem:[#allocation16 + $0x38] sm:$0xff]
    %v3287 = vld [vmem:[#allocation16 + $0x40] sm:$0xff]
    %v3288 = vld [vmem:[#allocation16 + $0x48] sm:$0xff]
    %v3289 = vld [vmem:[#allocation16 + $0x50] sm:$0xff]
    %v3290 = vld [vmem:[#allocation16 + $0x58] sm:$0xff]
    %v3291 = vld [vmem:[#allocation16 + $0x60] sm:$0xff]
    %v3292 = vld [vmem:[#allocation16 + $0x68] sm:$0xff]
    %v3293 = vld [vmem:[#allocation16 + $0x70] sm:$0xff]
    %v3294 = vld [vmem:[#allocation16 + $0x78] sm:$0xff]
    %v3295 = vld [vmem:[#allocation16 + $0x80] sm:$0xff]
    %v3296 = vld [vmem:[#allocation16 + $0x88] sm:$0xff]
    %v3297 = vld [vmem:[#allocation16 + $0x90] sm:$0xff]
    %v3298 = vld [vmem:[#allocation16 + $0x98] sm:$0xff]
    %v3299 = vld [vmem:[#allocation16 + $0xa0] sm:$0xff]
    %v3300 = vld [vmem:[#allocation16 + $0xa8] sm:$0xff]
    %v3301 = vld [vmem:[#allocation16 + $0xb0] sm:$0xff]
    %v3302 = vld [vmem:[#allocation16 + $0xb8] sm:$0xff]
    %v3303 = vld [vmem:[#allocation16 + $0xc0] sm:$0xff]
    %v3304 = vld [vmem:[#allocation16 + $0xc8] sm:$0xff]
    %v3305 = vld [vmem:[#allocation16 + $0xd0] sm:$0xff]
    %v3306 = vld [vmem:[#allocation16 + $0xd8] sm:$0xff]
    %v3307 = vld [vmem:[#allocation16 + $0xe0] sm:$0xff]
    %v3308 = vld [vmem:[#allocation16 + $0xe8] sm:$0xff]
    %v3309 = vld [vmem:[#allocation16 + $0xf0] sm:$0xff]
    %v3310 = vld [vmem:[#allocation16 + $0xf8] sm:$0xff]
    %v3343 = vunpack.c.l.b16 %v3279
    %v3344 = vunpack.c.h.b16 %v3279
    %v3345 = vunpack.c.l.b16 %v3280
    %v3346 = vunpack.c.h.b16 %v3280
    %v3347 = vunpack.c.l.b16 %v3281
    %v3348 = vunpack.c.h.b16 %v3281
    %v3349 = vunpack.c.l.b16 %v3282
    %v3350 = vunpack.c.h.b16 %v3282
    %v3351 = vunpack.c.l.b16 %v3283
    %v3352 = vunpack.c.h.b16 %v3283
    %v3353 = vunpack.c.l.b16 %v3284
    %v3354 = vunpack.c.h.b16 %v3284
    %v3355 = vunpack.c.l.b16 %v3285
    %v3356 = vunpack.c.h.b16 %v3285
    %v3357 = vunpack.c.l.b16 %v3286
    %v3358 = vunpack.c.h.b16 %v3286
    %v3359 = vunpack.c.l.b16 %v3287
    %v3360 = vunpack.c.h.b16 %v3287
    %v3361 = vunpack.c.l.b16 %v3288
    %v3362 = vunpack.c.h.b16 %v3288
    %v3363 = vunpack.c.l.b16 %v3289
    %v3364 = vunpack.c.h.b16 %v3289
    %v3365 = vunpack.c.l.b16 %v3290
    %v3366 = vunpack.c.h.b16 %v3290
    %v3367 = vunpack.c.l.b16 %v3291
    %v3368 = vunpack.c.h.b16 %v3291
    %v3369 = vunpack.c.l.b16 %v3292
    %v3370 = vunpack.c.h.b16 %v3292
    %v3371 = vunpack.c.l.b16 %v3293
    %v3372 = vunpack.c.h.b16 %v3293
    %v3373 = vunpack.c.l.b16 %v3294
    %v3374 = vunpack.c.h.b16 %v3294
    %v3375 = vunpack.c.l.b16 %v3295
    %v3376 = vunpack.c.h.b16 %v3295
    %v3377 = vunpack.c.l.b16 %v3296
    %v3378 = vunpack.c.h.b16 %v3296
    %v3379 = vunpack.c.l.b16 %v3297
    %v3380 = vunpack.c.h.b16 %v3297
    %v3381 = vunpack.c.l.b16 %v3298
    %v3382 = vunpack.c.h.b16 %v3298
    %v3383 = vunpack.c.l.b16 %v3299
    %v3384 = vunpack.c.h.b16 %v3299
    %v3385 = vunpack.c.l.b16 %v3300
    %v3386 = vunpack.c.h.b16 %v3300
    %v3387 = vunpack.c.l.b16 %v3301
    %v3388 = vunpack.c.h.b16 %v3301
    %v3389 = vunpack.c.l.b16 %v3302
    %v3390 = vunpack.c.h.b16 %v3302
    %v3391 = vunpack.c.l.b16 %v3303
    %v3392 = vunpack.c.h.b16 %v3303
    %v3393 = vunpack.c.l.b16 %v3304
    %v3394 = vunpack.c.h.b16 %v3304
    %v3395 = vunpack.c.l.b16 %v3305
    %v3396 = vunpack.c.h.b16 %v3305
    %v3397 = vunpack.c.l.b16 %v3306
    %v3398 = vunpack.c.h.b16 %v3306
    %v3399 = vunpack.c.l.b16 %v3307
    %v3400 = vunpack.c.h.b16 %v3307
    %v3401 = vunpack.c.l.b16 %v3308
    %v3402 = vunpack.c.h.b16 %v3308
    %v3403 = vunpack.c.l.b16 %v3309
    %v3404 = vunpack.c.h.b16 %v3309
    %v3405 = vunpack.c.l.b16 %v3310
    %v3406 = vunpack.c.h.b16 %v3310
    %v3407 = vpack.c.b16 %v3347, %v3343
    %v3408 = vpack.c.b16 %v3348, %v3344
    %v3409 = vpack.c.b16 %v3349, %v3345
    %v3410 = vpack.c.b16 %v3350, %v3346
    %v3411 = vpack.c.b16 %v3355, %v3351
    %v3412 = vpack.c.b16 %v3356, %v3352
    %v3413 = vpack.c.b16 %v3357, %v3353
    %v3414 = vpack.c.b16 %v3358, %v3354
    %v3415 = vpack.c.b16 %v3363, %v3359
    %v3416 = vpack.c.b16 %v3364, %v3360
    %v3417 = vpack.c.b16 %v3365, %v3361
    %v3418 = vpack.c.b16 %v3366, %v3362
    %v3419 = vpack.c.b16 %v3371, %v3367
    %v3420 = vpack.c.b16 %v3372, %v3368
    %v3421 = vpack.c.b16 %v3373, %v3369
    %v3422 = vpack.c.b16 %v3374, %v3370
    %v3423 = vpack.c.b16 %v3379, %v3375
    %v3424 = vpack.c.b16 %v3380, %v3376
    %v3425 = vpack.c.b16 %v3381, %v3377
    %v3426 = vpack.c.b16 %v3382, %v3378
    %v3427 = vpack.c.b16 %v3387, %v3383
    %v3428 = vpack.c.b16 %v3388, %v3384
    %v3429 = vpack.c.b16 %v3389, %v3385
    %v3430 = vpack.c.b16 %v3390, %v3386
    %v3431 = vpack.c.b16 %v3395, %v3391
    %v3432 = vpack.c.b16 %v3396, %v3392
    %v3433 = vpack.c.b16 %v3397, %v3393
    %v3434 = vpack.c.b16 %v3398, %v3394
    %v3435 = vpack.c.b16 %v3403, %v3399
    %v3436 = vpack.c.b16 %v3404, %v3400
    %v3437 = vpack.c.b16 %v3405, %v3401
    %v3438 = vpack.c.b16 %v3406, %v3402
    %3471 = vmatprep.subr.bf16.mxu0 %v3436
    %3472 = vmatpush1.bf16.msra.mxu0 %v3435
    %3473 = vmatprep.subr.bf16.mxu0 %v3432
    %3474 = vmatpush1.bf16.msra.mxu0 %v3431
    %3475 = vmatprep.subr.bf16.mxu0 %v3428
    %3476 = vmatpush1.bf16.msra.mxu0 %v3427
    %3477 = vmatprep.subr.bf16.mxu0 %v3424
    %3478 = vmatpush1.bf16.msra.mxu0 %v3423
    %3479 = vmatprep.subr.bf16.mxu0 %v3420
    %3480 = vmatpush1.bf16.msra.mxu0 %v3419
    %3481 = vmatprep.subr.bf16.mxu0 %v3416
    %3482 = vmatpush1.bf16.msra.mxu0 %v3415
    %3483 = vmatprep.subr.bf16.mxu0 %v3412
    %3484 = vmatpush1.bf16.msra.mxu0 %v3411
    %3485 = vmatprep.subr.bf16.mxu0 %v3408
    %3486 = vmatpush1.bf16.msra.mxu0 %v3407
    %3487 = vmatprep.subr.bf16.mxu0 0
    %3488 = vmatpush2.bf16.msra.mxu0 0
    %3489 = vmatprep.subr.bf16.mxu0 0
    %3490 = vmatpush2.bf16.msra.mxu0 0
    %3491 = vmatprep.subr.bf16.mxu0 0
    %3492 = vmatpush2.bf16.msra.mxu0 0
    %3493 = vmatprep.subr.bf16.mxu0 0
    %3494 = vmatpush2.bf16.msra.mxu0 0
    %3495 = vmatprep.subr.bf16.mxu0 0
    %3496 = vmatpush2.bf16.msra.mxu0 0
    %3497 = vmatprep.subr.bf16.mxu0 0
    %3498 = vmatpush2.bf16.msra.mxu0 0
    %3499 = vmatprep.subr.bf16.mxu0 0
    %3500 = vmatpush2.bf16.msra.mxu0 0
    %3501 = vmatprep.subr.bf16.mxu0 0
    %3502 = vmatpush2.bf16.msra.mxu0 0
    %3503 = vmatprep.mubr.bf16.mxu0 0
    %3504 = vmatmul.mubr.bf16.gmra.mxu0 %v3278
    %v3505 = vpop.f32.mrf.mxu0
    %v3506 = vadd.f32 0.0, %v3505
    %v3507 = vpop.f32.mrf.mxu0
    %v3508 = vadd.f32 0.0, %v3507
    %v3509 = vpop.f32.mrf.mxu0
    %v3510 = vpop.f32.mrf.mxu0
    %3511 = vdwg.mxu0
    %3512 = vmatprep.subr.bf16.mxu0 %v3438
    %3513 = vmatpush1.bf16.msra.mxu0 %v3437
    %3514 = vmatprep.subr.bf16.mxu0 %v3434
    %3515 = vmatpush1.bf16.msra.mxu0 %v3433
    %3516 = vmatprep.subr.bf16.mxu0 %v3430
    %3517 = vmatpush1.bf16.msra.mxu0 %v3429
    %3518 = vmatprep.subr.bf16.mxu0 %v3426
    %3519 = vmatpush1.bf16.msra.mxu0 %v3425
    %3520 = vmatprep.subr.bf16.mxu0 %v3422
    %3521 = vmatpush1.bf16.msra.mxu0 %v3421
    %3522 = vmatprep.subr.bf16.mxu0 %v3418
    %3523 = vmatpush1.bf16.msra.mxu0 %v3417
    %3524 = vmatprep.subr.bf16.mxu0 %v3414
    %3525 = vmatpush1.bf16.msra.mxu0 %v3413
    %3526 = vmatprep.subr.bf16.mxu0 %v3410
    %3527 = vmatpush1.bf16.msra.mxu0 %v3409
    %3528 = vmatprep.subr.bf16.mxu0 0
    %3529 = vmatpush2.bf16.msra.mxu0 0
    %3530 = vmatprep.subr.bf16.mxu0 0
    %3531 = vmatpush2.bf16.msra.mxu0 0
    %3532 = vmatprep.subr.bf16.mxu0 0
    %3533 = vmatpush2.bf16.msra.mxu0 0
    %3534 = vmatprep.subr.bf16.mxu0 0
    %3535 = vmatpush2.bf16.msra.mxu0 0
    %3536 = vmatprep.subr.bf16.mxu0 0
    %3537 = vmatpush2.bf16.msra.mxu0 0
    %3538 = vmatprep.subr.bf16.mxu0 0
    %3539 = vmatpush2.bf16.msra.mxu0 0
    %3540 = vmatprep.subr.bf16.mxu0 0
    %3541 = vmatpush2.bf16.msra.mxu0 0
    %3542 = vmatprep.subr.bf16.mxu0 0
    %3543 = vmatpush2.bf16.msra.mxu0 0
    %3544 = vmatprep.mubr.bf16.mxu0 0
    %3545 = vmatmul.mubr.bf16.gmra.mxu0 %v3278
    %v3546 = vpop.f32.mrf.mxu0
    %v3547 = vadd.f32 0.0, %v3546
    %v3548 = vpop.f32.mrf.mxu0
    %v3549 = vadd.f32 0.0, %v3548
    %v3550 = vpop.f32.mrf.mxu0
    %v3551 = vpop.f32.mrf.mxu0
    %3552 = vdwg.mxu0
    %v3553 = vadd.f32 %v3274, %v3506
    %v3554 = vadd.f32 %v3275, %v3508
    %v3555 = vadd.f32 %v3276, %v3547
    %v3556 = vadd.f32 %v3277, %v3549
    %v3557 = vtanh.pop %v3553
    %v3558 = vtanh.pop %v3554
    %v3559 = vtanh.pop %v3555
    %v3560 = vtanh.pop %v3556
    %v3561 = vmul.f32 %v3557, 0.5
    %v3562 = vadd.f32 %v3561, 0.5
    %v3563 = vmul.f32 %v3558, 0.5
    %v3564 = vadd.f32 %v3563, 0.5
    %v3565 = vmul.f32 %v3560, 0.5
    %v3566 = vadd.f32 %v3565, 0.5
    %v3567 = vmul.f32 %v3564, %v3273
    %v3568 = vmul.f32 %v3562, %v3559
    %v3569 = vadd.f32 %v3567, %v3568
    %v3570 = vtanh.pop %v3569
    %v3571 = vmul.f32 %v3566, %v3570
    %v3572 = vld [vmem:[%s747] sm:$0xff]
    %v3573 = vld [vmem:[%s747 + $0x8] sm:$0xff]
    %v3574 = vld [vmem:[%s747 + $0x10] sm:$0xff]
    %v3575 = vld [vmem:[%s747 + $0x18] sm:$0xff]
    %v3576 = vpack.c.bf16 %v3571, %v3571
    %3577 = vmatprep.subr.bf16.mxu0 %v3436
    %3578 = vmatpush1.bf16.msra.mxu0 %v3435
    %3579 = vmatprep.subr.bf16.mxu0 %v3432
    %3580 = vmatpush1.bf16.msra.mxu0 %v3431
    %3581 = vmatprep.subr.bf16.mxu0 %v3428
    %3582 = vmatpush1.bf16.msra.mxu0 %v3427
    %3583 = vmatprep.subr.bf16.mxu0 %v3424
    %3584 = vmatpush1.bf16.msra.mxu0 %v3423
    %3585 = vmatprep.subr.bf16.mxu0 %v3420
    %3586 = vmatpush1.bf16.msra.mxu0 %v3419
    %3587 = vmatprep.subr.bf16.mxu0 %v3416
    %3588 = vmatpush1.bf16.msra.mxu0 %v3415
    %3589 = vmatprep.subr.bf16.mxu0 %v3412
    %3590 = vmatpush1.bf16.msra.mxu0 %v3411
    %3591 = vmatprep.subr.bf16.mxu0 %v3408
    %3592 = vmatpush1.bf16.msra.mxu0 %v3407
    %3593 = vmatprep.subr.bf16.mxu0 0
    %3594 = vmatpush2.bf16.msra.mxu0 0
    %3595 = vmatprep.subr.bf16.mxu0 0
    %3596 = vmatpush2.bf16.msra.mxu0 0
    %3597 = vmatprep.subr.bf16.mxu0 0
    %3598 = vmatpush2.bf16.msra.mxu0 0
    %3599 = vmatprep.subr.bf16.mxu0 0
    %3600 = vmatpush2.bf16.msra.mxu0 0
    %3601 = vmatprep.subr.bf16.mxu0 0
    %3602 = vmatpush2.bf16.msra.mxu0 0
    %3603 = vmatprep.subr.bf16.mxu0 0
    %3604 = vmatpush2.bf16.msra.mxu0 0
    %3605 = vmatprep.subr.bf16.mxu0 0
    %3606 = vmatpush2.bf16.msra.mxu0 0
    %3607 = vmatprep.subr.bf16.mxu0 0
    %3608 = vmatpush2.bf16.msra.mxu0 0
    %3609 = vmatprep.mubr.bf16.mxu0 0
    %3610 = vmatmul.mubr.bf16.gmra.mxu0 %v3576
    %v3611 = vpop.f32.mrf.mxu0
    %v3612 = vadd.f32 0.0, %v3611
    %v3613 = vpop.f32.mrf.mxu0
    %v3614 = vadd.f32 0.0, %v3613
    %v3615 = vpop.f32.mrf.mxu0
    %v3616 = vpop.f32.mrf.mxu0
    %3617 = vdwg.mxu0
    %3618 = vmatprep.subr.bf16.mxu0 %v3438
    %3619 = vmatpush1.bf16.msra.mxu0 %v3437
    %3620 = vmatprep.subr.bf16.mxu0 %v3434
    %3621 = vmatpush1.bf16.msra.mxu0 %v3433
    %3622 = vmatprep.subr.bf16.mxu0 %v3430
    %3623 = vmatpush1.bf16.msra.mxu0 %v3429
    %3624 = vmatprep.subr.bf16.mxu0 %v3426
    %3625 = vmatpush1.bf16.msra.mxu0 %v3425
    %3626 = vmatprep.subr.bf16.mxu0 %v3422
    %3627 = vmatpush1.bf16.msra.mxu0 %v3421
    %3628 = vmatprep.subr.bf16.mxu0 %v3418
    %3629 = vmatpush1.bf16.msra.mxu0 %v3417
    %3630 = vmatprep.subr.bf16.mxu0 %v3414
    %3631 = vmatpush1.bf16.msra.mxu0 %v3413
    %3632 = vmatprep.subr.bf16.mxu0 %v3410
    %3633 = vmatpush1.bf16.msra.mxu0 %v3409
    %3634 = vmatprep.subr.bf16.mxu0 0
    %3635 = vmatpush2.bf16.msra.mxu0 0
    %3636 = vmatprep.subr.bf16.mxu0 0
    %3637 = vmatpush2.bf16.msra.mxu0 0
    %3638 = vmatprep.subr.bf16.mxu0 0
    %3639 = vmatpush2.bf16.msra.mxu0 0
    %3640 = vmatprep.subr.bf16.mxu0 0
    %3641 = vmatpush2.bf16.msra.mxu0 0
    %3642 = vmatprep.subr.bf16.mxu0 0
    %3643 = vmatpush2.bf16.msra.mxu0 0
    %3644 = vmatprep.subr.bf16.mxu0 0
    %3645 = vmatpush2.bf16.msra.mxu0 0
    %3646 = vmatprep.subr.bf16.mxu0 0
    %3647 = vmatpush2.bf16.msra.mxu0 0
    %3648 = vmatprep.subr.bf16.mxu0 0
    %3649 = vmatpush2.bf16.msra.mxu0 0
    %3650 = vmatprep.mubr.bf16.mxu0 0
    %3651 = vmatmul.mubr.bf16.gmra.mxu0 %v3576
    %v3652 = vpop.f32.mrf.mxu0
    %v3653 = vadd.f32 0.0, %v3652
    %v3654 = vpop.f32.mrf.mxu0
    %v3655 = vadd.f32 0.0, %v3654
    %v3656 = vpop.f32.mrf.mxu0
    %v3657 = vpop.f32.mrf.mxu0
    %3658 = vdwg.mxu0
    %v3659 = vadd.f32 %v3572, %v3612
    %v3660 = vadd.f32 %v3573, %v3614
    %v3661 = vadd.f32 %v3574, %v3653
    %v3662 = vadd.f32 %v3575, %v3655
    %v3663 = vtanh.pop %v3659
    %v3664 = vtanh.pop %v3660
    %v3665 = vtanh.pop %v3661
    %v3666 = vtanh.pop %v3662
    %v3667 = vmul.f32 %v3663, 0.5
    %v3668 = vadd.f32 %v3667, 0.5
    %v3669 = vmul.f32 %v3664, 0.5
    %v3670 = vadd.f32 %v3669, 0.5
    %v3671 = vmul.f32 %v3666, 0.5
    %v3672 = vadd.f32 %v3671, 0.5
    %v3673 = vmul.f32 %v3670, %v3569
    %v3674 = vmul.f32 %v3668, %v3665
    %v3675 = vadd.f32 %v3673, %v3674
    %v3676 = vtanh.pop %v3675
    %v3677 = vmul.f32 %v3672, %v3676
    %v3678 = vld [vmem:[%s1050] sm:$0xff]
    %v3679 = vld [vmem:[%s1050 + $0x8] sm:$0xff]
    %v3680 = vld [vmem:[%s1050 + $0x10] sm:$0xff]
    %v3681 = vld [vmem:[%s1050 + $0x18] sm:$0xff]
    %v3682 = vpack.c.bf16 %v3677, %v3677
    %3683 = vmatprep.subr.bf16.mxu0 %v3436
    %3684 = vmatpush1.bf16.msra.mxu0 %v3435
    %3685 = vmatprep.subr.bf16.mxu0 %v3432
    %3686 = vmatpush1.bf16.msra.mxu0 %v3431
    %3687 = vmatprep.subr.bf16.mxu0 %v3428
    %3688 = vmatpush1.bf16.msra.mxu0 %v3427
    %3689 = vmatprep.subr.bf16.mxu0 %v3424
    %3690 = vmatpush1.bf16.msra.mxu0 %v3423
    %3691 = vmatprep.subr.bf16.mxu0 %v3420
    %3692 = vmatpush1.bf16.msra.mxu0 %v3419
    %3693 = vmatprep.subr.bf16.mxu0 %v3416
    %3694 = vmatpush1.bf16.msra.mxu0 %v3415
    %3695 = vmatprep.subr.bf16.mxu0 %v3412
    %3696 = vmatpush1.bf16.msra.mxu0 %v3411
    %3697 = vmatprep.subr.bf16.mxu0 %v3408
    %3698 = vmatpush1.bf16.msra.mxu0 %v3407
    %3699 = vmatprep.subr.bf16.mxu0 0
    %3700 = vmatpush2.bf16.msra.mxu0 0
    %3701 = vmatprep.subr.bf16.mxu0 0
    %3702 = vmatpush2.bf16.msra.mxu0 0
    %3703 = vmatprep.subr.bf16.mxu0 0
    %3704 = vmatpush2.bf16.msra.mxu0 0
    %3705 = vmatprep.subr.bf16.mxu0 0
    %3706 = vmatpush2.bf16.msra.mxu0 0
    %3707 = vmatprep.subr.bf16.mxu0 0
    %3708 = vmatpush2.bf16.msra.mxu0 0
    %3709 = vmatprep.subr.bf16.mxu0 0
    %3710 = vmatpush2.bf16.msra.mxu0 0
    %3711 = vmatprep.subr.bf16.mxu0 0
    %3712 = vmatpush2.bf16.msra.mxu0 0
    %3713 = vmatprep.subr.bf16.mxu0 0
    %3714 = vmatpush2.bf16.msra.mxu0 0
    %3715 = vmatprep.mubr.bf16.mxu0 0
    %3716 = vmatmul.mubr.bf16.gmra.mxu0 %v3682
    %v3717 = vpop.f32.mrf.mxu0
    %v3718 = vadd.f32 0.0, %v3717
    %v3719 = vpop.f32.mrf.mxu0
    %v3720 = vadd.f32 0.0, %v3719
    %v3721 = vpop.f32.mrf.mxu0
    %v3722 = vpop.f32.mrf.mxu0
    %3723 = vdwg.mxu0
    %3724 = vmatprep.subr.bf16.mxu0 %v3438
    %3725 = vmatpush1.bf16.msra.mxu0 %v3437
    %3726 = vmatprep.subr.bf16.mxu0 %v3434
    %3727 = vmatpush1.bf16.msra.mxu0 %v3433
    %3728 = vmatprep.subr.bf16.mxu0 %v3430
    %3729 = vmatpush1.bf16.msra.mxu0 %v3429
    %3730 = vmatprep.subr.bf16.mxu0 %v3426
    %3731 = vmatpush1.bf16.msra.mxu0 %v3425
    %3732 = vmatprep.subr.bf16.mxu0 %v3422
    %3733 = vmatpush1.bf16.msra.mxu0 %v3421
    %3734 = vmatprep.subr.bf16.mxu0 %v3418
    %3735 = vmatpush1.bf16.msra.mxu0 %v3417
    %3736 = vmatprep.subr.bf16.mxu0 %v3414
    %3737 = vmatpush1.bf16.msra.mxu0 %v3413
    %3738 = vmatprep.subr.bf16.mxu0 %v3410
    %3739 = vmatpush1.bf16.msra.mxu0 %v3409
    %3740 = vmatprep.subr.bf16.mxu0 0
    %3741 = vmatpush2.bf16.msra.mxu0 0
    %3742 = vmatprep.subr.bf16.mxu0 0
    %3743 = vmatpush2.bf16.msra.mxu0 0
    %3744 = vmatprep.subr.bf16.mxu0 0
    %3745 = vmatpush2.bf16.msra.mxu0 0
    %3746 = vmatprep.subr.bf16.mxu0 0
    %3747 = vmatpush2.bf16.msra.mxu0 0
    %3748 = vmatprep.subr.bf16.mxu0 0
    %3749 = vmatpush2.bf16.msra.mxu0 0
    %3750 = vmatprep.subr.bf16.mxu0 0
    %3751 = vmatpush2.bf16.msra.mxu0 0
    %3752 = vmatprep.subr.bf16.mxu0 0
    %3753 = vmatpush2.bf16.msra.mxu0 0
    %3754 = vmatprep.subr.bf16.mxu0 0
    %3755 = vmatpush2.bf16.msra.mxu0 0
    %3756 = vmatprep.mubr.bf16.mxu0 0
    %3757 = vmatmul.mubr.bf16.gmra.mxu0 %v3682
    %v3758 = vpop.f32.mrf.mxu0
    %v3759 = vadd.f32 0.0, %v3758
    %v3760 = vpop.f32.mrf.mxu0
    %v3761 = vadd.f32 0.0, %v3760
    %v3762 = vpop.f32.mrf.mxu0
    %v3763 = vpop.f32.mrf.mxu0
    %3764 = vdwg.mxu0
    %v3765 = vadd.f32 %v3678, %v3718
    %v3766 = vadd.f32 %v3679, %v3720
    %v3767 = vadd.f32 %v3680, %v3759
    %v3768 = vadd.f32 %v3681, %v3761
    %v3769 = vtanh.pop %v3765
    %v3770 = vtanh.pop %v3766
    %v3771 = vtanh.pop %v3767
    %v3772 = vtanh.pop %v3768
    %v3773 = vmul.f32 %v3769, 0.5
    %v3774 = vadd.f32 %v3773, 0.5
    %v3775 = vmul.f32 %v3770, 0.5
    %v3776 = vadd.f32 %v3775, 0.5
    %v3777 = vmul.f32 %v3772, 0.5
    %v3778 = vadd.f32 %v3777, 0.5
    %v3779 = vmul.f32 %v3776, %v3675
    %v3780 = vmul.f32 %v3774, %v3771
    %v3781 = vadd.f32 %v3779, %v3780
    %v3782 = vtanh.pop %v3781
    %v3783 = vmul.f32 %v3778, %v3782
    %v3784 = vld [vmem:[%s1353] sm:$0xff]
    %v3785 = vld [vmem:[%s1353 + $0x8] sm:$0xff]
    %v3786 = vld [vmem:[%s1353 + $0x10] sm:$0xff]
    %v3787 = vld [vmem:[%s1353 + $0x18] sm:$0xff]
    %v3788 = vpack.c.bf16 %v3783, %v3783
    %3789 = vmatprep.subr.bf16.mxu0 %v3436
    %3790 = vmatpush1.bf16.msra.mxu0 %v3435
    %3791 = vmatprep.subr.bf16.mxu0 %v3432
    %3792 = vmatpush1.bf16.msra.mxu0 %v3431
    %3793 = vmatprep.subr.bf16.mxu0 %v3428
    %3794 = vmatpush1.bf16.msra.mxu0 %v3427
    %3795 = vmatprep.subr.bf16.mxu0 %v3424
    %3796 = vmatpush1.bf16.msra.mxu0 %v3423
    %3797 = vmatprep.subr.bf16.mxu0 %v3420
    %3798 = vmatpush1.bf16.msra.mxu0 %v3419
    %3799 = vmatprep.subr.bf16.mxu0 %v3416
    %3800 = vmatpush1.bf16.msra.mxu0 %v3415
    %3801 = vmatprep.subr.bf16.mxu0 %v3412
    %3802 = vmatpush1.bf16.msra.mxu0 %v3411
    %3803 = vmatprep.subr.bf16.mxu0 %v3408
    %3804 = vmatpush1.bf16.msra.mxu0 %v3407
    %3805 = vmatprep.subr.bf16.mxu0 0
    %3806 = vmatpush2.bf16.msra.mxu0 0
    %3807 = vmatprep.subr.bf16.mxu0 0
    %3808 = vmatpush2.bf16.msra.mxu0 0
    %3809 = vmatprep.subr.bf16.mxu0 0
    %3810 = vmatpush2.bf16.msra.mxu0 0
    %3811 = vmatprep.subr.bf16.mxu0 0
    %3812 = vmatpush2.bf16.msra.mxu0 0
    %3813 = vmatprep.subr.bf16.mxu0 0
    %3814 = vmatpush2.bf16.msra.mxu0 0
    %3815 = vmatprep.subr.bf16.mxu0 0
    %3816 = vmatpush2.bf16.msra.mxu0 0
    %3817 = vmatprep.subr.bf16.mxu0 0
    %3818 = vmatpush2.bf16.msra.mxu0 0
    %3819 = vmatprep.subr.bf16.mxu0 0
    %3820 = vmatpush2.bf16.msra.mxu0 0
    %3821 = vmatprep.mubr.bf16.mxu0 0
    %3822 = vmatmul.mubr.bf16.gmra.mxu0 %v3788
    %v3823 = vpop.f32.mrf.mxu0
    %v3824 = vadd.f32 0.0, %v3823
    %v3825 = vpop.f32.mrf.mxu0
    %v3826 = vadd.f32 0.0, %v3825
    %v3827 = vpop.f32.mrf.mxu0
    %v3828 = vpop.f32.mrf.mxu0
    %3829 = vdwg.mxu0
    %3830 = vmatprep.subr.bf16.mxu0 %v3438
    %3831 = vmatpush1.bf16.msra.mxu0 %v3437
    %3832 = vmatprep.subr.bf16.mxu0 %v3434
    %3833 = vmatpush1.bf16.msra.mxu0 %v3433
    %3834 = vmatprep.subr.bf16.mxu0 %v3430
    %3835 = vmatpush1.bf16.msra.mxu0 %v3429
    %3836 = vmatprep.subr.bf16.mxu0 %v3426
    %3837 = vmatpush1.bf16.msra.mxu0 %v3425
    %3838 = vmatprep.subr.bf16.mxu0 %v3422
    %3839 = vmatpush1.bf16.msra.mxu0 %v3421
    %3840 = vmatprep.subr.bf16.mxu0 %v3418
    %3841 = vmatpush1.bf16.msra.mxu0 %v3417
    %3842 = vmatprep.subr.bf16.mxu0 %v3414
    %3843 = vmatpush1.bf16.msra.mxu0 %v3413
    %3844 = vmatprep.subr.bf16.mxu0 %v3410
    %3845 = vmatpush1.bf16.msra.mxu0 %v3409
    %3846 = vmatprep.subr.bf16.mxu0 0
    %3847 = vmatpush2.bf16.msra.mxu0 0
    %3848 = vmatprep.subr.bf16.mxu0 0
    %3849 = vmatpush2.bf16.msra.mxu0 0
    %3850 = vmatprep.subr.bf16.mxu0 0
    %3851 = vmatpush2.bf16.msra.mxu0 0
    %3852 = vmatprep.subr.bf16.mxu0 0
    %3853 = vmatpush2.bf16.msra.mxu0 0
    %3854 = vmatprep.subr.bf16.mxu0 0
    %3855 = vmatpush2.bf16.msra.mxu0 0
    %3856 = vmatprep.subr.bf16.mxu0 0
    %3857 = vmatpush2.bf16.msra.mxu0 0
    %3858 = vmatprep.subr.bf16.mxu0 0
    %3859 = vmatpush2.bf16.msra.mxu0 0
    %3860 = vmatprep.subr.bf16.mxu0 0
    %3861 = vmatpush2.bf16.msra.mxu0 0
    %3862 = vmatprep.mubr.bf16.mxu0 0
    %3863 = vmatmul.mubr.bf16.gmra.mxu0 %v3788
    %v3864 = vpop.f32.mrf.mxu0
    %v3865 = vadd.f32 0.0, %v3864
    %v3866 = vpop.f32.mrf.mxu0
    %v3867 = vadd.f32 0.0, %v3866
    %v3868 = vpop.f32.mrf.mxu0
    %v3869 = vpop.f32.mrf.mxu0
    %3870 = vdwg.mxu0
    %v3871 = vadd.f32 %v3784, %v3824
    %v3872 = vadd.f32 %v3785, %v3826
    %v3873 = vadd.f32 %v3786, %v3865
    %v3874 = vadd.f32 %v3787, %v3867
    %v3875 = vtanh.pop %v3871
    %v3876 = vtanh.pop %v3872
    %v3877 = vtanh.pop %v3873
    %v3878 = vtanh.pop %v3874
    %v3879 = vmul.f32 %v3875, 0.5
    %v3880 = vadd.f32 %v3879, 0.5
    %v3881 = vmul.f32 %v3876, 0.5
    %v3882 = vadd.f32 %v3881, 0.5
    %v3883 = vmul.f32 %v3878, 0.5
    %v3884 = vadd.f32 %v3883, 0.5
    %v3885 = vmul.f32 %v3882, %v3781
    %v3886 = vmul.f32 %v3880, %v3877
    %v3887 = vadd.f32 %v3885, %v3886
    %v3888 = vtanh.pop %v3887
    %v3889 = vmul.f32 %v3884, %v3888
    %v3890 = vld [vmem:[%s1656] sm:$0xff]
    %v3891 = vld [vmem:[%s1656 + $0x8] sm:$0xff]
    %v3892 = vld [vmem:[%s1656 + $0x10] sm:$0xff]
    %v3893 = vld [vmem:[%s1656 + $0x18] sm:$0xff]
    %v3894 = vpack.c.bf16 %v3889, %v3889
    %3895 = vmatprep.subr.bf16.mxu0 %v3436
    %3896 = vmatpush1.bf16.msra.mxu0 %v3435
    %3897 = vmatprep.subr.bf16.mxu0 %v3432
    %3898 = vmatpush1.bf16.msra.mxu0 %v3431
    %3899 = vmatprep.subr.bf16.mxu0 %v3428
    %3900 = vmatpush1.bf16.msra.mxu0 %v3427
    %3901 = vmatprep.subr.bf16.mxu0 %v3424
    %3902 = vmatpush1.bf16.msra.mxu0 %v3423
    %3903 = vmatprep.subr.bf16.mxu0 %v3420
    %3904 = vmatpush1.bf16.msra.mxu0 %v3419
    %3905 = vmatprep.subr.bf16.mxu0 %v3416
    %3906 = vmatpush1.bf16.msra.mxu0 %v3415
    %3907 = vmatprep.subr.bf16.mxu0 %v3412
    %3908 = vmatpush1.bf16.msra.mxu0 %v3411
    %3909 = vmatprep.subr.bf16.mxu0 %v3408
    %3910 = vmatpush1.bf16.msra.mxu0 %v3407
    %3911 = vmatprep.subr.bf16.mxu0 0
    %3912 = vmatpush2.bf16.msra.mxu0 0
    %3913 = vmatprep.subr.bf16.mxu0 0
    %3914 = vmatpush2.bf16.msra.mxu0 0
    %3915 = vmatprep.subr.bf16.mxu0 0
    %3916 = vmatpush2.bf16.msra.mxu0 0
    %3917 = vmatprep.subr.bf16.mxu0 0
    %3918 = vmatpush2.bf16.msra.mxu0 0
    %3919 = vmatprep.subr.bf16.mxu0 0
    %3920 = vmatpush2.bf16.msra.mxu0 0
    %3921 = vmatprep.subr.bf16.mxu0 0
    %3922 = vmatpush2.bf16.msra.mxu0 0
    %3923 = vmatprep.subr.bf16.mxu0 0
    %3924 = vmatpush2.bf16.msra.mxu0 0
    %3925 = vmatprep.subr.bf16.mxu0 0
    %3926 = vmatpush2.bf16.msra.mxu0 0
    %3927 = vmatprep.mubr.bf16.mxu0 0
    %3928 = vmatmul.mubr.bf16.gmra.mxu0 %v3894
    %v3929 = vpop.f32.mrf.mxu0
    %v3930 = vadd.f32 0.0, %v3929
    %v3931 = vpop.f32.mrf.mxu0
    %v3932 = vadd.f32 0.0, %v3931
    %v3933 = vpop.f32.mrf.mxu0
    %v3934 = vpop.f32.mrf.mxu0
    %3935 = vdwg.mxu0
    %3936 = vmatprep.subr.bf16.mxu0 %v3438
    %3937 = vmatpush1.bf16.msra.mxu0 %v3437
    %3938 = vmatprep.subr.bf16.mxu0 %v3434
    %3939 = vmatpush1.bf16.msra.mxu0 %v3433
    %3940 = vmatprep.subr.bf16.mxu0 %v3430
    %3941 = vmatpush1.bf16.msra.mxu0 %v3429
    %3942 = vmatprep.subr.bf16.mxu0 %v3426
    %3943 = vmatpush1.bf16.msra.mxu0 %v3425
    %3944 = vmatprep.subr.bf16.mxu0 %v3422
    %3945 = vmatpush1.bf16.msra.mxu0 %v3421
    %3946 = vmatprep.subr.bf16.mxu0 %v3418
    %3947 = vmatpush1.bf16.msra.mxu0 %v3417
    %3948 = vmatprep.subr.bf16.mxu0 %v3414
    %3949 = vmatpush1.bf16.msra.mxu0 %v3413
    %3950 = vmatprep.subr.bf16.mxu0 %v3410
    %3951 = vmatpush1.bf16.msra.mxu0 %v3409
    %3952 = vmatprep.subr.bf16.mxu0 0
    %3953 = vmatpush2.bf16.msra.mxu0 0
    %3954 = vmatprep.subr.bf16.mxu0 0
    %3955 = vmatpush2.bf16.msra.mxu0 0
    %3956 = vmatprep.subr.bf16.mxu0 0
    %3957 = vmatpush2.bf16.msra.mxu0 0
    %3958 = vmatprep.subr.bf16.mxu0 0
    %3959 = vmatpush2.bf16.msra.mxu0 0
    %3960 = vmatprep.subr.bf16.mxu0 0
    %3961 = vmatpush2.bf16.msra.mxu0 0
    %3962 = vmatprep.subr.bf16.mxu0 0
    %3963 = vmatpush2.bf16.msra.mxu0 0
    %3964 = vmatprep.subr.bf16.mxu0 0
    %3965 = vmatpush2.bf16.msra.mxu0 0
    %3966 = vmatprep.subr.bf16.mxu0 0
    %3967 = vmatpush2.bf16.msra.mxu0 0
    %3968 = vmatprep.mubr.bf16.mxu0 0
    %3969 = vmatmul.mubr.bf16.gmra.mxu0 %v3894
    %v3970 = vpop.f32.mrf.mxu0
    %v3971 = vadd.f32 0.0, %v3970
    %v3972 = vpop.f32.mrf.mxu0
    %v3973 = vadd.f32 0.0, %v3972
    %v3974 = vpop.f32.mrf.mxu0
    %v3975 = vpop.f32.mrf.mxu0
    %3976 = vdwg.mxu0
    %v3977 = vadd.f32 %v3890, %v3930
    %v3978 = vadd.f32 %v3891, %v3932
    %v3979 = vadd.f32 %v3892, %v3971
    %v3980 = vadd.f32 %v3893, %v3973
    %v3981 = vtanh.pop %v3977
    %v3982 = vtanh.pop %v3978
    %v3983 = vtanh.pop %v3979
    %v3984 = vtanh.pop %v3980
    %v3985 = vmul.f32 %v3981, 0.5
    %v3986 = vadd.f32 %v3985, 0.5
    %v3987 = vmul.f32 %v3982, 0.5
    %v3988 = vadd.f32 %v3987, 0.5
    %v3989 = vmul.f32 %v3984, 0.5
    %v3990 = vadd.f32 %v3989, 0.5
    %v3991 = vmul.f32 %v3988, %v3887
    %v3992 = vmul.f32 %v3986, %v3983
    %v3993 = vadd.f32 %v3991, %v3992
    %v3994 = vtanh.pop %v3993
    %v3995 = vmul.f32 %v3990, %v3994
    %v3996 = vld [vmem:[%s1959] sm:$0xff]
    %v3997 = vld [vmem:[%s1959 + $0x8] sm:$0xff]
    %v3998 = vld [vmem:[%s1959 + $0x10] sm:$0xff]
    %v3999 = vld [vmem:[%s1959 + $0x18] sm:$0xff]
    %v4000 = vpack.c.bf16 %v3995, %v3995
    %4001 = vmatprep.subr.bf16.mxu0 %v3436
    %4002 = vmatpush1.bf16.msra.mxu0 %v3435
    %4003 = vmatprep.subr.bf16.mxu0 %v3432
    %4004 = vmatpush1.bf16.msra.mxu0 %v3431
    %4005 = vmatprep.subr.bf16.mxu0 %v3428
    %4006 = vmatpush1.bf16.msra.mxu0 %v3427
    %4007 = vmatprep.subr.bf16.mxu0 %v3424
    %4008 = vmatpush1.bf16.msra.mxu0 %v3423
    %4009 = vmatprep.subr.bf16.mxu0 %v3420
    %4010 = vmatpush1.bf16.msra.mxu0 %v3419
    %4011 = vmatprep.subr.bf16.mxu0 %v3416
    %4012 = vmatpush1.bf16.msra.mxu0 %v3415
    %4013 = vmatprep.subr.bf16.mxu0 %v3412
    %4014 = vmatpush1.bf16.msra.mxu0 %v3411
    %4015 = vmatprep.subr.bf16.mxu0 %v3408
    %4016 = vmatpush1.bf16.msra.mxu0 %v3407
    %4017 = vmatprep.subr.bf16.mxu0 0
    %4018 = vmatpush2.bf16.msra.mxu0 0
    %4019 = vmatprep.subr.bf16.mxu0 0
    %4020 = vmatpush2.bf16.msra.mxu0 0
    %4021 = vmatprep.subr.bf16.mxu0 0
    %4022 = vmatpush2.bf16.msra.mxu0 0
    %4023 = vmatprep.subr.bf16.mxu0 0
    %4024 = vmatpush2.bf16.msra.mxu0 0
    %4025 = vmatprep.subr.bf16.mxu0 0
    %4026 = vmatpush2.bf16.msra.mxu0 0
    %4027 = vmatprep.subr.bf16.mxu0 0
    %4028 = vmatpush2.bf16.msra.mxu0 0
    %4029 = vmatprep.subr.bf16.mxu0 0
    %4030 = vmatpush2.bf16.msra.mxu0 0
    %4031 = vmatprep.subr.bf16.mxu0 0
    %4032 = vmatpush2.bf16.msra.mxu0 0
    %4033 = vmatprep.mubr.bf16.mxu0 0
    %4034 = vmatmul.mubr.bf16.gmra.mxu0 %v4000
    %v4035 = vpop.f32.mrf.mxu0
    %v4036 = vadd.f32 0.0, %v4035
    %v4037 = vpop.f32.mrf.mxu0
    %v4038 = vadd.f32 0.0, %v4037
    %v4039 = vpop.f32.mrf.mxu0
    %v4040 = vpop.f32.mrf.mxu0
    %4041 = vdwg.mxu0
    %4042 = vmatprep.subr.bf16.mxu0 %v3438
    %4043 = vmatpush1.bf16.msra.mxu0 %v3437
    %4044 = vmatprep.subr.bf16.mxu0 %v3434
    %4045 = vmatpush1.bf16.msra.mxu0 %v3433
    %4046 = vmatprep.subr.bf16.mxu0 %v3430
    %4047 = vmatpush1.bf16.msra.mxu0 %v3429
    %4048 = vmatprep.subr.bf16.mxu0 %v3426
    %4049 = vmatpush1.bf16.msra.mxu0 %v3425
    %4050 = vmatprep.subr.bf16.mxu0 %v3422
    %4051 = vmatpush1.bf16.msra.mxu0 %v3421
    %4052 = vmatprep.subr.bf16.mxu0 %v3418
    %4053 = vmatpush1.bf16.msra.mxu0 %v3417
    %4054 = vmatprep.subr.bf16.mxu0 %v3414
    %4055 = vmatpush1.bf16.msra.mxu0 %v3413
    %4056 = vmatprep.subr.bf16.mxu0 %v3410
    %4057 = vmatpush1.bf16.msra.mxu0 %v3409
    %4058 = vmatprep.subr.bf16.mxu0 0
    %4059 = vmatpush2.bf16.msra.mxu0 0
    %4060 = vmatprep.subr.bf16.mxu0 0
    %4061 = vmatpush2.bf16.msra.mxu0 0
    %4062 = vmatprep.subr.bf16.mxu0 0
    %4063 = vmatpush2.bf16.msra.mxu0 0
    %4064 = vmatprep.subr.bf16.mxu0 0
    %4065 = vmatpush2.bf16.msra.mxu0 0
    %4066 = vmatprep.subr.bf16.mxu0 0
    %4067 = vmatpush2.bf16.msra.mxu0 0
    %4068 = vmatprep.subr.bf16.mxu0 0
    %4069 = vmatpush2.bf16.msra.mxu0 0
    %4070 = vmatprep.subr.bf16.mxu0 0
    %4071 = vmatpush2.bf16.msra.mxu0 0
    %4072 = vmatprep.subr.bf16.mxu0 0
    %4073 = vmatpush2.bf16.msra.mxu0 0
    %4074 = vmatprep.mubr.bf16.mxu0 0
    %4075 = vmatmul.mubr.bf16.gmra.mxu0 %v4000
    %v4076 = vpop.f32.mrf.mxu0
    %v4077 = vadd.f32 0.0, %v4076
    %v4078 = vpop.f32.mrf.mxu0
    %v4079 = vadd.f32 0.0, %v4078
    %v4080 = vpop.f32.mrf.mxu0
    %v4081 = vpop.f32.mrf.mxu0
    %4082 = vdwg.mxu0
    %v4083 = vadd.f32 %v3996, %v4036
    %v4084 = vadd.f32 %v3997, %v4038
    %v4085 = vadd.f32 %v3998, %v4077
    %v4086 = vadd.f32 %v3999, %v4079
    %v4087 = vtanh.pop %v4083
    %v4088 = vtanh.pop %v4084
    %v4089 = vtanh.pop %v4085
    %v4090 = vtanh.pop %v4086
    %v4091 = vmul.f32 %v4087, 0.5
    %v4092 = vadd.f32 %v4091, 0.5
    %v4093 = vmul.f32 %v4088, 0.5
    %v4094 = vadd.f32 %v4093, 0.5
    %v4095 = vmul.f32 %v4090, 0.5
    %v4096 = vadd.f32 %v4095, 0.5
    %v4097 = vmul.f32 %v4094, %v3993
    %v4098 = vmul.f32 %v4092, %v4089
    %v4099 = vadd.f32 %v4097, %v4098
    %v4100 = vtanh.pop %v4099
    %v4101 = vmul.f32 %v4096, %v4100
    %v4102 = vld [vmem:[%s2262] sm:$0xff]
    %v4103 = vld [vmem:[%s2262 + $0x8] sm:$0xff]
    %v4104 = vld [vmem:[%s2262 + $0x10] sm:$0xff]
    %v4105 = vld [vmem:[%s2262 + $0x18] sm:$0xff]
    %v4106 = vpack.c.bf16 %v4101, %v4101
    %4107 = vmatprep.subr.bf16.mxu0 %v3436
    %4108 = vmatpush1.bf16.msra.mxu0 %v3435
    %4109 = vmatprep.subr.bf16.mxu0 %v3432
    %4110 = vmatpush1.bf16.msra.mxu0 %v3431
    %4111 = vmatprep.subr.bf16.mxu0 %v3428
    %4112 = vmatpush1.bf16.msra.mxu0 %v3427
    %4113 = vmatprep.subr.bf16.mxu0 %v3424
    %4114 = vmatpush1.bf16.msra.mxu0 %v3423
    %4115 = vmatprep.subr.bf16.mxu0 %v3420
    %4116 = vmatpush1.bf16.msra.mxu0 %v3419
    %4117 = vmatprep.subr.bf16.mxu0 %v3416
    %4118 = vmatpush1.bf16.msra.mxu0 %v3415
    %4119 = vmatprep.subr.bf16.mxu0 %v3412
    %4120 = vmatpush1.bf16.msra.mxu0 %v3411
    %4121 = vmatprep.subr.bf16.mxu0 %v3408
    %4122 = vmatpush1.bf16.msra.mxu0 %v3407
    %4123 = vmatprep.subr.bf16.mxu0 0
    %4124 = vmatpush2.bf16.msra.mxu0 0
    %4125 = vmatprep.subr.bf16.mxu0 0
    %4126 = vmatpush2.bf16.msra.mxu0 0
    %4127 = vmatprep.subr.bf16.mxu0 0
    %4128 = vmatpush2.bf16.msra.mxu0 0
    %4129 = vmatprep.subr.bf16.mxu0 0
    %4130 = vmatpush2.bf16.msra.mxu0 0
    %4131 = vmatprep.subr.bf16.mxu0 0
    %4132 = vmatpush2.bf16.msra.mxu0 0
    %4133 = vmatprep.subr.bf16.mxu0 0
    %4134 = vmatpush2.bf16.msra.mxu0 0
    %4135 = vmatprep.subr.bf16.mxu0 0
    %4136 = vmatpush2.bf16.msra.mxu0 0
    %4137 = vmatprep.subr.bf16.mxu0 0
    %4138 = vmatpush2.bf16.msra.mxu0 0
    %4139 = vmatprep.mubr.bf16.mxu0 0
    %4140 = vmatmul.mubr.bf16.gmra.mxu0 %v4106
    %v4141 = vpop.f32.mrf.mxu0
    %v4142 = vadd.f32 0.0, %v4141
    %v4143 = vpop.f32.mrf.mxu0
    %v4144 = vadd.f32 0.0, %v4143
    %v4145 = vpop.f32.mrf.mxu0
    %v4146 = vpop.f32.mrf.mxu0
    %4147 = vdwg.mxu0
    %4148 = vmatprep.subr.bf16.mxu0 %v3438
    %4149 = vmatpush1.bf16.msra.mxu0 %v3437
    %4150 = vmatprep.subr.bf16.mxu0 %v3434
    %4151 = vmatpush1.bf16.msra.mxu0 %v3433
    %4152 = vmatprep.subr.bf16.mxu0 %v3430
    %4153 = vmatpush1.bf16.msra.mxu0 %v3429
    %4154 = vmatprep.subr.bf16.mxu0 %v3426
    %4155 = vmatpush1.bf16.msra.mxu0 %v3425
    %4156 = vmatprep.subr.bf16.mxu0 %v3422
    %4157 = vmatpush1.bf16.msra.mxu0 %v3421
    %4158 = vmatprep.subr.bf16.mxu0 %v3418
    %4159 = vmatpush1.bf16.msra.mxu0 %v3417
    %4160 = vmatprep.subr.bf16.mxu0 %v3414
    %4161 = vmatpush1.bf16.msra.mxu0 %v3413
    %4162 = vmatprep.subr.bf16.mxu0 %v3410
    %4163 = vmatpush1.bf16.msra.mxu0 %v3409
    %4164 = vmatprep.subr.bf16.mxu0 0
    %4165 = vmatpush2.bf16.msra.mxu0 0
    %4166 = vmatprep.subr.bf16.mxu0 0
    %4167 = vmatpush2.bf16.msra.mxu0 0
    %4168 = vmatprep.subr.bf16.mxu0 0
    %4169 = vmatpush2.bf16.msra.mxu0 0
    %4170 = vmatprep.subr.bf16.mxu0 0
    %4171 = vmatpush2.bf16.msra.mxu0 0
    %4172 = vmatprep.subr.bf16.mxu0 0
    %4173 = vmatpush2.bf16.msra.mxu0 0
    %4174 = vmatprep.subr.bf16.mxu0 0
    %4175 = vmatpush2.bf16.msra.mxu0 0
    %4176 = vmatprep.subr.bf16.mxu0 0
    %4177 = vmatpush2.bf16.msra.mxu0 0
    %4178 = vmatprep.subr.bf16.mxu0 0
    %4179 = vmatpush2.bf16.msra.mxu0 0
    %4180 = vmatprep.mubr.bf16.mxu0 0
    %4181 = vmatmul.mubr.bf16.gmra.mxu0 %v4106
    %v4182 = vpop.f32.mrf.mxu0
    %v4183 = vadd.f32 0.0, %v4182
    %v4184 = vpop.f32.mrf.mxu0
    %v4185 = vadd.f32 0.0, %v4184
    %v4186 = vpop.f32.mrf.mxu0
    %v4187 = vpop.f32.mrf.mxu0
    %4188 = vdwg.mxu0
    %v4189 = vadd.f32 %v4102, %v4142
    %v4190 = vadd.f32 %v4103, %v4144
    %v4191 = vadd.f32 %v4104, %v4183
    %v4192 = vadd.f32 %v4105, %v4185
    %v4193 = vtanh.pop %v4189
    %v4194 = vtanh.pop %v4190
    %v4195 = vtanh.pop %v4191
    %v4196 = vtanh.pop %v4192
    %v4197 = vmul.f32 %v4193, 0.5
    %v4198 = vadd.f32 %v4197, 0.5
    %v4199 = vmul.f32 %v4194, 0.5
    %v4200 = vadd.f32 %v4199, 0.5
    %v4201 = vmul.f32 %v4196, 0.5
    %v4202 = vadd.f32 %v4201, 0.5
    %v4203 = vmul.f32 %v4200, %v4099
    %v4204 = vmul.f32 %v4198, %v4195
    %v4205 = vadd.f32 %v4203, %v4204
    %v4206 = vtanh.pop %v4205
    %v4207 = vmul.f32 %v4202, %v4206
    %v4208 = vld [vmem:[%s2565] sm:$0xff]
    %v4209 = vld [vmem:[%s2565 + $0x8] sm:$0xff]
    %v4210 = vld [vmem:[%s2565 + $0x10] sm:$0xff]
    %v4211 = vld [vmem:[%s2565 + $0x18] sm:$0xff]
    %v4212 = vpack.c.bf16 %v4207, %v4207
    %4213 = vmatprep.subr.bf16.mxu0 %v3436
    %4214 = vmatpush1.bf16.msra.mxu0 %v3435
    %4215 = vmatprep.subr.bf16.mxu0 %v3432
    %4216 = vmatpush1.bf16.msra.mxu0 %v3431
    %4217 = vmatprep.subr.bf16.mxu0 %v3428
    %4218 = vmatpush1.bf16.msra.mxu0 %v3427
    %4219 = vmatprep.subr.bf16.mxu0 %v3424
    %4220 = vmatpush1.bf16.msra.mxu0 %v3423
    %4221 = vmatprep.subr.bf16.mxu0 %v3420
    %4222 = vmatpush1.bf16.msra.mxu0 %v3419
    %4223 = vmatprep.subr.bf16.mxu0 %v3416
    %4224 = vmatpush1.bf16.msra.mxu0 %v3415
    %4225 = vmatprep.subr.bf16.mxu0 %v3412
    %4226 = vmatpush1.bf16.msra.mxu0 %v3411
    %4227 = vmatprep.subr.bf16.mxu0 %v3408
    %4228 = vmatpush1.bf16.msra.mxu0 %v3407
    %4229 = vmatprep.subr.bf16.mxu0 0
    %4230 = vmatpush2.bf16.msra.mxu0 0
    %4231 = vmatprep.subr.bf16.mxu0 0
    %4232 = vmatpush2.bf16.msra.mxu0 0
    %4233 = vmatprep.subr.bf16.mxu0 0
    %4234 = vmatpush2.bf16.msra.mxu0 0
    %4235 = vmatprep.subr.bf16.mxu0 0
    %4236 = vmatpush2.bf16.msra.mxu0 0
    %4237 = vmatprep.subr.bf16.mxu0 0
    %4238 = vmatpush2.bf16.msra.mxu0 0
    %4239 = vmatprep.subr.bf16.mxu0 0
    %4240 = vmatpush2.bf16.msra.mxu0 0
    %4241 = vmatprep.subr.bf16.mxu0 0
    %4242 = vmatpush2.bf16.msra.mxu0 0
    %4243 = vmatprep.subr.bf16.mxu0 0
    %4244 = vmatpush2.bf16.msra.mxu0 0
    %4245 = vmatprep.mubr.bf16.mxu0 0
    %4246 = vmatmul.mubr.bf16.gmra.mxu0 %v4212
    %v4247 = vpop.f32.mrf.mxu0
    %v4248 = vadd.f32 0.0, %v4247
    %v4249 = vpop.f32.mrf.mxu0
    %v4250 = vadd.f32 0.0, %v4249
    %v4251 = vpop.f32.mrf.mxu0
    %v4252 = vpop.f32.mrf.mxu0
    %4253 = vdwg.mxu0
    %4254 = vmatprep.subr.bf16.mxu0 %v3438
    %4255 = vmatpush1.bf16.msra.mxu0 %v3437
    %4256 = vmatprep.subr.bf16.mxu0 %v3434
    %4257 = vmatpush1.bf16.msra.mxu0 %v3433
    %4258 = vmatprep.subr.bf16.mxu0 %v3430
    %4259 = vmatpush1.bf16.msra.mxu0 %v3429
    %4260 = vmatprep.subr.bf16.mxu0 %v3426
    %4261 = vmatpush1.bf16.msra.mxu0 %v3425
    %4262 = vmatprep.subr.bf16.mxu0 %v3422
    %4263 = vmatpush1.bf16.msra.mxu0 %v3421
    %4264 = vmatprep.subr.bf16.mxu0 %v3418
    %4265 = vmatpush1.bf16.msra.mxu0 %v3417
    %4266 = vmatprep.subr.bf16.mxu0 %v3414
    %4267 = vmatpush1.bf16.msra.mxu0 %v3413
    %4268 = vmatprep.subr.bf16.mxu0 %v3410
    %4269 = vmatpush1.bf16.msra.mxu0 %v3409
    %4270 = vmatprep.subr.bf16.mxu0 0
    %4271 = vmatpush2.bf16.msra.mxu0 0
    %4272 = vmatprep.subr.bf16.mxu0 0
    %4273 = vmatpush2.bf16.msra.mxu0 0
    %4274 = vmatprep.subr.bf16.mxu0 0
    %4275 = vmatpush2.bf16.msra.mxu0 0
    %4276 = vmatprep.subr.bf16.mxu0 0
    %4277 = vmatpush2.bf16.msra.mxu0 0
    %4278 = vmatprep.subr.bf16.mxu0 0
    %4279 = vmatpush2.bf16.msra.mxu0 0
    %4280 = vmatprep.subr.bf16.mxu0 0
    %4281 = vmatpush2.bf16.msra.mxu0 0
    %4282 = vmatprep.subr.bf16.mxu0 0
    %4283 = vmatpush2.bf16.msra.mxu0 0
    %4284 = vmatprep.subr.bf16.mxu0 0
    %4285 = vmatpush2.bf16.msra.mxu0 0
    %4286 = vmatprep.mubr.bf16.mxu0 0
    %4287 = vmatmul.mubr.bf16.gmra.mxu0 %v4212
    %v4288 = vpop.f32.mrf.mxu0
    %v4289 = vadd.f32 0.0, %v4288
    %v4290 = vpop.f32.mrf.mxu0
    %v4291 = vadd.f32 0.0, %v4290
    %v4292 = vpop.f32.mrf.mxu0
    %v4293 = vpop.f32.mrf.mxu0
    %4294 = vdwg.mxu0
    %v4295 = vadd.f32 %v4208, %v4248
    %v4296 = vadd.f32 %v4209, %v4250
    %v4297 = vadd.f32 %v4210, %v4289
    %v4298 = vadd.f32 %v4211, %v4291
    %v4299 = vtanh.pop %v4295
    %v4300 = vtanh.pop %v4296
    %v4301 = vtanh.pop %v4297
    %v4302 = vtanh.pop %v4298
    %v4303 = vmul.f32 %v4299, 0.5
    %v4304 = vadd.f32 %v4303, 0.5
    %v4305 = vmul.f32 %v4300, 0.5
    %v4306 = vadd.f32 %v4305, 0.5
    %v4307 = vmul.f32 %v4302, 0.5
    %v4308 = vadd.f32 %v4307, 0.5
    %v4309 = vmul.f32 %v4306, %v4205
    %v4310 = vmul.f32 %v4304, %v4301
    %v4311 = vadd.f32 %v4309, %v4310
    %v4312 = vtanh.pop %v4311
    %v4313 = vmul.f32 %v4308, %v4312
    %4314 = vst [vmem:[#allocation4] sm:$0xff] %v4313
    %4315 = vst [vmem:[#allocation5] sm:$0xff] %v4311
    // Predicated region
    $region54: #{tpu_custom_call.1} parent=1 // pred_check
      %p4316 = pneg %p96
    $region55: #{tpu_custom_call.1} parent=1 // pred_check_branch
      %4318 = sbr.rel (%p4316) target = $region57
    $region56: #{tpu_custom_call.1} parent=1 // pred_region
      %4319 = vst [vmem:[#allocation17] sm:$0xff] %v4313
    $region57: #{tpu_custom_call.1} parent=1 // pred_fallthru
      _
    // Predicated region
    $region58: #{tpu_custom_call.1} parent=1 // pred_check
      _
    $region59: #{tpu_custom_call.1} parent=1 // pred_check_branch
      %4321 = sbr.rel (0) target = $region61
    $region60: #{tpu_custom_call.1} parent=1 // pred_region
      %s4323 = ssub.s32 128, 128
      %4324 = vsyncadd [#allocation10], %s4323
      %s4326 = sshll.u32 [#allocation17], 4
      %s4327 = int_to_ptr.vmem [resolvable:$true] %s4326
      %4329 = dma.vmem_to_hbm [thread:$0]  %s4327, 128, %s7, [#allocation10]
    $region61: #{tpu_custom_call.1} parent=1 // pred_fallthru
      _
    // Predicated region
    $region62: #{tpu_custom_call.1} parent=1 // pred_check
      _
    $region63: #{tpu_custom_call.1} parent=1 // pred_check_branch
      %4331 = sbr.rel (0) target = $region65
    $region64: #{tpu_custom_call.1} parent=1 // pred_region
      %4332 = dma.done [#allocation10], 128
    $region65: #{tpu_custom_call.1} parent=1 // pred_fallthru
      _
    %4333 = vsyncpa [#allocation9], 1
    %4334 = vsyncpa [#allocation12], 1
    %4335 = vsyncpa [#allocation15], 1
    %4336 = vsyncpa [#allocation10], 1

</llo_original>
